<compile_context>
chip_gen: v6e
topology: v6e:2x2x1
jax: 0.10.0
libtpu: 0.0.40
codegen_flags: <defaults>
</compile_context>

<pallas_src>
import functools
import math

import jax
import jax.numpy as jnp
import numpy as np
from jax.experimental import pallas as pl
from jax.experimental.pallas import tpu as pltpu

BN_EPS = 1e-5


def _attentive_kernel(feat_ref, priors_ref, w_ref, gamma_ref, beta_ref, out_ref,
                      *, n_vb, vbs, n_bisect, n_newton):
    rows = n_vb * vbs
    d = out_ref.shape[-1]

    # ---- Linear (no bias): bf16 x bf16 -> f32 accumulate on the MXU ----
    x = jnp.dot(feat_ref[...], w_ref[...], preferred_element_type=jnp.float32)

    # ---- GhostBatchNorm: training-mode BN per virtual batch (biased var) ----
    # TODO(synk): BatchNorm1d running_mean/running_var update (training-time
    # state side effect, does not affect the returned activations) is dropped.
    x3 = x.reshape(n_vb, vbs, d)
    mean = jnp.mean(x3, axis=1, keepdims=True)
    mean_sq = jnp.mean(x3 * x3, axis=1, keepdims=True)
    var = mean_sq - mean * mean                      # single-pass biased var
    xn = (x3 - mean) * jax.lax.rsqrt(var + BN_EPS)
    x = xn.reshape(rows, d) * gamma_ref[...] + beta_ref[...]

    # ---- multiply by priors ----
    x = x * priors_ref[...]

    # ---- Sparsemax along the last dim ----
    # tau* solves sum_i relu(z_i - tau) = 1 with z = x - max(x).  Since
    # max(z) = 0 we have tau* in [-1, 0); bisection keeps lo <= tau* <= hi.
    z = x - jnp.max(x, axis=-1, keepdims=True)
    lo = jnp.full((rows, 1), -1.0, dtype=jnp.float32)
    hi = jnp.zeros((rows, 1), dtype=jnp.float32)

    def bisect(_, carry):
        lo_c, hi_c = carry
        mid = 0.5 * (lo_c + hi_c)
        ge = jnp.sum(jnp.maximum(z - mid, 0.0), axis=-1, keepdims=True) >= 1.0
        return jnp.where(ge, mid, lo_c), jnp.where(ge, hi_c, mid)

    lo, _ = jax.lax.fori_loop(0, n_bisect, bisect, (lo, hi), unroll=True)

    # Newton / closed-form finisher starting from lo <= tau*:
    #   tau <- (sum_{z > tau} z - 1) / |{z > tau}|
    # f is convex piecewise-linear, so the iterate stays <= tau*, increases
    # monotonically and is exact as soon as the support set is identified.
    # |{z > tau}| >= 1 always because max(z) = 0 > tau, so no div-by-zero.
    def newton(_, tau):
        sup = (z > tau).astype(jnp.float32)
        cnt = jnp.sum(sup, axis=-1, keepdims=True)
        ssum = jnp.sum(z * sup, axis=-1, keepdims=True)
        return (ssum - 1.0) / cnt

    tau = jax.lax.fori_loop(0, n_newton, newton, lo, unroll=True)
    out_ref[...] = jnp.maximum(z - tau, 0.0).astype(out_ref.dtype)


def attentive_transformer(priors, processed_feat, w_t, gamma, beta,
                          virtual_batch_size=128, max_rows_per_step=2048,
                          n_bisect=12, n_newton=2):
    """priors: (B, group_dim); processed_feat: (B, input_dim);
    w_t: (input_dim, group_dim) == torch Linear weight transposed;
    gamma, beta: (1, group_dim)."""
    B, input_dim = processed_feat.shape
    group_dim = w_t.shape[1]
    vbs = min(virtual_batch_size, B)
    # TODO(synk): ragged last virtual batch (B % vbs != 0) not handled here.
    assert B % vbs == 0, "wrapper assumes batch divisible by virtual batch"
    n_vb_total = B // vbs

    # Rows per grid step: a divisor of n_vb_total (keeps ghost-BN chunk
    # boundaries aligned) whose row count fits under max_rows_per_step.
    # Prefer an even number of grid steps >= 2 (v7x megacore sharding), then
    # >= 2 steps, then the largest tile.
    cands = [dv for dv in range(1, n_vb_total + 1)
             if n_vb_total % dv == 0 and dv * vbs <= max_rows_per_step]
    if not cands:
        cands = [1]

    def _score(dv):
        steps = n_vb_total // dv
        return (steps >= 2 and steps % 2 == 0, steps >= 2, dv)

    n_vb_step = max(cands, key=_score)
    rows = n_vb_step * vbs
    num_steps = B // rows

    feat_b = processed_feat.astype(jnp.bfloat16)
    w_b = w_t.astype(jnp.bfloat16)
    priors_f = priors.astype(jnp.float32)
    gamma_f = gamma.astype(jnp.float32)
    beta_f = beta.astype(jnp.float32)

    kernel = functools.partial(
        _attentive_kernel, n_vb=n_vb_step, vbs=vbs,
        n_bisect=n_bisect, n_newton=n_newton)

    # Generation-aware VMEM budget: ~75% of physical capacity (48 MiB on v7x,
    # ~96 MiB on v5e/v6e), but no more than a conservative estimate of what
    # this kernel can actually use (lane-padded VMEM footprints).
    d_lane = max(128, ((group_dim + 127) // 128) * 128)
    k_lane = max(128, ((input_dim + 127) // 128) * 128)
    block_bytes = (rows * k_lane * 2            # feat block (bf16)
                   + 2 * rows * d_lane * 4      # priors + out blocks (f32)
                   + k_lane * d_lane * 2        # weight (bf16)
                   + 2 * 8 * d_lane * 4)        # gamma + beta
    est = 2 * block_bytes + 12 * rows * d_lane * 4
    vmem_cap = 64 * 1024 * 1024                 # safe default (v7x)
    try:
        info = pltpu.get_tpu_info()
        vmem_cap = int(getattr(info, "vmem_capacity_bytes", vmem_cap))
    except Exception:
        pass
    vmem_limit = int(max(32 * 1024 * 1024,
                         min(int(0.75 * vmem_cap), 2 * est)))

    return pl.pallas_call(
        kernel,
        out_shape=jax.ShapeDtypeStruct((B, group_dim), jnp.float32),
        grid_spec=pltpu.PrefetchScalarGridSpec(
            num_scalar_prefetch=0,
            grid=(num_steps,),
            in_specs=[
                pl.BlockSpec((rows, input_dim), lambda i: (i, 0)),      # feat
                pl.BlockSpec((rows, group_dim), lambda i: (i, 0)),      # priors
                pl.BlockSpec((input_dim, group_dim), lambda i: (0, 0)), # weight
                pl.BlockSpec((1, group_dim), lambda i: (0, 0)),         # gamma
                pl.BlockSpec((1, group_dim), lambda i: (0, 0)),         # beta
            ],
            out_specs=pl.BlockSpec((rows, group_dim), lambda i: (i, 0)),
        ),
        compiler_params=pltpu.CompilerParams(
            dimension_semantics=("parallel",),      # row blocks independent
            vmem_limit_bytes=vmem_limit),
    )(feat_b, priors_f, w_b, gamma_f, beta_f)


# ---------------- pure-JAX reference (for correctness check) ----------------
def _ref_forward(priors, feat, w_t, gamma, beta, vbs):
    # Matmul in bf16 with f32 accumulation, to match the kernel's input dtype.
    x = jnp.dot(feat.astype(jnp.bfloat16), w_t.astype(jnp.bfloat16),
                preferred_element_type=jnp.float32)
    chunks = []
    n = int(math.ceil(feat.shape[0] / vbs))
    for c in range(n):
        xc = x[c * vbs:(c + 1) * vbs]
        m = xc.mean(0, keepdims=True)
        v = ((xc - m) ** 2).mean(0, keepdims=True)
        chunks.append((xc - m) / jnp.sqrt(v + BN_EPS) * gamma + beta)
    x = jnp.concatenate(chunks, 0)
    x = x * priors
    z = x - jnp.max(x, -1, keepdims=True)
    zs = -jnp.sort(-z, axis=-1)
    r = jnp.arange(1, z.shape[-1] + 1, dtype=z.dtype)[None, :]
    cs = jnp.cumsum(zs, -1)
    is_gt = (1.0 + r * zs > cs).astype(z.dtype)
    k = jnp.max(is_gt * r, -1, keepdims=True)
    taus = (jnp.sum(is_gt * zs, -1, keepdims=True) - 1.0) / k
    return jnp.maximum(z - taus, 0.0)


if __name__ == "__main__":
    # Small demo shapes; tile selection yields 2 grid steps (even, v7x-friendly).
    B, input_dim, group_dim, vbs = 512, 32, 16, 128

    key = jax.random.PRNGKey(0)
    k1, k2, k3, k4, k5 = jax.random.split(key, 5)
    processed_feat = jax.random.normal(k1, (B, input_dim), dtype=jnp.float32)
    priors = jax.random.uniform(k2, (B, group_dim), dtype=jnp.float32,
                                minval=0.1, maxval=1.0)
    # fc weight: torch shape (group_dim, input_dim); kernel takes transpose.
    w_pt = 0.3 * jax.random.normal(k3, (group_dim, input_dim), dtype=jnp.float32)
    w_t = w_pt.T
    gamma = (1.0 + 0.1 * jax.random.normal(k4, (1, group_dim))).astype(jnp.float32)
    beta = (0.1 * jax.random.normal(k5, (1, group_dim))).astype(jnp.float32)

    out = attentive_transformer(priors, processed_feat, w_t, gamma, beta,
                                virtual_batch_size=vbs)
    out = jax.block_until_ready(out)

    ref = _ref_forward(priors, processed_feat, w_t, gamma, beta, vbs)
    np.testing.assert_allclose(np.asarray(out), np.asarray(ref),
                               rtol=5e-4, atol=5e-5)
    # sparsemax rows must sum to 1
    np.testing.assert_allclose(np.asarray(out).sum(-1), np.ones(B),
                               rtol=1e-5, atol=1e-5)
    print("KERNEL_OK")
</pallas_src>

<mosaic_0001>
module attributes {stable_mosaic.version = 11 : i64} {
  func.func @_attentive_kernel(%arg0: i32, %arg1: memref<256x32xbf16, #tpu.memory_space<vmem>>, %arg2: memref<256x16xf32, #tpu.memory_space<vmem>>, %arg3: memref<32x16xbf16, #tpu.memory_space<vmem>>, %arg4: memref<1x16xf32, #tpu.memory_space<vmem>>, %arg5: memref<1x16xf32, #tpu.memory_space<vmem>>, %arg6: memref<256x16xf32, #tpu.memory_space<vmem>>) attributes {dimension_semantics = [#tpu.dimension_semantics<parallel>], iteration_bounds = array<i64: 2>, scalar_prefetch = 0 : i64, scratch_operands = 0 : i64, tpu.core_type = #tpu.core_type<tc>, window_params = [{transform_indices = @transform_0, window_bounds = array<i64: 256, 32>}, {transform_indices = @transform_1, window_bounds = array<i64: 256, 16>}, {pipeline_mode = #tpu.pipeline_mode<synchronous>, transform_indices = @transform_2, window_bounds = array<i64: 32, 16>}, {pipeline_mode = #tpu.pipeline_mode<synchronous>, transform_indices = @transform_3, window_bounds = array<i64: 1, 16>}, {pipeline_mode = #tpu.pipeline_mode<synchronous>, transform_indices = @transform_4, window_bounds = array<i64: 1, 16>}, {transform_indices = @transform_5, window_bounds = array<i64: 256, 16>}]} {
    %c0 = arith.constant 0 : index
    %c0_0 = arith.constant 0 : index
    %0 = vector.load %arg1[%c0, %c0_0] : memref<256x32xbf16, #tpu.memory_space<vmem>>, vector<256x32xbf16>
    %c0_1 = arith.constant 0 : index
    %c0_2 = arith.constant 0 : index
    %1 = vector.load %arg3[%c0_1, %c0_2] : memref<32x16xbf16, #tpu.memory_space<vmem>>, vector<32x16xbf16>
    %cst = arith.constant dense<0.000000e+00> : vector<256x16xf32>
    %2 = tpu.matmul %0, %1, %cst {dimension_numbers = #tpu.dot_dimension_numbers<[1], [0], [0], [1], [0, 0, 1, 1], [], []>} : vector<256x32xbf16>, vector<32x16xbf16>, vector<256x16xf32> -> vector<256x16xf32>
    %3 = vector.shape_cast %2 : vector<256x16xf32> to vector<2x128x16xf32>
    %cst_3 = arith.constant dense<0.000000e+00> : vector<2x16xf32>
    %4 = vector.multi_reduction <add>, %3, %cst_3 [1] : vector<2x128x16xf32> to vector<2x16xf32>
    %5 = vector.shape_cast %4 : vector<2x16xf32> to vector<2x1x16xf32>
    %cst_4 = arith.constant 1.280000e+02 : f32
    %6 = vector.broadcast %cst_4 : f32 to vector<2x1x16xf32>
    %7 = arith.divf %5, %6 : vector<2x1x16xf32>
    %8 = arith.mulf %3, %3 : vector<2x128x16xf32>
    %cst_5 = arith.constant dense<0.000000e+00> : vector<2x16xf32>
    %9 = vector.multi_reduction <add>, %8, %cst_5 [1] : vector<2x128x16xf32> to vector<2x16xf32>
    %10 = vector.shape_cast %9 : vector<2x16xf32> to vector<2x1x16xf32>
    %cst_6 = arith.constant 1.280000e+02 : f32
    %11 = vector.broadcast %cst_6 : f32 to vector<2x1x16xf32>
    %12 = arith.divf %10, %11 : vector<2x1x16xf32>
    %13 = arith.mulf %7, %7 : vector<2x1x16xf32>
    %14 = arith.subf %12, %13 : vector<2x1x16xf32>
    %15 = vector.broadcast %7 : vector<2x1x16xf32> to vector<2x128x16xf32>
    %16 = arith.subf %3, %15 : vector<2x128x16xf32>
    %cst_7 = arith.constant 9.99999974E-6 : f32
    %17 = vector.broadcast %cst_7 : f32 to vector<2x1x16xf32>
    %18 = arith.addf %14, %17 : vector<2x1x16xf32>
    %19 = math.rsqrt %18 : vector<2x1x16xf32>
    %20 = vector.broadcast %19 : vector<2x1x16xf32> to vector<2x128x16xf32>
    %21 = arith.mulf %16, %20 : vector<2x128x16xf32>
    %22 = vector.shape_cast %21 : vector<2x128x16xf32> to vector<256x16xf32>
    %c0_8 = arith.constant 0 : index
    %c0_9 = arith.constant 0 : index
    %23 = vector.load %arg4[%c0_8, %c0_9] : memref<1x16xf32, #tpu.memory_space<vmem>>, vector<1x16xf32>
    %24 = vector.broadcast %23 : vector<1x16xf32> to vector<256x16xf32>
    %25 = arith.mulf %22, %24 : vector<256x16xf32>
    %c0_10 = arith.constant 0 : index
    %c0_11 = arith.constant 0 : index
    %26 = vector.load %arg5[%c0_10, %c0_11] : memref<1x16xf32, #tpu.memory_space<vmem>>, vector<1x16xf32>
    %27 = vector.broadcast %26 : vector<1x16xf32> to vector<256x16xf32>
    %28 = arith.addf %25, %27 : vector<256x16xf32>
    %c0_12 = arith.constant 0 : index
    %c0_13 = arith.constant 0 : index
    %29 = vector.load %arg2[%c0_12, %c0_13] : memref<256x16xf32, #tpu.memory_space<vmem>>, vector<256x16xf32>
    %30 = arith.mulf %28, %29 : vector<256x16xf32>
    %cst_14 = arith.constant dense<0xFF800000> : vector<256xf32>
    %31 = vector.multi_reduction <maximumf>, %30, %cst_14 [1] : vector<256x16xf32> to vector<256xf32>
    %32 = vector.shape_cast %31 : vector<256xf32> to vector<256x1xf32>
    %33 = vector.broadcast %32 : vector<256x1xf32> to vector<256x16xf32>
    %34 = arith.subf %30, %33 : vector<256x16xf32>
    %cst_15 = arith.constant -1.000000e+00 : f32
    %35 = vector.broadcast %cst_15 : f32 to vector<256x1xf32>
    %cst_16 = arith.constant 0.000000e+00 : f32
    %36 = vector.broadcast %cst_16 : f32 to vector<256x1xf32>
    %c0_i32 = arith.constant 0 : i32
    %37 = arith.addf %35, %36 : vector<256x1xf32>
    %cst_17 = arith.constant 5.000000e-01 : f32
    %38 = vector.broadcast %cst_17 : f32 to vector<256x1xf32>
    %39 = arith.mulf %38, %37 : vector<256x1xf32>
    %40 = vector.broadcast %39 : vector<256x1xf32> to vector<256x16xf32>
    %41 = arith.subf %34, %40 : vector<256x16xf32>
    %cst_18 = arith.constant 0.000000e+00 : f32
    %42 = vector.broadcast %cst_18 : f32 to vector<256x16xf32>
    %43 = arith.maximumf %41, %42 : vector<256x16xf32>
    %cst_19 = arith.constant dense<0.000000e+00> : vector<256xf32>
    %44 = vector.multi_reduction <add>, %43, %cst_19 [1] : vector<256x16xf32> to vector<256xf32>
    %45 = vector.shape_cast %44 : vector<256xf32> to vector<256x1xf32>
    %cst_20 = arith.constant 1.000000e+00 : f32
    %46 = vector.broadcast %cst_20 : f32 to vector<256x1xf32>
    %47 = arith.cmpf oge, %45, %46 : vector<256x1xf32>
    %48 = arith.select %47, %39, %35 : vector<256x1xi1>, vector<256x1xf32>
    %49 = arith.select %47, %36, %39 : vector<256x1xi1>, vector<256x1xf32>
    %c1_i32 = arith.constant 1 : i32
    %50 = arith.addf %48, %49 : vector<256x1xf32>
    %cst_21 = arith.constant 5.000000e-01 : f32
    %51 = vector.broadcast %cst_21 : f32 to vector<256x1xf32>
    %52 = arith.mulf %51, %50 : vector<256x1xf32>
    %53 = vector.broadcast %52 : vector<256x1xf32> to vector<256x16xf32>
    %54 = arith.subf %34, %53 : vector<256x16xf32>
    %cst_22 = arith.constant 0.000000e+00 : f32
    %55 = vector.broadcast %cst_22 : f32 to vector<256x16xf32>
    %56 = arith.maximumf %54, %55 : vector<256x16xf32>
    %cst_23 = arith.constant dense<0.000000e+00> : vector<256xf32>
    %57 = vector.multi_reduction <add>, %56, %cst_23 [1] : vector<256x16xf32> to vector<256xf32>
    %58 = vector.shape_cast %57 : vector<256xf32> to vector<256x1xf32>
    %cst_24 = arith.constant 1.000000e+00 : f32
    %59 = vector.broadcast %cst_24 : f32 to vector<256x1xf32>
    %60 = arith.cmpf oge, %58, %59 : vector<256x1xf32>
    %61 = arith.select %60, %52, %48 : vector<256x1xi1>, vector<256x1xf32>
    %62 = arith.select %60, %49, %52 : vector<256x1xi1>, vector<256x1xf32>
    %c2_i32 = arith.constant 2 : i32
    %63 = arith.addf %61, %62 : vector<256x1xf32>
    %cst_25 = arith.constant 5.000000e-01 : f32
    %64 = vector.broadcast %cst_25 : f32 to vector<256x1xf32>
    %65 = arith.mulf %64, %63 : vector<256x1xf32>
    %66 = vector.broadcast %65 : vector<256x1xf32> to vector<256x16xf32>
    %67 = arith.subf %34, %66 : vector<256x16xf32>
    %cst_26 = arith.constant 0.000000e+00 : f32
    %68 = vector.broadcast %cst_26 : f32 to vector<256x16xf32>
    %69 = arith.maximumf %67, %68 : vector<256x16xf32>
    %cst_27 = arith.constant dense<0.000000e+00> : vector<256xf32>
    %70 = vector.multi_reduction <add>, %69, %cst_27 [1] : vector<256x16xf32> to vector<256xf32>
    %71 = vector.shape_cast %70 : vector<256xf32> to vector<256x1xf32>
    %cst_28 = arith.constant 1.000000e+00 : f32
    %72 = vector.broadcast %cst_28 : f32 to vector<256x1xf32>
    %73 = arith.cmpf oge, %71, %72 : vector<256x1xf32>
    %74 = arith.select %73, %65, %61 : vector<256x1xi1>, vector<256x1xf32>
    %75 = arith.select %73, %62, %65 : vector<256x1xi1>, vector<256x1xf32>
    %c3_i32 = arith.constant 3 : i32
    %76 = arith.addf %74, %75 : vector<256x1xf32>
    %cst_29 = arith.constant 5.000000e-01 : f32
    %77 = vector.broadcast %cst_29 : f32 to vector<256x1xf32>
    %78 = arith.mulf %77, %76 : vector<256x1xf32>
    %79 = vector.broadcast %78 : vector<256x1xf32> to vector<256x16xf32>
    %80 = arith.subf %34, %79 : vector<256x16xf32>
    %cst_30 = arith.constant 0.000000e+00 : f32
    %81 = vector.broadcast %cst_30 : f32 to vector<256x16xf32>
    %82 = arith.maximumf %80, %81 : vector<256x16xf32>
    %cst_31 = arith.constant dense<0.000000e+00> : vector<256xf32>
    %83 = vector.multi_reduction <add>, %82, %cst_31 [1] : vector<256x16xf32> to vector<256xf32>
    %84 = vector.shape_cast %83 : vector<256xf32> to vector<256x1xf32>
    %cst_32 = arith.constant 1.000000e+00 : f32
    %85 = vector.broadcast %cst_32 : f32 to vector<256x1xf32>
    %86 = arith.cmpf oge, %84, %85 : vector<256x1xf32>
    %87 = arith.select %86, %78, %74 : vector<256x1xi1>, vector<256x1xf32>
    %88 = arith.select %86, %75, %78 : vector<256x1xi1>, vector<256x1xf32>
    %c4_i32 = arith.constant 4 : i32
    %89 = arith.addf %87, %88 : vector<256x1xf32>
    %cst_33 = arith.constant 5.000000e-01 : f32
    %90 = vector.broadcast %cst_33 : f32 to vector<256x1xf32>
    %91 = arith.mulf %90, %89 : vector<256x1xf32>
    %92 = vector.broadcast %91 : vector<256x1xf32> to vector<256x16xf32>
    %93 = arith.subf %34, %92 : vector<256x16xf32>
    %cst_34 = arith.constant 0.000000e+00 : f32
    %94 = vector.broadcast %cst_34 : f32 to vector<256x16xf32>
    %95 = arith.maximumf %93, %94 : vector<256x16xf32>
    %cst_35 = arith.constant dense<0.000000e+00> : vector<256xf32>
    %96 = vector.multi_reduction <add>, %95, %cst_35 [1] : vector<256x16xf32> to vector<256xf32>
    %97 = vector.shape_cast %96 : vector<256xf32> to vector<256x1xf32>
    %cst_36 = arith.constant 1.000000e+00 : f32
    %98 = vector.broadcast %cst_36 : f32 to vector<256x1xf32>
    %99 = arith.cmpf oge, %97, %98 : vector<256x1xf32>
    %100 = arith.select %99, %91, %87 : vector<256x1xi1>, vector<256x1xf32>
    %101 = arith.select %99, %88, %91 : vector<256x1xi1>, vector<256x1xf32>
    %c5_i32 = arith.constant 5 : i32
    %102 = arith.addf %100, %101 : vector<256x1xf32>
    %cst_37 = arith.constant 5.000000e-01 : f32
    %103 = vector.broadcast %cst_37 : f32 to vector<256x1xf32>
    %104 = arith.mulf %103, %102 : vector<256x1xf32>
    %105 = vector.broadcast %104 : vector<256x1xf32> to vector<256x16xf32>
    %106 = arith.subf %34, %105 : vector<256x16xf32>
    %cst_38 = arith.constant 0.000000e+00 : f32
    %107 = vector.broadcast %cst_38 : f32 to vector<256x16xf32>
    %108 = arith.maximumf %106, %107 : vector<256x16xf32>
    %cst_39 = arith.constant dense<0.000000e+00> : vector<256xf32>
    %109 = vector.multi_reduction <add>, %108, %cst_39 [1] : vector<256x16xf32> to vector<256xf32>
    %110 = vector.shape_cast %109 : vector<256xf32> to vector<256x1xf32>
    %cst_40 = arith.constant 1.000000e+00 : f32
    %111 = vector.broadcast %cst_40 : f32 to vector<256x1xf32>
    %112 = arith.cmpf oge, %110, %111 : vector<256x1xf32>
    %113 = arith.select %112, %104, %100 : vector<256x1xi1>, vector<256x1xf32>
    %114 = arith.select %112, %101, %104 : vector<256x1xi1>, vector<256x1xf32>
    %c6_i32 = arith.constant 6 : i32
    %115 = arith.addf %113, %114 : vector<256x1xf32>
    %cst_41 = arith.constant 5.000000e-01 : f32
    %116 = vector.broadcast %cst_41 : f32 to vector<256x1xf32>
    %117 = arith.mulf %116, %115 : vector<256x1xf32>
    %118 = vector.broadcast %117 : vector<256x1xf32> to vector<256x16xf32>
    %119 = arith.subf %34, %118 : vector<256x16xf32>
    %cst_42 = arith.constant 0.000000e+00 : f32
    %120 = vector.broadcast %cst_42 : f32 to vector<256x16xf32>
    %121 = arith.maximumf %119, %120 : vector<256x16xf32>
    %cst_43 = arith.constant dense<0.000000e+00> : vector<256xf32>
    %122 = vector.multi_reduction <add>, %121, %cst_43 [1] : vector<256x16xf32> to vector<256xf32>
    %123 = vector.shape_cast %122 : vector<256xf32> to vector<256x1xf32>
    %cst_44 = arith.constant 1.000000e+00 : f32
    %124 = vector.broadcast %cst_44 : f32 to vector<256x1xf32>
    %125 = arith.cmpf oge, %123, %124 : vector<256x1xf32>
    %126 = arith.select %125, %117, %113 : vector<256x1xi1>, vector<256x1xf32>
    %127 = arith.select %125, %114, %117 : vector<256x1xi1>, vector<256x1xf32>
    %c7_i32 = arith.constant 7 : i32
    %128 = arith.addf %126, %127 : vector<256x1xf32>
    %cst_45 = arith.constant 5.000000e-01 : f32
    %129 = vector.broadcast %cst_45 : f32 to vector<256x1xf32>
    %130 = arith.mulf %129, %128 : vector<256x1xf32>
    %131 = vector.broadcast %130 : vector<256x1xf32> to vector<256x16xf32>
    %132 = arith.subf %34, %131 : vector<256x16xf32>
    %cst_46 = arith.constant 0.000000e+00 : f32
    %133 = vector.broadcast %cst_46 : f32 to vector<256x16xf32>
    %134 = arith.maximumf %132, %133 : vector<256x16xf32>
    %cst_47 = arith.constant dense<0.000000e+00> : vector<256xf32>
    %135 = vector.multi_reduction <add>, %134, %cst_47 [1] : vector<256x16xf32> to vector<256xf32>
    %136 = vector.shape_cast %135 : vector<256xf32> to vector<256x1xf32>
    %cst_48 = arith.constant 1.000000e+00 : f32
    %137 = vector.broadcast %cst_48 : f32 to vector<256x1xf32>
    %138 = arith.cmpf oge, %136, %137 : vector<256x1xf32>
    %139 = arith.select %138, %130, %126 : vector<256x1xi1>, vector<256x1xf32>
    %140 = arith.select %138, %127, %130 : vector<256x1xi1>, vector<256x1xf32>
    %c8_i32 = arith.constant 8 : i32
    %141 = arith.addf %139, %140 : vector<256x1xf32>
    %cst_49 = arith.constant 5.000000e-01 : f32
    %142 = vector.broadcast %cst_49 : f32 to vector<256x1xf32>
    %143 = arith.mulf %142, %141 : vector<256x1xf32>
    %144 = vector.broadcast %143 : vector<256x1xf32> to vector<256x16xf32>
    %145 = arith.subf %34, %144 : vector<256x16xf32>
    %cst_50 = arith.constant 0.000000e+00 : f32
    %146 = vector.broadcast %cst_50 : f32 to vector<256x16xf32>
    %147 = arith.maximumf %145, %146 : vector<256x16xf32>
    %cst_51 = arith.constant dense<0.000000e+00> : vector<256xf32>
    %148 = vector.multi_reduction <add>, %147, %cst_51 [1] : vector<256x16xf32> to vector<256xf32>
    %149 = vector.shape_cast %148 : vector<256xf32> to vector<256x1xf32>
    %cst_52 = arith.constant 1.000000e+00 : f32
    %150 = vector.broadcast %cst_52 : f32 to vector<256x1xf32>
    %151 = arith.cmpf oge, %149, %150 : vector<256x1xf32>
    %152 = arith.select %151, %143, %139 : vector<256x1xi1>, vector<256x1xf32>
    %153 = arith.select %151, %140, %143 : vector<256x1xi1>, vector<256x1xf32>
    %c9_i32 = arith.constant 9 : i32
    %154 = arith.addf %152, %153 : vector<256x1xf32>
    %cst_53 = arith.constant 5.000000e-01 : f32
    %155 = vector.broadcast %cst_53 : f32 to vector<256x1xf32>
    %156 = arith.mulf %155, %154 : vector<256x1xf32>
    %157 = vector.broadcast %156 : vector<256x1xf32> to vector<256x16xf32>
    %158 = arith.subf %34, %157 : vector<256x16xf32>
    %cst_54 = arith.constant 0.000000e+00 : f32
    %159 = vector.broadcast %cst_54 : f32 to vector<256x16xf32>
    %160 = arith.maximumf %158, %159 : vector<256x16xf32>
    %cst_55 = arith.constant dense<0.000000e+00> : vector<256xf32>
    %161 = vector.multi_reduction <add>, %160, %cst_55 [1] : vector<256x16xf32> to vector<256xf32>
    %162 = vector.shape_cast %161 : vector<256xf32> to vector<256x1xf32>
    %cst_56 = arith.constant 1.000000e+00 : f32
    %163 = vector.broadcast %cst_56 : f32 to vector<256x1xf32>
    %164 = arith.cmpf oge, %162, %163 : vector<256x1xf32>
    %165 = arith.select %164, %156, %152 : vector<256x1xi1>, vector<256x1xf32>
    %166 = arith.select %164, %153, %156 : vector<256x1xi1>, vector<256x1xf32>
    %c10_i32 = arith.constant 10 : i32
    %167 = arith.addf %165, %166 : vector<256x1xf32>
    %cst_57 = arith.constant 5.000000e-01 : f32
    %168 = vector.broadcast %cst_57 : f32 to vector<256x1xf32>
    %169 = arith.mulf %168, %167 : vector<256x1xf32>
    %170 = vector.broadcast %169 : vector<256x1xf32> to vector<256x16xf32>
    %171 = arith.subf %34, %170 : vector<256x16xf32>
    %cst_58 = arith.constant 0.000000e+00 : f32
    %172 = vector.broadcast %cst_58 : f32 to vector<256x16xf32>
    %173 = arith.maximumf %171, %172 : vector<256x16xf32>
    %cst_59 = arith.constant dense<0.000000e+00> : vector<256xf32>
    %174 = vector.multi_reduction <add>, %173, %cst_59 [1] : vector<256x16xf32> to vector<256xf32>
    %175 = vector.shape_cast %174 : vector<256xf32> to vector<256x1xf32>
    %cst_60 = arith.constant 1.000000e+00 : f32
    %176 = vector.broadcast %cst_60 : f32 to vector<256x1xf32>
    %177 = arith.cmpf oge, %175, %176 : vector<256x1xf32>
    %178 = arith.select %177, %169, %165 : vector<256x1xi1>, vector<256x1xf32>
    %179 = arith.select %177, %166, %169 : vector<256x1xi1>, vector<256x1xf32>
    %c11_i32 = arith.constant 11 : i32
    %180 = arith.addf %178, %179 : vector<256x1xf32>
    %cst_61 = arith.constant 5.000000e-01 : f32
    %181 = vector.broadcast %cst_61 : f32 to vector<256x1xf32>
    %182 = arith.mulf %181, %180 : vector<256x1xf32>
    %183 = vector.broadcast %182 : vector<256x1xf32> to vector<256x16xf32>
    %184 = arith.subf %34, %183 : vector<256x16xf32>
    %cst_62 = arith.constant 0.000000e+00 : f32
    %185 = vector.broadcast %cst_62 : f32 to vector<256x16xf32>
    %186 = arith.maximumf %184, %185 : vector<256x16xf32>
    %cst_63 = arith.constant dense<0.000000e+00> : vector<256xf32>
    %187 = vector.multi_reduction <add>, %186, %cst_63 [1] : vector<256x16xf32> to vector<256xf32>
    %188 = vector.shape_cast %187 : vector<256xf32> to vector<256x1xf32>
    %cst_64 = arith.constant 1.000000e+00 : f32
    %189 = vector.broadcast %cst_64 : f32 to vector<256x1xf32>
    %190 = arith.cmpf oge, %188, %189 : vector<256x1xf32>
    %191 = arith.select %190, %182, %178 : vector<256x1xi1>, vector<256x1xf32>
    %192 = arith.select %190, %179, %182 : vector<256x1xi1>, vector<256x1xf32>
    %c0_i32_65 = arith.constant 0 : i32
    %193 = vector.broadcast %191 : vector<256x1xf32> to vector<256x16xf32>
    %194 = arith.cmpf ogt, %34, %193 : vector<256x16xf32>
    %195 = arith.extui %194 : vector<256x16xi1> to vector<256x16xi32>
    %196 = arith.sitofp %195 : vector<256x16xi32> to vector<256x16xf32>
    %cst_66 = arith.constant dense<0.000000e+00> : vector<256xf32>
    %197 = vector.multi_reduction <add>, %196, %cst_66 [1] : vector<256x16xf32> to vector<256xf32>
    %198 = vector.shape_cast %197 : vector<256xf32> to vector<256x1xf32>
    %199 = arith.mulf %34, %196 : vector<256x16xf32>
    %cst_67 = arith.constant dense<0.000000e+00> : vector<256xf32>
    %200 = vector.multi_reduction <add>, %199, %cst_67 [1] : vector<256x16xf32> to vector<256xf32>
    %201 = vector.shape_cast %200 : vector<256xf32> to vector<256x1xf32>
    %cst_68 = arith.constant 1.000000e+00 : f32
    %202 = vector.broadcast %cst_68 : f32 to vector<256x1xf32>
    %203 = arith.subf %201, %202 : vector<256x1xf32>
    %204 = arith.divf %203, %198 : vector<256x1xf32>
    %c1_i32_69 = arith.constant 1 : i32
    %205 = vector.broadcast %204 : vector<256x1xf32> to vector<256x16xf32>
    %206 = arith.cmpf ogt, %34, %205 : vector<256x16xf32>
    %207 = arith.extui %206 : vector<256x16xi1> to vector<256x16xi32>
    %208 = arith.sitofp %207 : vector<256x16xi32> to vector<256x16xf32>
    %cst_70 = arith.constant dense<0.000000e+00> : vector<256xf32>
    %209 = vector.multi_reduction <add>, %208, %cst_70 [1] : vector<256x16xf32> to vector<256xf32>
    %210 = vector.shape_cast %209 : vector<256xf32> to vector<256x1xf32>
    %211 = arith.mulf %34, %208 : vector<256x16xf32>
    %cst_71 = arith.constant dense<0.000000e+00> : vector<256xf32>
    %212 = vector.multi_reduction <add>, %211, %cst_71 [1] : vector<256x16xf32> to vector<256xf32>
    %213 = vector.shape_cast %212 : vector<256xf32> to vector<256x1xf32>
    %cst_72 = arith.constant 1.000000e+00 : f32
    %214 = vector.broadcast %cst_72 : f32 to vector<256x1xf32>
    %215 = arith.subf %213, %214 : vector<256x1xf32>
    %216 = arith.divf %215, %210 : vector<256x1xf32>
    %217 = vector.broadcast %216 : vector<256x1xf32> to vector<256x16xf32>
    %218 = arith.subf %34, %217 : vector<256x16xf32>
    %cst_73 = arith.constant 0.000000e+00 : f32
    %219 = vector.broadcast %cst_73 : f32 to vector<256x16xf32>
    %220 = arith.maximumf %218, %219 : vector<256x16xf32>
    %c0_74 = arith.constant 0 : index
    %c0_75 = arith.constant 0 : index
    %221 = vector.load %arg6[%c0_74, %c0_75] : memref<256x16xf32, #tpu.memory_space<vmem>>, vector<256x16xf32>
    tpu.vector_store %arg6[%c0_74, %c0_75], %220 {strides = array<i32>} : memref<256x16xf32, #tpu.memory_space<vmem>>, vector<256x16xf32>,
    return
  }
  func.func @transform_0(%arg0: i32) -> (i32, i32) {
    %c0_i32 = arith.constant 0 : i32
    %c0_i32_0 = arith.constant 0 : i32
    return %arg0, %c0_i32 : i32, i32
  }
  func.func @transform_1(%arg0: i32) -> (i32, i32) {
    %c0_i32 = arith.constant 0 : i32
    %c0_i32_0 = arith.constant 0 : i32
    return %arg0, %c0_i32 : i32, i32
  }
  func.func @transform_2(%arg0: i32) -> (i32, i32) {
    %c0_i32 = arith.constant 0 : i32
    %c0_i32_0 = arith.constant 0 : i32
    %c0_i32_1 = arith.constant 0 : i32
    return %c0_i32, %c0_i32_0 : i32, i32
  }
  func.func @transform_3(%arg0: i32) -> (i32, i32) {
    %c0_i32 = arith.constant 0 : i32
    %c0_i32_0 = arith.constant 0 : i32
    %c0_i32_1 = arith.constant 0 : i32
    return %c0_i32, %c0_i32_0 : i32, i32
  }
  func.func @transform_4(%arg0: i32) -> (i32, i32) {
    %c0_i32 = arith.constant 0 : i32
    %c0_i32_0 = arith.constant 0 : i32
    %c0_i32_1 = arith.constant 0 : i32
    return %c0_i32, %c0_i32_0 : i32, i32
  }
  func.func @transform_5(%arg0: i32) -> (i32, i32) {
    %c0_i32 = arith.constant 0 : i32
    %c0_i32_0 = arith.constant 0 : i32
    return %arg0, %c0_i32 : i32, i32
  }
}

</mosaic_0001>

<llo_original>
// kernel: tpu_custom_call.1
$region0: #{tpu_custom_call.1}
  #allocation0 [shape = 'u32[]', space=smem, size = 0x4, offset = 0x4, fixed_abs, tag = 'smem constant byte address 0x4 - core index']
  #allocation1 [shape = 'u32[144,128]{1,0:T(1,128)}', space=vmem, size = 0x12000, scoped, tag = 'internal scratch']
  %s0 = inlined_call_operand.vmem [shape: bf16[512,32], index: 0, kind: input, shape index: {}]
  %s1 = inlined_call_operand.vmem [shape: f32[512,16], index: 1, kind: input, shape index: {}]
  %s2 = inlined_call_operand.vmem [shape: bf16[32,16], index: 2, kind: input, shape index: {}]
  %s3 = inlined_call_operand.vmem [shape: f32[1,16], index: 3, kind: input, shape index: {}]
  %s4 = inlined_call_operand.vmem [shape: f32[1,16], index: 4, kind: input, shape index: {}]
  %s5 = inlined_call_operand.vmem [shape: f32[512,16], index: 5, kind: output, shape index: {}]
  %s6 = sld [smem:[#allocation0]]
  $region53: #{tpu_custom_call.1} parent=0
    _
  %s8 = ssub.s32 1, %s6
  %s9 = scalar_select 0, %s8, %s6
  loop: start=0, step=1, limit=4
  $region2: #{tpu_custom_call.1} parent=0 // loop_pre_header
    _
  $region3: #{tpu_custom_call.1} parent=0 // loop_header
    %s11 = sphi 0, %s15
    %p12 = scmp.ge.s32.totalorder %s11, 4
    %s21 = sphi 0, %s23
    %s24 = sphi 0, %s21
    %s25 = sphi 0, %s24
    %s41 = sphi 0, %s25
    %s47 = sphi 0, %s49
    %s50 = sphi 0, %s47
    %s51 = sphi 0, %s50
    %s67 = sphi 0, %s51
    %s71 = sphi 0, %s71
    %s73 = sphi 0, %s71
    %s74 = sphi 0, %s73
    %s88 = sphi 0, %s74
    %s92 = sphi 0, %s92
    %s94 = sphi 0, %s92
    %s95 = sphi 0, %s94
    %s109 = sphi 0, %s95
    %s113 = sphi 0, %s113
    %s115 = sphi 0, %s113
    %s116 = sphi 0, %s115
    %s130 = sphi 0, %s116
    %s136 = sphi 0, %s138
    %s139 = sphi 0, %s136
    %s140 = sphi 0, %s139
    %s156 = sphi 0, %s140
  $region4: #{tpu_custom_call.1} parent=0 // loop_header_branch
    %14 = sbr.rel (%p12) target = $region8
  $region5: #{tpu_custom_call.1} parent=0 // loop_body
    %s16 = ssub.s32 %s11, 1
    %s17 = ssub.s32 %s11, 2
    %s18 = sadd.s32 %s11, 1
    %s19 = ssub.s32 %s11, %s18
    %p20 = scmp.eq.s32.totalorder %s19, 0
    %s22 = sadd.s32 %s21, 1
    %s23 = scalar_select %p20, %s21, %s22
    %p26 = pneg %p20
    %p27 = scmp.eq.s32.totalorder %s11, 1
    %p28 = por %p26, %p27
    %p29 = scmp.ne.s32.totalorder %s21, %s24
    %p30 = scmp.eq.s32.totalorder %s11, 0
    %p31 = por %p29, %p30
    %p32 = scmp.ne.s32.totalorder %s21, %s24
    %p33 = scmp.eq.s32.totalorder %s16, 1
    %p34 = por %p32, %p33
    %p35 = scmp.ne.s32.totalorder %s24, %s25
    %p36 = scmp.eq.s32.totalorder %s16, 0
    %p37 = por %p35, %p36
    %p38 = scmp.ne.s32.totalorder %s24, %s25
    %p39 = scmp.eq.s32.totalorder %s17, 1
    %p40 = por %p38, %p39
    %p42 = scmp.ne.s32.totalorder %s25, %s41
    %p43 = scmp.eq.s32.totalorder %s17, 0
    %p44 = por %p42, %p43
    %s45 = ssub.s32 %s11, %s18
    %p46 = scmp.eq.s32.totalorder %s45, 0
    %s48 = sadd.s32 %s47, 1
    %s49 = scalar_select %p46, %s47, %s48
    %p52 = pneg %p46
    %p53 = scmp.eq.s32.totalorder %s11, 1
    %p54 = por %p52, %p53
    %p55 = scmp.ne.s32.totalorder %s47, %s50
    %p56 = scmp.eq.s32.totalorder %s11, 0
    %p57 = por %p55, %p56
    %p58 = scmp.ne.s32.totalorder %s47, %s50
    %p59 = scmp.eq.s32.totalorder %s16, 1
    %p60 = por %p58, %p59
    %p61 = scmp.ne.s32.totalorder %s50, %s51
    %p62 = scmp.eq.s32.totalorder %s16, 0
    %p63 = por %p61, %p62
    %p64 = scmp.ne.s32.totalorder %s50, %s51
    %p65 = scmp.eq.s32.totalorder %s17, 1
    %p66 = por %p64, %p65
    %p68 = scmp.ne.s32.totalorder %s51, %s67
    %p69 = scmp.eq.s32.totalorder %s17, 0
    %p70 = por %p68, %p69
    %s72 = sadd.s32 %s71, 1
    %p75 = scmp.eq.s32.totalorder %s11, 1
    %p76 = scmp.ne.s32.totalorder %s71, %s73
    %p77 = scmp.eq.s32.totalorder %s11, 0
    %p78 = por %p76, %p77
    %p79 = scmp.ne.s32.totalorder %s71, %s73
    %p80 = scmp.eq.s32.totalorder %s16, 1
    %p81 = por %p79, %p80
    %p82 = scmp.ne.s32.totalorder %s73, %s74
    %p83 = scmp.eq.s32.totalorder %s16, 0
    %p84 = por %p82, %p83
    %p85 = scmp.ne.s32.totalorder %s73, %s74
    %p86 = scmp.eq.s32.totalorder %s17, 1
    %p87 = por %p85, %p86
    %p89 = scmp.ne.s32.totalorder %s74, %s88
    %p90 = scmp.eq.s32.totalorder %s17, 0
    %p91 = por %p89, %p90
    %s93 = sadd.s32 %s92, 1
    %p96 = scmp.eq.s32.totalorder %s11, 1
    %p97 = scmp.ne.s32.totalorder %s92, %s94
    %p98 = scmp.eq.s32.totalorder %s11, 0
    %p99 = por %p97, %p98
    %p100 = scmp.ne.s32.totalorder %s92, %s94
    %p101 = scmp.eq.s32.totalorder %s16, 1
    %p102 = por %p100, %p101
    %p103 = scmp.ne.s32.totalorder %s94, %s95
    %p104 = scmp.eq.s32.totalorder %s16, 0
    %p105 = por %p103, %p104
    %p106 = scmp.ne.s32.totalorder %s94, %s95
    %p107 = scmp.eq.s32.totalorder %s17, 1
    %p108 = por %p106, %p107
    %p110 = scmp.ne.s32.totalorder %s95, %s109
    %p111 = scmp.eq.s32.totalorder %s17, 0
    %p112 = por %p110, %p111
    %s114 = sadd.s32 %s113, 1
    %p117 = scmp.eq.s32.totalorder %s11, 1
    %p118 = scmp.ne.s32.totalorder %s113, %s115
    %p119 = scmp.eq.s32.totalorder %s11, 0
    %p120 = por %p118, %p119
    %p121 = scmp.ne.s32.totalorder %s113, %s115
    %p122 = scmp.eq.s32.totalorder %s16, 1
    %p123 = por %p121, %p122
    %p124 = scmp.ne.s32.totalorder %s115, %s116
    %p125 = scmp.eq.s32.totalorder %s16, 0
    %p126 = por %p124, %p125
    %p127 = scmp.ne.s32.totalorder %s115, %s116
    %p128 = scmp.eq.s32.totalorder %s17, 1
    %p129 = por %p127, %p128
    %p131 = scmp.ne.s32.totalorder %s116, %s130
    %p132 = scmp.eq.s32.totalorder %s17, 0
    %p133 = por %p131, %p132
    %s134 = ssub.s32 %s11, %s18
    %p135 = scmp.eq.s32.totalorder %s134, 0
    %s137 = sadd.s32 %s136, 1
    %s138 = scalar_select %p135, %s136, %s137
    %p141 = pneg %p135
    %p142 = scmp.eq.s32.totalorder %s11, 1
    %p143 = por %p141, %p142
    %p144 = scmp.ne.s32.totalorder %s136, %s139
    %p145 = scmp.eq.s32.totalorder %s11, 0
    %p146 = por %p144, %p145
    %p147 = scmp.ne.s32.totalorder %s136, %s139
    %p148 = scmp.eq.s32.totalorder %s16, 1
    %p149 = por %p147, %p148
    %p150 = scmp.ne.s32.totalorder %s139, %s140
    %p151 = scmp.eq.s32.totalorder %s16, 0
    %p152 = por %p150, %p151
    %p153 = scmp.ne.s32.totalorder %s139, %s140
    %p154 = scmp.eq.s32.totalorder %s17, 1
    %p155 = por %p153, %p154
    %p157 = scmp.ne.s32.totalorder %s140, %s156
    %p158 = scmp.eq.s32.totalorder %s17, 0
    %p159 = por %p157, %p158
    %p160 = scmp.le.s32.totalorder 1, %s11
    %p161 = scmp.lt.s32.totalorder %s11, 3
    %p162 = pnand %p160, %p161
    %p163 = pneg %p162
    // Predicated region
    $region9: #{tpu_custom_call.1} parent=5 // pred_check
      _
    $region10: #{tpu_custom_call.1} parent=5 // pred_check_branch
      %165 = sbr.rel (%p162) target = $region12
    $region11: #{tpu_custom_call.1} parent=5 // pred_region
      %s166 = ssub.s32 %s11, 1
      // Predicated region
      $region13: #{tpu_custom_call.1} parent=11 // pred_check
        %p167 = pneg %p84
      $region14: #{tpu_custom_call.1} parent=11 // pred_check_branch
        %169 = sbr.rel (%p167) target = $region16
      $region15: #{tpu_custom_call.1} parent=11 // pred_region
        _
      $region16: #{tpu_custom_call.1} parent=11 // pred_fallthru
        _
      // Predicated region
      $region17: #{tpu_custom_call.1} parent=11 // pred_check
        %p170 = pneg %p105
      $region18: #{tpu_custom_call.1} parent=11 // pred_check_branch
        %172 = sbr.rel (%p170) target = $region20
      $region19: #{tpu_custom_call.1} parent=11 // pred_region
        _
      $region20: #{tpu_custom_call.1} parent=11 // pred_fallthru
        _
      // Predicated region
      $region21: #{tpu_custom_call.1} parent=11 // pred_check
        %p173 = pneg %p126
      $region22: #{tpu_custom_call.1} parent=11 // pred_check_branch
        %175 = sbr.rel (%p173) target = $region24
      $region23: #{tpu_custom_call.1} parent=11 // pred_region
        _
      $region24: #{tpu_custom_call.1} parent=11 // pred_fallthru
        _
    $region12: #{tpu_custom_call.1} parent=5 // pred_fallthru
      _
    %p176 = scmp.lt.s32.totalorder %s11, 2
    // Predicated region
    $region25: #{tpu_custom_call.1} parent=5 // pred_check
      %p177 = pneg %p176
    $region26: #{tpu_custom_call.1} parent=5 // pred_check_branch
      %179 = sbr.rel (%p177) target = $region28
    $region27: #{tpu_custom_call.1} parent=5 // pred_region
      // Predicated region
      $region29: #{tpu_custom_call.1} parent=27 // pred_check
        %p180 = pneg %p31
      $region30: #{tpu_custom_call.1} parent=27 // pred_check_branch
        %182 = sbr.rel (%p180) target = $region32
      $region31: #{tpu_custom_call.1} parent=27 // pred_region
        %s183 = smul.u32 32, %s11
        %p184 = scmp.lt.s32.totalorder %s183, 63
        %s185 = scalar_select %p184, %s183, 63
        %s186 = smul.addr %s185, 4
        %s187 = scalar_lea.vmem %s0, %s186
        %s188 = smul.u32 32, %s11
      $region32: #{tpu_custom_call.1} parent=27 // pred_fallthru
        _
      // Predicated region
      $region33: #{tpu_custom_call.1} parent=27 // pred_check
        %p189 = pneg %p57
      $region34: #{tpu_custom_call.1} parent=27 // pred_check_branch
        %191 = sbr.rel (%p189) target = $region36
      $region35: #{tpu_custom_call.1} parent=27 // pred_region
        %s192 = smul.u32 32, %s11
        %p193 = scmp.lt.s32.totalorder %s192, 63
        %s194 = scalar_select %p193, %s192, 63
        %s195 = smul.addr %s194, 8
        %s196 = scalar_lea.vmem %s1, %s195
        %s197 = smul.u32 32, %s11
      $region36: #{tpu_custom_call.1} parent=27 // pred_fallthru
        _
    $region28: #{tpu_custom_call.1} parent=5 // pred_fallthru
      _
    %p198 = scmp.le.s32.totalorder 1, %s11
    %p199 = scmp.lt.s32.totalorder %s11, 3
    %p200 = pnand %p198, %p199
    %p201 = pneg %p200
    // Predicated region
    $region37: #{tpu_custom_call.1} parent=5 // pred_check
      _
    $region38: #{tpu_custom_call.1} parent=5 // pred_check_branch
      %203 = sbr.rel (%p200) target = $region40
    $region39: #{tpu_custom_call.1} parent=5 // pred_region
      %s204 = ssub.s32 %s11, 1
      %s205 = smul.u32 32, %s16
      %p206 = scmp.lt.s32.totalorder %s205, 63
      %s207 = scalar_select %p206, %s205, 63
      %s208 = smul.addr %s207, 4
      %s209 = scalar_lea.vmem %s0, %s208
      %p210 = pneg %p37
      %p211 = pneg %p34
      %s212 = smul.u32 32, %s16
      %p213 = scmp.lt.s32.totalorder %s212, 63
      %s214 = scalar_select %p213, %s212, 63
      %s215 = smul.addr %s214, 8
      %s216 = scalar_lea.vmem %s1, %s215
      %p217 = pneg %p63
      %p218 = pneg %p60
      %p219 = pneg %p84
      %p220 = pneg %p81
      %p221 = pneg %p105
      %p222 = pneg %p102
      %p223 = pneg %p126
      %p224 = pneg %p123
      %p225 = pneg %p152
      %p226 = pneg %p149
      %s227 = smul.u32 32, %s16
      %p228 = scmp.lt.s32.totalorder %s227, 63
      %s229 = scalar_select %p228, %s227, 63
      %s230 = smul.addr %s229, 8
      %s231 = scalar_lea.vmem %s5, %s230
      %s232 = smul.u32 32, %s16
      %p233 = scmp.lt.s32.totalorder %s232, 63
      %s234 = scalar_select %p233, %s232, 63
      %s235 = smul.addr %s234, 4
      %s236 = scalar_lea.vmem %s0, %s235
      %s237 = smul.u32 32, %s16
      %s238 = smul.u32 32, %s16
      %p239 = scmp.lt.s32.totalorder %s238, 63
      %s240 = scalar_select %p239, %s238, 63
      %s241 = smul.addr %s240, 8
      %s242 = scalar_lea.vmem %s1, %s241
      %s243 = smul.u32 32, %s16
      %s244 = smul.u32 32, %s16
      %p245 = scmp.lt.s32.totalorder %s244, 63
      %s246 = scalar_select %p245, %s244, 63
      %s247 = smul.addr %s246, 8
      %s248 = scalar_lea.vmem %s5, %s247
      %s249 = smul.u32 32, %s16
      %v251 = vld [vmem:[%s236] sm:$0xf]
      %v252 = vld [vmem:[%s236 + $0x4] sm:$0xf]
      %v253 = vld [vmem:[%s236 + $0x8] sm:$0xf]
      %v254 = vld [vmem:[%s236 + $0xc] sm:$0xf]
      %v255 = vld [vmem:[%s236 + $0x10] sm:$0xf]
      %v256 = vld [vmem:[%s236 + $0x14] sm:$0xf]
      %v257 = vld [vmem:[%s236 + $0x18] sm:$0xf]
      %v258 = vld [vmem:[%s236 + $0x1c] sm:$0xf]
      %v259 = vld [vmem:[%s236 + $0x20] sm:$0xf]
      %v260 = vld [vmem:[%s236 + $0x24] sm:$0xf]
      %v261 = vld [vmem:[%s236 + $0x28] sm:$0xf]
      %v262 = vld [vmem:[%s236 + $0x2c] sm:$0xf]
      %v263 = vld [vmem:[%s236 + $0x30] sm:$0xf]
      %v264 = vld [vmem:[%s236 + $0x34] sm:$0xf]
      %v265 = vld [vmem:[%s236 + $0x38] sm:$0xf]
      %v266 = vld [vmem:[%s236 + $0x3c] sm:$0xf]
      %v267 = vld [vmem:[%s236 + $0x40] sm:$0xf]
      %v268 = vld [vmem:[%s236 + $0x44] sm:$0xf]
      %v269 = vld [vmem:[%s236 + $0x48] sm:$0xf]
      %v270 = vld [vmem:[%s236 + $0x4c] sm:$0xf]
      %v271 = vld [vmem:[%s236 + $0x50] sm:$0xf]
      %v272 = vld [vmem:[%s236 + $0x54] sm:$0xf]
      %v273 = vld [vmem:[%s236 + $0x58] sm:$0xf]
      %v274 = vld [vmem:[%s236 + $0x5c] sm:$0xf]
      %v275 = vld [vmem:[%s236 + $0x60] sm:$0xf]
      %v276 = vld [vmem:[%s236 + $0x64] sm:$0xf]
      %v277 = vld [vmem:[%s236 + $0x68] sm:$0xf]
      %v278 = vld [vmem:[%s236 + $0x6c] sm:$0xf]
      %v279 = vld [vmem:[%s236 + $0x70] sm:$0xf]
      %v280 = vld [vmem:[%s236 + $0x74] sm:$0xf]
      %v281 = vld [vmem:[%s236 + $0x78] sm:$0xf]
      %v282 = vld [vmem:[%s236 + $0x7c] sm:$0xf]
      %v283 = vld [vmem:[%s2] sm:$0xf]
      %v284 = vld [vmem:[%s2 + $0x4] sm:$0xf]
      %v285 = vld [vmem:[%s2 + $0x8] sm:$0xf]
      %v286 = vld [vmem:[%s2 + $0xc] sm:$0xf]
      %v319 = vunpack.c.l.b16 %v251
      %v320 = vunpack.c.l.b16 %v252
      %v321 = vunpack.c.l.b16 %v253
      %v322 = vunpack.c.l.b16 %v254
      %v323 = vunpack.c.l.b16 %v255
      %v324 = vunpack.c.l.b16 %v256
      %v325 = vunpack.c.l.b16 %v257
      %v326 = vunpack.c.l.b16 %v258
      %v327 = vunpack.c.l.b16 %v259
      %v328 = vunpack.c.l.b16 %v260
      %v329 = vunpack.c.l.b16 %v261
      %v330 = vunpack.c.l.b16 %v262
      %v331 = vunpack.c.l.b16 %v263
      %v332 = vunpack.c.l.b16 %v264
      %v333 = vunpack.c.l.b16 %v265
      %v334 = vunpack.c.l.b16 %v266
      %v335 = vunpack.c.l.b16 %v267
      %v336 = vunpack.c.l.b16 %v268
      %v337 = vunpack.c.l.b16 %v269
      %v338 = vunpack.c.l.b16 %v270
      %v339 = vunpack.c.l.b16 %v271
      %v340 = vunpack.c.l.b16 %v272
      %v341 = vunpack.c.l.b16 %v273
      %v342 = vunpack.c.l.b16 %v274
      %v343 = vunpack.c.l.b16 %v275
      %v344 = vunpack.c.l.b16 %v276
      %v345 = vunpack.c.l.b16 %v277
      %v346 = vunpack.c.l.b16 %v278
      %v347 = vunpack.c.l.b16 %v279
      %v348 = vunpack.c.l.b16 %v280
      %v349 = vunpack.c.l.b16 %v281
      %v350 = vunpack.c.l.b16 %v282
      %v351 = vpack.c.b16 %v320, %v319
      %v352 = vpack.c.b16 %v322, %v321
      %v353 = vpack.c.b16 %v324, %v323
      %v354 = vpack.c.b16 %v326, %v325
      %v355 = vpack.c.b16 %v328, %v327
      %v356 = vpack.c.b16 %v330, %v329
      %v357 = vpack.c.b16 %v332, %v331
      %v358 = vpack.c.b16 %v334, %v333
      %v359 = vpack.c.b16 %v336, %v335
      %v360 = vpack.c.b16 %v338, %v337
      %v361 = vpack.c.b16 %v340, %v339
      %v362 = vpack.c.b16 %v342, %v341
      %v363 = vpack.c.b16 %v344, %v343
      %v364 = vpack.c.b16 %v346, %v345
      %v365 = vpack.c.b16 %v348, %v347
      %v366 = vpack.c.b16 %v350, %v349
      %v371 = vunpack.c.l.b16 %v283
      %v372 = vunpack.c.l.b16 %v284
      %v373 = vunpack.c.l.b16 %v285
      %v374 = vunpack.c.l.b16 %v286
      %v375 = vpack.c.b16 %v372, %v371
      %v376 = vpack.c.b16 %v374, %v373
      %vm379 = vcmask 261120
      %v381 = vsel %vm379, %v351, 0
      %v384 = vsel %vm379, %v352, 0
      %v387 = vsel %vm379, %v353, 0
      %v390 = vsel %vm379, %v354, 0
      %v393 = vsel %vm379, %v355, 0
      %v396 = vsel %vm379, %v356, 0
      %v399 = vsel %vm379, %v357, 0
      %v402 = vsel %vm379, %v358, 0
      %v405 = vsel %vm379, %v359, 0
      %v408 = vsel %vm379, %v360, 0
      %v411 = vsel %vm379, %v361, 0
      %v414 = vsel %vm379, %v362, 0
      %v417 = vsel %vm379, %v363, 0
      %v420 = vsel %vm379, %v364, 0
      %v423 = vsel %vm379, %v365, 0
      %v426 = vsel %vm379, %v366, 0
      %428 = vmatprep.subr.bf16.mxu0 0
      %429 = vmatpush1.bf16.msra.mxu0 0
      %430 = vmatprep.subr.bf16.mxu0 0
      %431 = vmatpush1.bf16.msra.mxu0 0
      %432 = vmatprep.subr.bf16.mxu0 0
      %433 = vmatpush1.bf16.msra.mxu0 0
      %434 = vmatprep.subr.bf16.mxu0 0
      %435 = vmatpush1.bf16.msra.mxu0 0
      %436 = vmatprep.subr.bf16.mxu0 0
      %437 = vmatpush1.bf16.msra.mxu0 0
      %438 = vmatprep.subr.bf16.mxu0 0
      %439 = vmatpush1.bf16.msra.mxu0 0
      %440 = vmatprep.subr.bf16.mxu0 0
      %441 = vmatpush1.bf16.msra.mxu0 %v376
      %442 = vmatprep.subr.bf16.mxu0 0
      %443 = vmatpush1.bf16.msra.mxu0 %v375
      %444 = vmatprep.subr.bf16.mxu0 0
      %445 = vmatpush2.bf16.msra.mxu0 0
      %446 = vmatprep.subr.bf16.mxu0 0
      %447 = vmatpush2.bf16.msra.mxu0 0
      %448 = vmatprep.subr.bf16.mxu0 0
      %449 = vmatpush2.bf16.msra.mxu0 0
      %450 = vmatprep.subr.bf16.mxu0 0
      %451 = vmatpush2.bf16.msra.mxu0 0
      %452 = vmatprep.subr.bf16.mxu0 0
      %453 = vmatpush2.bf16.msra.mxu0 0
      %454 = vmatprep.subr.bf16.mxu0 0
      %455 = vmatpush2.bf16.msra.mxu0 0
      %456 = vmatprep.subr.bf16.mxu0 0
      %457 = vmatpush2.bf16.msra.mxu0 0
      %458 = vmatprep.subr.bf16.mxu0 0
      %459 = vmatpush2.bf16.msra.mxu0 0
      %460 = vmatprep.mubr.bf16.mxu0 0
      %461 = vmatmul.mubr.bf16.gmra.mxu0 %v381
      %v462 = vpop.f32.mrf.mxu0
      %v463 = vadd.f32 0.0, %v462
      %v464 = vpop.f32.mrf.mxu0
      %v465 = vpop.f32.mrf.mxu0
      %v466 = vadd.f32 0.0, %v465
      %v467 = vpop.f32.mrf.mxu0
      %468 = vmatprep.mubr.bf16.mxu0 0
      %469 = vmatmul.mubr.bf16.gmra.mxu0 %v384
      %v470 = vpop.f32.mrf.mxu0
      %v471 = vadd.f32 0.0, %v470
      %v472 = vpop.f32.mrf.mxu0
      %v473 = vpop.f32.mrf.mxu0
      %v474 = vadd.f32 0.0, %v473
      %v475 = vpop.f32.mrf.mxu0
      %476 = vmatprep.mubr.bf16.mxu0 0
      %477 = vmatmul.mubr.bf16.gmra.mxu0 %v387
      %v478 = vpop.f32.mrf.mxu0
      %v479 = vadd.f32 0.0, %v478
      %v480 = vpop.f32.mrf.mxu0
      %v481 = vpop.f32.mrf.mxu0
      %v482 = vadd.f32 0.0, %v481
      %v483 = vpop.f32.mrf.mxu0
      %484 = vmatprep.mubr.bf16.mxu0 0
      %485 = vmatmul.mubr.bf16.gmra.mxu0 %v390
      %v486 = vpop.f32.mrf.mxu0
      %v487 = vadd.f32 0.0, %v486
      %v488 = vpop.f32.mrf.mxu0
      %v489 = vpop.f32.mrf.mxu0
      %v490 = vadd.f32 0.0, %v489
      %v491 = vpop.f32.mrf.mxu0
      %492 = vmatprep.mubr.bf16.mxu0 0
      %493 = vmatmul.mubr.bf16.gmra.mxu0 %v393
      %v494 = vpop.f32.mrf.mxu0
      %v495 = vadd.f32 0.0, %v494
      %v496 = vpop.f32.mrf.mxu0
      %v497 = vpop.f32.mrf.mxu0
      %v498 = vadd.f32 0.0, %v497
      %v499 = vpop.f32.mrf.mxu0
      %500 = vmatprep.mubr.bf16.mxu0 0
      %501 = vmatmul.mubr.bf16.gmra.mxu0 %v396
      %v502 = vpop.f32.mrf.mxu0
      %v503 = vadd.f32 0.0, %v502
      %v504 = vpop.f32.mrf.mxu0
      %v505 = vpop.f32.mrf.mxu0
      %v506 = vadd.f32 0.0, %v505
      %v507 = vpop.f32.mrf.mxu0
      %508 = vmatprep.mubr.bf16.mxu0 0
      %509 = vmatmul.mubr.bf16.gmra.mxu0 %v399
      %v510 = vpop.f32.mrf.mxu0
      %v511 = vadd.f32 0.0, %v510
      %v512 = vpop.f32.mrf.mxu0
      %v513 = vpop.f32.mrf.mxu0
      %v514 = vadd.f32 0.0, %v513
      %v515 = vpop.f32.mrf.mxu0
      %516 = vmatprep.mubr.bf16.mxu0 0
      %517 = vmatmul.mubr.bf16.gmra.mxu0 %v402
      %v518 = vpop.f32.mrf.mxu0
      %v519 = vadd.f32 0.0, %v518
      %v520 = vpop.f32.mrf.mxu0
      %v521 = vpop.f32.mrf.mxu0
      %v522 = vadd.f32 0.0, %v521
      %v523 = vpop.f32.mrf.mxu0
      %524 = vmatprep.mubr.bf16.mxu0 0
      %525 = vmatmul.mubr.bf16.gmra.mxu0 %v405
      %v526 = vpop.f32.mrf.mxu0
      %v527 = vadd.f32 0.0, %v526
      %v528 = vpop.f32.mrf.mxu0
      %v529 = vpop.f32.mrf.mxu0
      %v530 = vadd.f32 0.0, %v529
      %v531 = vpop.f32.mrf.mxu0
      %532 = vmatprep.mubr.bf16.mxu0 0
      %533 = vmatmul.mubr.bf16.gmra.mxu0 %v408
      %v534 = vpop.f32.mrf.mxu0
      %v535 = vadd.f32 0.0, %v534
      %v536 = vpop.f32.mrf.mxu0
      %v537 = vpop.f32.mrf.mxu0
      %v538 = vadd.f32 0.0, %v537
      %v539 = vpop.f32.mrf.mxu0
      %540 = vmatprep.mubr.bf16.mxu0 0
      %541 = vmatmul.mubr.bf16.gmra.mxu0 %v411
      %v542 = vpop.f32.mrf.mxu0
      %v543 = vadd.f32 0.0, %v542
      %v544 = vpop.f32.mrf.mxu0
      %v545 = vpop.f32.mrf.mxu0
      %v546 = vadd.f32 0.0, %v545
      %v547 = vpop.f32.mrf.mxu0
      %548 = vmatprep.mubr.bf16.mxu0 0
      %549 = vmatmul.mubr.bf16.gmra.mxu0 %v414
      %v550 = vpop.f32.mrf.mxu0
      %v551 = vadd.f32 0.0, %v550
      %v552 = vpop.f32.mrf.mxu0
      %v553 = vpop.f32.mrf.mxu0
      %v554 = vadd.f32 0.0, %v553
      %v555 = vpop.f32.mrf.mxu0
      %556 = vmatprep.mubr.bf16.mxu0 0
      %557 = vmatmul.mubr.bf16.gmra.mxu0 %v417
      %v558 = vpop.f32.mrf.mxu0
      %v559 = vadd.f32 0.0, %v558
      %v560 = vpop.f32.mrf.mxu0
      %v561 = vpop.f32.mrf.mxu0
      %v562 = vadd.f32 0.0, %v561
      %v563 = vpop.f32.mrf.mxu0
      %564 = vmatprep.mubr.bf16.mxu0 0
      %565 = vmatmul.mubr.bf16.gmra.mxu0 %v420
      %v566 = vpop.f32.mrf.mxu0
      %v567 = vadd.f32 0.0, %v566
      %v568 = vpop.f32.mrf.mxu0
      %v569 = vpop.f32.mrf.mxu0
      %v570 = vadd.f32 0.0, %v569
      %v571 = vpop.f32.mrf.mxu0
      %572 = vmatprep.mubr.bf16.mxu0 0
      %573 = vmatmul.mubr.bf16.gmra.mxu0 %v423
      %v574 = vpop.f32.mrf.mxu0
      %v575 = vadd.f32 0.0, %v574
      %v576 = vpop.f32.mrf.mxu0
      %v577 = vpop.f32.mrf.mxu0
      %v578 = vadd.f32 0.0, %v577
      %v579 = vpop.f32.mrf.mxu0
      %580 = vmatprep.mubr.bf16.mxu0 0
      %581 = vmatmul.mubr.bf16.gmra.mxu0 %v426
      %v582 = vpop.f32.mrf.mxu0
      %v583 = vadd.f32 0.0, %v582
      %v584 = vpop.f32.mrf.mxu0
      %v585 = vpop.f32.mrf.mxu0
      %v586 = vadd.f32 0.0, %v585
      %v587 = vpop.f32.mrf.mxu0
      %588 = vdwg.mxu0
      %vm589 = vcmask 130048
      %v590 = vsel %vm589, %v463, 0.0
      %v591 = vsel %vm589, %v466, 0.0
      %v592 = vadd.f32 %v590, %v591
      %v593 = vsel %vm589, %v471, 0.0
      %v594 = vadd.f32 %v592, %v593
      %v595 = vsel %vm589, %v474, 0.0
      %v596 = vadd.f32 %v594, %v595
      %v597 = vsel %vm589, %v479, 0.0
      %v598 = vadd.f32 %v596, %v597
      %v599 = vsel %vm589, %v482, 0.0
      %v600 = vadd.f32 %v598, %v599
      %v601 = vsel %vm589, %v487, 0.0
      %v602 = vadd.f32 %v600, %v601
      %v603 = vsel %vm589, %v490, 0.0
      %v604 = vadd.f32 %v602, %v603
      %v605 = vsel %vm589, %v495, 0.0
      %v606 = vadd.f32 %v604, %v605
      %v607 = vsel %vm589, %v498, 0.0
      %v608 = vadd.f32 %v606, %v607
      %v609 = vsel %vm589, %v503, 0.0
      %v610 = vadd.f32 %v608, %v609
      %v611 = vsel %vm589, %v506, 0.0
      %v612 = vadd.f32 %v610, %v611
      %v613 = vsel %vm589, %v511, 0.0
      %v614 = vadd.f32 %v612, %v613
      %v615 = vsel %vm589, %v514, 0.0
      %v616 = vadd.f32 %v614, %v615
      %v617 = vsel %vm589, %v519, 0.0
      %v618 = vadd.f32 %v616, %v617
      %v619 = vsel %vm589, %v522, 0.0
      %v620 = vadd.f32 %v618, %v619
      %v621 = vrot.slane %v620, 4
      %v622 = vadd.f32 %v620, %v621
      %v623 = vrot.slane %v622, 2
      %v624 = vadd.f32 %v622, %v623
      %v625 = vrot.slane %v624, 1
      %v626 = vadd.f32 %v624, %v625
      %v627 = vsel %vm589, %v527, 0.0
      %v628 = vsel %vm589, %v530, 0.0
      %v629 = vadd.f32 %v627, %v628
      %v630 = vsel %vm589, %v535, 0.0
      %v631 = vadd.f32 %v629, %v630
      %v632 = vsel %vm589, %v538, 0.0
      %v633 = vadd.f32 %v631, %v632
      %v634 = vsel %vm589, %v543, 0.0
      %v635 = vadd.f32 %v633, %v634
      %v636 = vsel %vm589, %v546, 0.0
      %v637 = vadd.f32 %v635, %v636
      %v638 = vsel %vm589, %v551, 0.0
      %v639 = vadd.f32 %v637, %v638
      %v640 = vsel %vm589, %v554, 0.0
      %v641 = vadd.f32 %v639, %v640
      %v642 = vsel %vm589, %v559, 0.0
      %v643 = vadd.f32 %v641, %v642
      %v644 = vsel %vm589, %v562, 0.0
      %v645 = vadd.f32 %v643, %v644
      %v646 = vsel %vm589, %v567, 0.0
      %v647 = vadd.f32 %v645, %v646
      %v648 = vsel %vm589, %v570, 0.0
      %v649 = vadd.f32 %v647, %v648
      %v650 = vsel %vm589, %v575, 0.0
      %v651 = vadd.f32 %v649, %v650
      %v652 = vsel %vm589, %v578, 0.0
      %v653 = vadd.f32 %v651, %v652
      %v654 = vsel %vm589, %v583, 0.0
      %v655 = vadd.f32 %v653, %v654
      %v656 = vsel %vm589, %v586, 0.0
      %v657 = vadd.f32 %v655, %v656
      %v658 = vrot.slane %v657, 4
      %v659 = vadd.f32 %v657, %v658
      %v660 = vrot.slane %v659, 2
      %v661 = vadd.f32 %v659, %v660
      %v662 = vrot.slane %v661, 1
      %v663 = vadd.f32 %v661, %v662
      %v664 = vrcp.pop 128.0
      %v665 = vmul.f32 %v626, %v664
      %v666 = vmul.f32 %v663, %v664
      %v667 = vmul.f32 %v463, %v463
      %v668 = vmul.f32 %v466, %v466
      %v669 = vmul.f32 %v471, %v471
      %v670 = vmul.f32 %v474, %v474
      %v671 = vmul.f32 %v479, %v479
      %v672 = vmul.f32 %v482, %v482
      %v673 = vmul.f32 %v487, %v487
      %v674 = vmul.f32 %v490, %v490
      %v675 = vmul.f32 %v495, %v495
      %v676 = vmul.f32 %v498, %v498
      %v677 = vmul.f32 %v503, %v503
      %v678 = vmul.f32 %v506, %v506
      %v679 = vmul.f32 %v511, %v511
      %v680 = vmul.f32 %v514, %v514
      %v681 = vmul.f32 %v519, %v519
      %v682 = vmul.f32 %v522, %v522
      %v683 = vmul.f32 %v527, %v527
      %v684 = vmul.f32 %v530, %v530
      %v685 = vmul.f32 %v535, %v535
      %v686 = vmul.f32 %v538, %v538
      %v687 = vmul.f32 %v543, %v543
      %v688 = vmul.f32 %v546, %v546
      %v689 = vmul.f32 %v551, %v551
      %v690 = vmul.f32 %v554, %v554
      %v691 = vmul.f32 %v559, %v559
      %v692 = vmul.f32 %v562, %v562
      %v693 = vmul.f32 %v567, %v567
      %v694 = vmul.f32 %v570, %v570
      %v695 = vmul.f32 %v575, %v575
      %v696 = vmul.f32 %v578, %v578
      %v697 = vmul.f32 %v583, %v583
      %v698 = vmul.f32 %v586, %v586
      %v699 = vsel %vm589, %v667, 0.0
      %v700 = vsel %vm589, %v668, 0.0
      %v701 = vadd.f32 %v699, %v700
      %v702 = vsel %vm589, %v669, 0.0
      %v703 = vadd.f32 %v701, %v702
      %v704 = vsel %vm589, %v670, 0.0
      %v705 = vadd.f32 %v703, %v704
      %v706 = vsel %vm589, %v671, 0.0
      %v707 = vadd.f32 %v705, %v706
      %v708 = vsel %vm589, %v672, 0.0
      %v709 = vadd.f32 %v707, %v708
      %v710 = vsel %vm589, %v673, 0.0
      %v711 = vadd.f32 %v709, %v710
      %v712 = vsel %vm589, %v674, 0.0
      %v713 = vadd.f32 %v711, %v712
      %v714 = vsel %vm589, %v675, 0.0
      %v715 = vadd.f32 %v713, %v714
      %v716 = vsel %vm589, %v676, 0.0
      %v717 = vadd.f32 %v715, %v716
      %v718 = vsel %vm589, %v677, 0.0
      %v719 = vadd.f32 %v717, %v718
      %v720 = vsel %vm589, %v678, 0.0
      %v721 = vadd.f32 %v719, %v720
      %v722 = vsel %vm589, %v679, 0.0
      %v723 = vadd.f32 %v721, %v722
      %v724 = vsel %vm589, %v680, 0.0
      %v725 = vadd.f32 %v723, %v724
      %v726 = vsel %vm589, %v681, 0.0
      %v727 = vadd.f32 %v725, %v726
      %v728 = vsel %vm589, %v682, 0.0
      %v729 = vadd.f32 %v727, %v728
      %v730 = vrot.slane %v729, 4
      %v731 = vadd.f32 %v729, %v730
      %v732 = vrot.slane %v731, 2
      %v733 = vadd.f32 %v731, %v732
      %v734 = vrot.slane %v733, 1
      %v735 = vadd.f32 %v733, %v734
      %v736 = vsel %vm589, %v683, 0.0
      %v737 = vsel %vm589, %v684, 0.0
      %v738 = vadd.f32 %v736, %v737
      %v739 = vsel %vm589, %v685, 0.0
      %v740 = vadd.f32 %v738, %v739
      %v741 = vsel %vm589, %v686, 0.0
      %v742 = vadd.f32 %v740, %v741
      %v743 = vsel %vm589, %v687, 0.0
      %v744 = vadd.f32 %v742, %v743
      %v745 = vsel %vm589, %v688, 0.0
      %v746 = vadd.f32 %v744, %v745
      %v747 = vsel %vm589, %v689, 0.0
      %v748 = vadd.f32 %v746, %v747
      %v749 = vsel %vm589, %v690, 0.0
      %v750 = vadd.f32 %v748, %v749
      %v751 = vsel %vm589, %v691, 0.0
      %v752 = vadd.f32 %v750, %v751
      %v753 = vsel %vm589, %v692, 0.0
      %v754 = vadd.f32 %v752, %v753
      %v755 = vsel %vm589, %v693, 0.0
      %v756 = vadd.f32 %v754, %v755
      %v757 = vsel %vm589, %v694, 0.0
      %v758 = vadd.f32 %v756, %v757
      %v759 = vsel %vm589, %v695, 0.0
      %v760 = vadd.f32 %v758, %v759
      %v761 = vsel %vm589, %v696, 0.0
      %v762 = vadd.f32 %v760, %v761
      %v763 = vsel %vm589, %v697, 0.0
      %v764 = vadd.f32 %v762, %v763
      %v765 = vsel %vm589, %v698, 0.0
      %v766 = vadd.f32 %v764, %v765
      %v767 = vrot.slane %v766, 4
      %v768 = vadd.f32 %v766, %v767
      %v769 = vrot.slane %v768, 2
      %v770 = vadd.f32 %v768, %v769
      %v771 = vrot.slane %v770, 1
      %v772 = vadd.f32 %v770, %v771
      %v773 = vmul.f32 %v735, %v664
      %v774 = vmul.f32 %v772, %v664
      %v775 = vmul.f32 %v665, %v665
      %v776 = vmul.f32 %v666, %v666
      %v777 = vsub.f32 %v773, %v775
      %v778 = vsub.f32 %v774, %v776
      %v779 = vsub.f32 %v463, %v665
      %v780 = vsub.f32 %v466, %v665
      %v781 = vsub.f32 %v471, %v665
      %v782 = vsub.f32 %v474, %v665
      %v783 = vsub.f32 %v479, %v665
      %v784 = vsub.f32 %v482, %v665
      %v785 = vsub.f32 %v487, %v665
      %v786 = vsub.f32 %v490, %v665
      %v787 = vsub.f32 %v495, %v665
      %v788 = vsub.f32 %v498, %v665
      %v789 = vsub.f32 %v503, %v665
      %v790 = vsub.f32 %v506, %v665
      %v791 = vsub.f32 %v511, %v665
      %v792 = vsub.f32 %v514, %v665
      %v793 = vsub.f32 %v519, %v665
      %v794 = vsub.f32 %v522, %v665
      %v795 = vsub.f32 %v527, %v666
      %v796 = vsub.f32 %v530, %v666
      %v797 = vsub.f32 %v535, %v666
      %v798 = vsub.f32 %v538, %v666
      %v799 = vsub.f32 %v543, %v666
      %v800 = vsub.f32 %v546, %v666
      %v801 = vsub.f32 %v551, %v666
      %v802 = vsub.f32 %v554, %v666
      %v803 = vsub.f32 %v559, %v666
      %v804 = vsub.f32 %v562, %v666
      %v805 = vsub.f32 %v567, %v666
      %v806 = vsub.f32 %v570, %v666
      %v807 = vsub.f32 %v575, %v666
      %v808 = vsub.f32 %v578, %v666
      %v809 = vsub.f32 %v583, %v666
      %v810 = vsub.f32 %v586, %v666
      %v811 = vadd.f32 %v777, 1e-05
      %v812 = vadd.f32 %v778, 1e-05
      %v813 = vrsqrt.pop %v811
      %v814 = vrsqrt.pop %v812
      %v815 = vmul.f32 %v779, %v813
      %v816 = vmul.f32 %v780, %v813
      %v817 = vmul.f32 %v781, %v813
      %v818 = vmul.f32 %v782, %v813
      %v819 = vmul.f32 %v783, %v813
      %v820 = vmul.f32 %v784, %v813
      %v821 = vmul.f32 %v785, %v813
      %v822 = vmul.f32 %v786, %v813
      %v823 = vmul.f32 %v787, %v813
      %v824 = vmul.f32 %v788, %v813
      %v825 = vmul.f32 %v789, %v813
      %v826 = vmul.f32 %v790, %v813
      %v827 = vmul.f32 %v791, %v813
      %v828 = vmul.f32 %v792, %v813
      %v829 = vmul.f32 %v793, %v813
      %v830 = vmul.f32 %v794, %v813
      %v831 = vmul.f32 %v795, %v814
      %v832 = vmul.f32 %v796, %v814
      %v833 = vmul.f32 %v797, %v814
      %v834 = vmul.f32 %v798, %v814
      %v835 = vmul.f32 %v799, %v814
      %v836 = vmul.f32 %v800, %v814
      %v837 = vmul.f32 %v801, %v814
      %v838 = vmul.f32 %v802, %v814
      %v839 = vmul.f32 %v803, %v814
      %v840 = vmul.f32 %v804, %v814
      %v841 = vmul.f32 %v805, %v814
      %v842 = vmul.f32 %v806, %v814
      %v843 = vmul.f32 %v807, %v814
      %v844 = vmul.f32 %v808, %v814
      %v845 = vmul.f32 %v809, %v814
      %v846 = vmul.f32 %v810, %v814
      %v847 = vld [vmem:[%s3] sm:$0x1]
      %v849 = vlaneseq
      %v850 = vshrl.u32 %v849, 7
      %v851 = vsub.s32 0, %v850
      %v852 = vrot.slane %v847, %v851
      %v854 = vmul.f32 %v815, %v852
      %v855 = vmul.f32 %v816, %v852
      %v856 = vmul.f32 %v817, %v852
      %v857 = vmul.f32 %v818, %v852
      %v858 = vmul.f32 %v819, %v852
      %v859 = vmul.f32 %v820, %v852
      %v860 = vmul.f32 %v821, %v852
      %v861 = vmul.f32 %v822, %v852
      %v862 = vmul.f32 %v823, %v852
      %v863 = vmul.f32 %v824, %v852
      %v864 = vmul.f32 %v825, %v852
      %v865 = vmul.f32 %v826, %v852
      %v866 = vmul.f32 %v827, %v852
      %v867 = vmul.f32 %v828, %v852
      %v868 = vmul.f32 %v829, %v852
      %v869 = vmul.f32 %v830, %v852
      %v870 = vmul.f32 %v831, %v852
      %v871 = vmul.f32 %v832, %v852
      %v872 = vmul.f32 %v833, %v852
      %v873 = vmul.f32 %v834, %v852
      %v874 = vmul.f32 %v835, %v852
      %v875 = vmul.f32 %v836, %v852
      %v876 = vmul.f32 %v837, %v852
      %v877 = vmul.f32 %v838, %v852
      %v878 = vmul.f32 %v839, %v852
      %v879 = vmul.f32 %v840, %v852
      %v880 = vmul.f32 %v841, %v852
      %v881 = vmul.f32 %v842, %v852
      %v882 = vmul.f32 %v843, %v852
      %v883 = vmul.f32 %v844, %v852
      %v884 = vmul.f32 %v845, %v852
      %v885 = vmul.f32 %v846, %v852
      %v886 = vld [vmem:[%s4] sm:$0x1]
      %v888 = vlaneseq
      %v889 = vshrl.u32 %v888, 7
      %v890 = vsub.s32 0, %v889
      %v891 = vrot.slane %v886, %v890
      %v893 = vadd.f32 %v854, %v891
      %v894 = vadd.f32 %v855, %v891
      %v895 = vadd.f32 %v856, %v891
      %v896 = vadd.f32 %v857, %v891
      %v897 = vadd.f32 %v858, %v891
      %v898 = vadd.f32 %v859, %v891
      %v899 = vadd.f32 %v860, %v891
      %v900 = vadd.f32 %v861, %v891
      %v901 = vadd.f32 %v862, %v891
      %v902 = vadd.f32 %v863, %v891
      %v903 = vadd.f32 %v864, %v891
      %v904 = vadd.f32 %v865, %v891
      %v905 = vadd.f32 %v866, %v891
      %v906 = vadd.f32 %v867, %v891
      %v907 = vadd.f32 %v868, %v891
      %v908 = vadd.f32 %v869, %v891
      %v909 = vadd.f32 %v870, %v891
      %v910 = vadd.f32 %v871, %v891
      %v911 = vadd.f32 %v872, %v891
      %v912 = vadd.f32 %v873, %v891
      %v913 = vadd.f32 %v874, %v891
      %v914 = vadd.f32 %v875, %v891
      %v915 = vadd.f32 %v876, %v891
      %v916 = vadd.f32 %v877, %v891
      %v917 = vadd.f32 %v878, %v891
      %v918 = vadd.f32 %v879, %v891
      %v919 = vadd.f32 %v880, %v891
      %v920 = vadd.f32 %v881, %v891
      %v921 = vadd.f32 %v882, %v891
      %v922 = vadd.f32 %v883, %v891
      %v923 = vadd.f32 %v884, %v891
      %v924 = vadd.f32 %v885, %v891
      %v925 = vld [vmem:[%s242] sm:$0xff]
      %v926 = vld [vmem:[%s242 + $0x8] sm:$0xff]
      %v927 = vld [vmem:[%s242 + $0x10] sm:$0xff]
      %v928 = vld [vmem:[%s242 + $0x18] sm:$0xff]
      %v929 = vld [vmem:[%s242 + $0x20] sm:$0xff]
      %v930 = vld [vmem:[%s242 + $0x28] sm:$0xff]
      %v931 = vld [vmem:[%s242 + $0x30] sm:$0xff]
      %v932 = vld [vmem:[%s242 + $0x38] sm:$0xff]
      %v933 = vld [vmem:[%s242 + $0x40] sm:$0xff]
      %v934 = vld [vmem:[%s242 + $0x48] sm:$0xff]
      %v935 = vld [vmem:[%s242 + $0x50] sm:$0xff]
      %v936 = vld [vmem:[%s242 + $0x58] sm:$0xff]
      %v937 = vld [vmem:[%s242 + $0x60] sm:$0xff]
      %v938 = vld [vmem:[%s242 + $0x68] sm:$0xff]
      %v939 = vld [vmem:[%s242 + $0x70] sm:$0xff]
      %v940 = vld [vmem:[%s242 + $0x78] sm:$0xff]
      %v941 = vld [vmem:[%s242 + $0x80] sm:$0xff]
      %v942 = vld [vmem:[%s242 + $0x88] sm:$0xff]
      %v943 = vld [vmem:[%s242 + $0x90] sm:$0xff]
      %v944 = vld [vmem:[%s242 + $0x98] sm:$0xff]
      %v945 = vld [vmem:[%s242 + $0xa0] sm:$0xff]
      %v946 = vld [vmem:[%s242 + $0xa8] sm:$0xff]
      %v947 = vld [vmem:[%s242 + $0xb0] sm:$0xff]
      %v948 = vld [vmem:[%s242 + $0xb8] sm:$0xff]
      %v949 = vld [vmem:[%s242 + $0xc0] sm:$0xff]
      %v950 = vld [vmem:[%s242 + $0xc8] sm:$0xff]
      %v951 = vld [vmem:[%s242 + $0xd0] sm:$0xff]
      %v952 = vld [vmem:[%s242 + $0xd8] sm:$0xff]
      %v953 = vld [vmem:[%s242 + $0xe0] sm:$0xff]
      %v954 = vld [vmem:[%s242 + $0xe8] sm:$0xff]
      %v955 = vld [vmem:[%s242 + $0xf0] sm:$0xff]
      %v956 = vld [vmem:[%s242 + $0xf8] sm:$0xff]
      %v957 = vmul.f32 %v893, %v925
      %v958 = vmul.f32 %v894, %v926
      %v959 = vmul.f32 %v895, %v927
      %v960 = vmul.f32 %v896, %v928
      %v961 = vmul.f32 %v897, %v929
      %v962 = vmul.f32 %v898, %v930
      %v963 = vmul.f32 %v899, %v931
      %v964 = vmul.f32 %v900, %v932
      %v965 = vmul.f32 %v901, %v933
      %v966 = vmul.f32 %v902, %v934
      %v967 = vmul.f32 %v903, %v935
      %v968 = vmul.f32 %v904, %v936
      %v969 = vmul.f32 %v905, %v937
      %v970 = vmul.f32 %v906, %v938
      %v971 = vmul.f32 %v907, %v939
      %v972 = vmul.f32 %v908, %v940
      %v973 = vmul.f32 %v909, %v941
      %v974 = vmul.f32 %v910, %v942
      %v975 = vmul.f32 %v911, %v943
      %v976 = vmul.f32 %v912, %v944
      %v977 = vmul.f32 %v913, %v945
      %v978 = vmul.f32 %v914, %v946
      %v979 = vmul.f32 %v915, %v947
      %v980 = vmul.f32 %v916, %v948
      %v981 = vmul.f32 %v917, %v949
      %v982 = vmul.f32 %v918, %v950
      %v983 = vmul.f32 %v919, %v951
      %v984 = vmul.f32 %v920, %v952
      %v985 = vmul.f32 %v921, %v953
      %v986 = vmul.f32 %v922, %v954
      %v987 = vmul.f32 %v923, %v955
      %v988 = vmul.f32 %v924, %v956
      %v989 = vsel %vm589, %v957, -inf
      %990 = vmax.xlane.f32.xlu0 %v989
      %v991 = vpop.xlane.xlu0 %990
      %v992 = vsel %vm589, %v958, -inf
      %993 = vmax.xlane.f32.xlu0 %v992
      %v994 = vpop.xlane.xlu0 %993
      %v995 = vsel %vm589, %v959, -inf
      %996 = vmax.xlane.f32.xlu0 %v995
      %v997 = vpop.xlane.xlu0 %996
      %v998 = vsel %vm589, %v960, -inf
      %999 = vmax.xlane.f32.xlu0 %v998
      %v1000 = vpop.xlane.xlu0 %999
      %v1001 = vsel %vm589, %v961, -inf
      %1002 = vmax.xlane.f32.xlu0 %v1001
      %v1003 = vpop.xlane.xlu0 %1002
      %v1004 = vsel %vm589, %v962, -inf
      %1005 = vmax.xlane.f32.xlu0 %v1004
      %v1006 = vpop.xlane.xlu0 %1005
      %v1007 = vsel %vm589, %v963, -inf
      %1008 = vmax.xlane.f32.xlu0 %v1007
      %v1009 = vpop.xlane.xlu0 %1008
      %v1010 = vsel %vm589, %v964, -inf
      %1011 = vmax.xlane.f32.xlu0 %v1010
      %v1012 = vpop.xlane.xlu0 %1011
      %v1013 = vsel %vm589, %v965, -inf
      %1014 = vmax.xlane.f32.xlu0 %v1013
      %v1015 = vpop.xlane.xlu0 %1014
      %v1016 = vsel %vm589, %v966, -inf
      %1017 = vmax.xlane.f32.xlu0 %v1016
      %v1018 = vpop.xlane.xlu0 %1017
      %v1019 = vsel %vm589, %v967, -inf
      %1020 = vmax.xlane.f32.xlu0 %v1019
      %v1021 = vpop.xlane.xlu0 %1020
      %v1022 = vsel %vm589, %v968, -inf
      %1023 = vmax.xlane.f32.xlu0 %v1022
      %v1024 = vpop.xlane.xlu0 %1023
      %v1025 = vsel %vm589, %v969, -inf
      %1026 = vmax.xlane.f32.xlu0 %v1025
      %v1027 = vpop.xlane.xlu0 %1026
      %v1028 = vsel %vm589, %v970, -inf
      %1029 = vmax.xlane.f32.xlu0 %v1028
      %v1030 = vpop.xlane.xlu0 %1029
      %v1031 = vsel %vm589, %v971, -inf
      %1032 = vmax.xlane.f32.xlu0 %v1031
      %v1033 = vpop.xlane.xlu0 %1032
      %v1034 = vsel %vm589, %v972, -inf
      %1035 = vmax.xlane.f32.xlu0 %v1034
      %v1036 = vpop.xlane.xlu0 %1035
      %v1037 = vsel %vm589, %v973, -inf
      %1038 = vmax.xlane.f32.xlu0 %v1037
      %v1039 = vpop.xlane.xlu0 %1038
      %v1040 = vsel %vm589, %v974, -inf
      %1041 = vmax.xlane.f32.xlu0 %v1040
      %v1042 = vpop.xlane.xlu0 %1041
      %v1043 = vsel %vm589, %v975, -inf
      %1044 = vmax.xlane.f32.xlu0 %v1043
      %v1045 = vpop.xlane.xlu0 %1044
      %v1046 = vsel %vm589, %v976, -inf
      %1047 = vmax.xlane.f32.xlu0 %v1046
      %v1048 = vpop.xlane.xlu0 %1047
      %v1049 = vsel %vm589, %v977, -inf
      %1050 = vmax.xlane.f32.xlu0 %v1049
      %v1051 = vpop.xlane.xlu0 %1050
      %v1052 = vsel %vm589, %v978, -inf
      %1053 = vmax.xlane.f32.xlu0 %v1052
      %v1054 = vpop.xlane.xlu0 %1053
      %v1055 = vsel %vm589, %v979, -inf
      %1056 = vmax.xlane.f32.xlu0 %v1055
      %v1057 = vpop.xlane.xlu0 %1056
      %v1058 = vsel %vm589, %v980, -inf
      %1059 = vmax.xlane.f32.xlu0 %v1058
      %v1060 = vpop.xlane.xlu0 %1059
      %v1061 = vsel %vm589, %v981, -inf
      %1062 = vmax.xlane.f32.xlu0 %v1061
      %v1063 = vpop.xlane.xlu0 %1062
      %v1064 = vsel %vm589, %v982, -inf
      %1065 = vmax.xlane.f32.xlu0 %v1064
      %v1066 = vpop.xlane.xlu0 %1065
      %v1067 = vsel %vm589, %v983, -inf
      %1068 = vmax.xlane.f32.xlu0 %v1067
      %v1069 = vpop.xlane.xlu0 %1068
      %v1070 = vsel %vm589, %v984, -inf
      %1071 = vmax.xlane.f32.xlu0 %v1070
      %v1072 = vpop.xlane.xlu0 %1071
      %v1073 = vsel %vm589, %v985, -inf
      %1074 = vmax.xlane.f32.xlu0 %v1073
      %v1075 = vpop.xlane.xlu0 %1074
      %v1076 = vsel %vm589, %v986, -inf
      %1077 = vmax.xlane.f32.xlu0 %v1076
      %v1078 = vpop.xlane.xlu0 %1077
      %v1079 = vsel %vm589, %v987, -inf
      %1080 = vmax.xlane.f32.xlu0 %v1079
      %v1081 = vpop.xlane.xlu0 %1080
      %v1082 = vsel %vm589, %v988, -inf
      %1083 = vmax.xlane.f32.xlu0 %v1082
      %v1084 = vpop.xlane.xlu0 %1083
      %v1085 = vsub.f32 %v957, %v991
      %v1086 = vsub.f32 %v958, %v994
      %v1087 = vsub.f32 %v959, %v997
      %v1088 = vsub.f32 %v960, %v1000
      %v1089 = vsub.f32 %v961, %v1003
      %v1090 = vsub.f32 %v962, %v1006
      %v1091 = vsub.f32 %v963, %v1009
      %v1092 = vsub.f32 %v964, %v1012
      %v1093 = vsub.f32 %v965, %v1015
      %v1094 = vsub.f32 %v966, %v1018
      %v1095 = vsub.f32 %v967, %v1021
      %v1096 = vsub.f32 %v968, %v1024
      %v1097 = vsub.f32 %v969, %v1027
      %v1098 = vsub.f32 %v970, %v1030
      %v1099 = vsub.f32 %v971, %v1033
      %v1100 = vsub.f32 %v972, %v1036
      %v1101 = vsub.f32 %v973, %v1039
      %v1102 = vsub.f32 %v974, %v1042
      %v1103 = vsub.f32 %v975, %v1045
      %v1104 = vsub.f32 %v976, %v1048
      %v1105 = vsub.f32 %v977, %v1051
      %v1106 = vsub.f32 %v978, %v1054
      %v1107 = vsub.f32 %v979, %v1057
      %v1108 = vsub.f32 %v980, %v1060
      %v1109 = vsub.f32 %v981, %v1063
      %v1110 = vsub.f32 %v982, %v1066
      %v1111 = vsub.f32 %v983, %v1069
      %v1112 = vsub.f32 %v984, %v1072
      %v1113 = vsub.f32 %v985, %v1075
      %v1114 = vsub.f32 %v986, %v1078
      %v1115 = vsub.f32 %v987, %v1081
      %v1116 = vsub.f32 %v988, %v1084
      %v1117 = vsub.f32 %v1085, -0.5
      %v1118 = vsub.f32 %v1086, -0.5
      %v1119 = vsub.f32 %v1087, -0.5
      %v1120 = vsub.f32 %v1088, -0.5
      %v1121 = vsub.f32 %v1089, -0.5
      %v1122 = vsub.f32 %v1090, -0.5
      %v1123 = vsub.f32 %v1091, -0.5
      %v1124 = vsub.f32 %v1092, -0.5
      %v1125 = vsub.f32 %v1093, -0.5
      %v1126 = vsub.f32 %v1094, -0.5
      %v1127 = vsub.f32 %v1095, -0.5
      %v1128 = vsub.f32 %v1096, -0.5
      %v1129 = vsub.f32 %v1097, -0.5
      %v1130 = vsub.f32 %v1098, -0.5
      %v1131 = vsub.f32 %v1099, -0.5
      %v1132 = vsub.f32 %v1100, -0.5
      %v1133 = vsub.f32 %v1101, -0.5
      %v1134 = vsub.f32 %v1102, -0.5
      %v1135 = vsub.f32 %v1103, -0.5
      %v1136 = vsub.f32 %v1104, -0.5
      %v1137 = vsub.f32 %v1105, -0.5
      %v1138 = vsub.f32 %v1106, -0.5
      %v1139 = vsub.f32 %v1107, -0.5
      %v1140 = vsub.f32 %v1108, -0.5
      %v1141 = vsub.f32 %v1109, -0.5
      %v1142 = vsub.f32 %v1110, -0.5
      %v1143 = vsub.f32 %v1111, -0.5
      %v1144 = vsub.f32 %v1112, -0.5
      %v1145 = vsub.f32 %v1113, -0.5
      %v1146 = vsub.f32 %v1114, -0.5
      %v1147 = vsub.f32 %v1115, -0.5
      %v1148 = vsub.f32 %v1116, -0.5
      %v1149 = vmax.f32 %v1117, 0.0
      %v1150 = vmax.f32 %v1118, 0.0
      %v1151 = vmax.f32 %v1119, 0.0
      %v1152 = vmax.f32 %v1120, 0.0
      %v1153 = vmax.f32 %v1121, 0.0
      %v1154 = vmax.f32 %v1122, 0.0
      %v1155 = vmax.f32 %v1123, 0.0
      %v1156 = vmax.f32 %v1124, 0.0
      %v1157 = vmax.f32 %v1125, 0.0
      %v1158 = vmax.f32 %v1126, 0.0
      %v1159 = vmax.f32 %v1127, 0.0
      %v1160 = vmax.f32 %v1128, 0.0
      %v1161 = vmax.f32 %v1129, 0.0
      %v1162 = vmax.f32 %v1130, 0.0
      %v1163 = vmax.f32 %v1131, 0.0
      %v1164 = vmax.f32 %v1132, 0.0
      %v1165 = vmax.f32 %v1133, 0.0
      %v1166 = vmax.f32 %v1134, 0.0
      %v1167 = vmax.f32 %v1135, 0.0
      %v1168 = vmax.f32 %v1136, 0.0
      %v1169 = vmax.f32 %v1137, 0.0
      %v1170 = vmax.f32 %v1138, 0.0
      %v1171 = vmax.f32 %v1139, 0.0
      %v1172 = vmax.f32 %v1140, 0.0
      %v1173 = vmax.f32 %v1141, 0.0
      %v1174 = vmax.f32 %v1142, 0.0
      %v1175 = vmax.f32 %v1143, 0.0
      %v1176 = vmax.f32 %v1144, 0.0
      %v1177 = vmax.f32 %v1145, 0.0
      %v1178 = vmax.f32 %v1146, 0.0
      %v1179 = vmax.f32 %v1147, 0.0
      %v1180 = vmax.f32 %v1148, 0.0
      %v1181 = vsel %vm589, %v1149, 0.0
      %1182 = vadd.xlane.f32.xlu0 %v1181
      %v1183 = vpop.xlane.xlu0 %1182
      %v1184 = vsel %vm589, %v1150, 0.0
      %1185 = vadd.xlane.f32.xlu0 %v1184
      %v1186 = vpop.xlane.xlu0 %1185
      %v1187 = vsel %vm589, %v1151, 0.0
      %1188 = vadd.xlane.f32.xlu0 %v1187
      %v1189 = vpop.xlane.xlu0 %1188
      %v1190 = vsel %vm589, %v1152, 0.0
      %1191 = vadd.xlane.f32.xlu0 %v1190
      %v1192 = vpop.xlane.xlu0 %1191
      %v1193 = vsel %vm589, %v1153, 0.0
      %1194 = vadd.xlane.f32.xlu0 %v1193
      %v1195 = vpop.xlane.xlu0 %1194
      %v1196 = vsel %vm589, %v1154, 0.0
      %1197 = vadd.xlane.f32.xlu0 %v1196
      %v1198 = vpop.xlane.xlu0 %1197
      %v1199 = vsel %vm589, %v1155, 0.0
      %1200 = vadd.xlane.f32.xlu0 %v1199
      %v1201 = vpop.xlane.xlu0 %1200
      %v1202 = vsel %vm589, %v1156, 0.0
      %1203 = vadd.xlane.f32.xlu0 %v1202
      %v1204 = vpop.xlane.xlu0 %1203
      %v1205 = vsel %vm589, %v1157, 0.0
      %1206 = vadd.xlane.f32.xlu0 %v1205
      %v1207 = vpop.xlane.xlu0 %1206
      %v1208 = vsel %vm589, %v1158, 0.0
      %1209 = vadd.xlane.f32.xlu0 %v1208
      %v1210 = vpop.xlane.xlu0 %1209
      %v1211 = vsel %vm589, %v1159, 0.0
      %1212 = vadd.xlane.f32.xlu0 %v1211
      %v1213 = vpop.xlane.xlu0 %1212
      %v1214 = vsel %vm589, %v1160, 0.0
      %1215 = vadd.xlane.f32.xlu0 %v1214
      %v1216 = vpop.xlane.xlu0 %1215
      %v1217 = vsel %vm589, %v1161, 0.0
      %1218 = vadd.xlane.f32.xlu0 %v1217
      %v1219 = vpop.xlane.xlu0 %1218
      %v1220 = vsel %vm589, %v1162, 0.0
      %1221 = vadd.xlane.f32.xlu0 %v1220
      %v1222 = vpop.xlane.xlu0 %1221
      %v1223 = vsel %vm589, %v1163, 0.0
      %1224 = vadd.xlane.f32.xlu0 %v1223
      %v1225 = vpop.xlane.xlu0 %1224
      %v1226 = vsel %vm589, %v1164, 0.0
      %1227 = vadd.xlane.f32.xlu0 %v1226
      %v1228 = vpop.xlane.xlu0 %1227
      %v1229 = vsel %vm589, %v1165, 0.0
      %1230 = vadd.xlane.f32.xlu0 %v1229
      %v1231 = vpop.xlane.xlu0 %1230
      %v1232 = vsel %vm589, %v1166, 0.0
      %1233 = vadd.xlane.f32.xlu0 %v1232
      %v1234 = vpop.xlane.xlu0 %1233
      %v1235 = vsel %vm589, %v1167, 0.0
      %1236 = vadd.xlane.f32.xlu0 %v1235
      %v1237 = vpop.xlane.xlu0 %1236
      %v1238 = vsel %vm589, %v1168, 0.0
      %1239 = vadd.xlane.f32.xlu0 %v1238
      %v1240 = vpop.xlane.xlu0 %1239
      %v1241 = vsel %vm589, %v1169, 0.0
      %1242 = vadd.xlane.f32.xlu0 %v1241
      %v1243 = vpop.xlane.xlu0 %1242
      %v1244 = vsel %vm589, %v1170, 0.0
      %1245 = vadd.xlane.f32.xlu0 %v1244
      %v1246 = vpop.xlane.xlu0 %1245
      %v1247 = vsel %vm589, %v1171, 0.0
      %1248 = vadd.xlane.f32.xlu0 %v1247
      %v1249 = vpop.xlane.xlu0 %1248
      %v1250 = vsel %vm589, %v1172, 0.0
      %1251 = vadd.xlane.f32.xlu0 %v1250
      %v1252 = vpop.xlane.xlu0 %1251
      %v1253 = vsel %vm589, %v1173, 0.0
      %1254 = vadd.xlane.f32.xlu0 %v1253
      %v1255 = vpop.xlane.xlu0 %1254
      %v1256 = vsel %vm589, %v1174, 0.0
      %1257 = vadd.xlane.f32.xlu0 %v1256
      %v1258 = vpop.xlane.xlu0 %1257
      %v1259 = vsel %vm589, %v1175, 0.0
      %1260 = vadd.xlane.f32.xlu0 %v1259
      %v1261 = vpop.xlane.xlu0 %1260
      %v1262 = vsel %vm589, %v1176, 0.0
      %1263 = vadd.xlane.f32.xlu0 %v1262
      %v1264 = vpop.xlane.xlu0 %1263
      %v1265 = vsel %vm589, %v1177, 0.0
      %1266 = vadd.xlane.f32.xlu0 %v1265
      %v1267 = vpop.xlane.xlu0 %1266
      %v1268 = vsel %vm589, %v1178, 0.0
      %1269 = vadd.xlane.f32.xlu0 %v1268
      %v1270 = vpop.xlane.xlu0 %1269
      %v1271 = vsel %vm589, %v1179, 0.0
      %1272 = vadd.xlane.f32.xlu0 %v1271
      %v1273 = vpop.xlane.xlu0 %1272
      %v1274 = vsel %vm589, %v1180, 0.0
      %1275 = vadd.xlane.f32.xlu0 %v1274
      %v1276 = vpop.xlane.xlu0 %1275
      %vm1277 = vcmp.ge.f32.partialorder %v1183, 1.0
      %vm1278 = vcmp.ge.f32.partialorder %v1186, 1.0
      %vm1279 = vcmp.ge.f32.partialorder %v1189, 1.0
      %vm1280 = vcmp.ge.f32.partialorder %v1192, 1.0
      %vm1281 = vcmp.ge.f32.partialorder %v1195, 1.0
      %vm1282 = vcmp.ge.f32.partialorder %v1198, 1.0
      %vm1283 = vcmp.ge.f32.partialorder %v1201, 1.0
      %vm1284 = vcmp.ge.f32.partialorder %v1204, 1.0
      %vm1285 = vcmp.ge.f32.partialorder %v1207, 1.0
      %vm1286 = vcmp.ge.f32.partialorder %v1210, 1.0
      %vm1287 = vcmp.ge.f32.partialorder %v1213, 1.0
      %vm1288 = vcmp.ge.f32.partialorder %v1216, 1.0
      %vm1289 = vcmp.ge.f32.partialorder %v1219, 1.0
      %vm1290 = vcmp.ge.f32.partialorder %v1222, 1.0
      %vm1291 = vcmp.ge.f32.partialorder %v1225, 1.0
      %vm1292 = vcmp.ge.f32.partialorder %v1228, 1.0
      %vm1293 = vcmp.ge.f32.partialorder %v1231, 1.0
      %vm1294 = vcmp.ge.f32.partialorder %v1234, 1.0
      %vm1295 = vcmp.ge.f32.partialorder %v1237, 1.0
      %vm1296 = vcmp.ge.f32.partialorder %v1240, 1.0
      %vm1297 = vcmp.ge.f32.partialorder %v1243, 1.0
      %vm1298 = vcmp.ge.f32.partialorder %v1246, 1.0
      %vm1299 = vcmp.ge.f32.partialorder %v1249, 1.0
      %vm1300 = vcmp.ge.f32.partialorder %v1252, 1.0
      %vm1301 = vcmp.ge.f32.partialorder %v1255, 1.0
      %vm1302 = vcmp.ge.f32.partialorder %v1258, 1.0
      %vm1303 = vcmp.ge.f32.partialorder %v1261, 1.0
      %vm1304 = vcmp.ge.f32.partialorder %v1264, 1.0
      %vm1305 = vcmp.ge.f32.partialorder %v1267, 1.0
      %vm1306 = vcmp.ge.f32.partialorder %v1270, 1.0
      %vm1307 = vcmp.ge.f32.partialorder %v1273, 1.0
      %vm1308 = vcmp.ge.f32.partialorder %v1276, 1.0
      %v1309 = vsel %vm1277, -0.5, -1.0
      %v1310 = vsel %vm1278, -0.5, -1.0
      %v1311 = vsel %vm1279, -0.5, -1.0
      %v1312 = vsel %vm1280, -0.5, -1.0
      %v1313 = vsel %vm1281, -0.5, -1.0
      %v1314 = vsel %vm1282, -0.5, -1.0
      %v1315 = vsel %vm1283, -0.5, -1.0
      %v1316 = vsel %vm1284, -0.5, -1.0
      %v1317 = vsel %vm1285, -0.5, -1.0
      %v1318 = vsel %vm1286, -0.5, -1.0
      %v1319 = vsel %vm1287, -0.5, -1.0
      %v1320 = vsel %vm1288, -0.5, -1.0
      %v1321 = vsel %vm1289, -0.5, -1.0
      %v1322 = vsel %vm1290, -0.5, -1.0
      %v1323 = vsel %vm1291, -0.5, -1.0
      %v1324 = vsel %vm1292, -0.5, -1.0
      %v1325 = vsel %vm1293, -0.5, -1.0
      %v1326 = vsel %vm1294, -0.5, -1.0
      %v1327 = vsel %vm1295, -0.5, -1.0
      %v1328 = vsel %vm1296, -0.5, -1.0
      %v1329 = vsel %vm1297, -0.5, -1.0
      %v1330 = vsel %vm1298, -0.5, -1.0
      %v1331 = vsel %vm1299, -0.5, -1.0
      %v1332 = vsel %vm1300, -0.5, -1.0
      %v1333 = vsel %vm1301, -0.5, -1.0
      %v1334 = vsel %vm1302, -0.5, -1.0
      %v1335 = vsel %vm1303, -0.5, -1.0
      %v1336 = vsel %vm1304, -0.5, -1.0
      %v1337 = vsel %vm1305, -0.5, -1.0
      %v1338 = vsel %vm1306, -0.5, -1.0
      %v1339 = vsel %vm1307, -0.5, -1.0
      %v1340 = vsel %vm1308, -0.5, -1.0
      %v1341 = vsel %vm1277, 0.0, -0.5
      %v1342 = vsel %vm1278, 0.0, -0.5
      %v1343 = vsel %vm1279, 0.0, -0.5
      %v1344 = vsel %vm1280, 0.0, -0.5
      %v1345 = vsel %vm1281, 0.0, -0.5
      %v1346 = vsel %vm1282, 0.0, -0.5
      %v1347 = vsel %vm1283, 0.0, -0.5
      %v1348 = vsel %vm1284, 0.0, -0.5
      %v1349 = vsel %vm1285, 0.0, -0.5
      %v1350 = vsel %vm1286, 0.0, -0.5
      %v1351 = vsel %vm1287, 0.0, -0.5
      %v1352 = vsel %vm1288, 0.0, -0.5
      %v1353 = vsel %vm1289, 0.0, -0.5
      %v1354 = vsel %vm1290, 0.0, -0.5
      %v1355 = vsel %vm1291, 0.0, -0.5
      %v1356 = vsel %vm1292, 0.0, -0.5
      %v1357 = vsel %vm1293, 0.0, -0.5
      %v1358 = vsel %vm1294, 0.0, -0.5
      %v1359 = vsel %vm1295, 0.0, -0.5
      %v1360 = vsel %vm1296, 0.0, -0.5
      %v1361 = vsel %vm1297, 0.0, -0.5
      %v1362 = vsel %vm1298, 0.0, -0.5
      %v1363 = vsel %vm1299, 0.0, -0.5
      %v1364 = vsel %vm1300, 0.0, -0.5
      %v1365 = vsel %vm1301, 0.0, -0.5
      %v1366 = vsel %vm1302, 0.0, -0.5
      %v1367 = vsel %vm1303, 0.0, -0.5
      %v1368 = vsel %vm1304, 0.0, -0.5
      %v1369 = vsel %vm1305, 0.0, -0.5
      %v1370 = vsel %vm1306, 0.0, -0.5
      %v1371 = vsel %vm1307, 0.0, -0.5
      %v1372 = vsel %vm1308, 0.0, -0.5
      %v1373 = vadd.f32 %v1309, %v1341
      %v1374 = vadd.f32 %v1310, %v1342
      %v1375 = vadd.f32 %v1311, %v1343
      %v1376 = vadd.f32 %v1312, %v1344
      %v1377 = vadd.f32 %v1313, %v1345
      %v1378 = vadd.f32 %v1314, %v1346
      %v1379 = vadd.f32 %v1315, %v1347
      %v1380 = vadd.f32 %v1316, %v1348
      %v1381 = vadd.f32 %v1317, %v1349
      %v1382 = vadd.f32 %v1318, %v1350
      %v1383 = vadd.f32 %v1319, %v1351
      %v1384 = vadd.f32 %v1320, %v1352
      %v1385 = vadd.f32 %v1321, %v1353
      %v1386 = vadd.f32 %v1322, %v1354
      %v1387 = vadd.f32 %v1323, %v1355
      %v1388 = vadd.f32 %v1324, %v1356
      %v1389 = vadd.f32 %v1325, %v1357
      %v1390 = vadd.f32 %v1326, %v1358
      %v1391 = vadd.f32 %v1327, %v1359
      %v1392 = vadd.f32 %v1328, %v1360
      %v1393 = vadd.f32 %v1329, %v1361
      %v1394 = vadd.f32 %v1330, %v1362
      %v1395 = vadd.f32 %v1331, %v1363
      %v1396 = vadd.f32 %v1332, %v1364
      %v1397 = vadd.f32 %v1333, %v1365
      %v1398 = vadd.f32 %v1334, %v1366
      %v1399 = vadd.f32 %v1335, %v1367
      %v1400 = vadd.f32 %v1336, %v1368
      %v1401 = vadd.f32 %v1337, %v1369
      %v1402 = vadd.f32 %v1338, %v1370
      %v1403 = vadd.f32 %v1339, %v1371
      %v1404 = vadd.f32 %v1340, %v1372
      %v1405 = vmul.f32 %v1373, 0.5
      %v1406 = vmul.f32 %v1374, 0.5
      %v1407 = vmul.f32 %v1375, 0.5
      %v1408 = vmul.f32 %v1376, 0.5
      %v1409 = vmul.f32 %v1377, 0.5
      %v1410 = vmul.f32 %v1378, 0.5
      %v1411 = vmul.f32 %v1379, 0.5
      %v1412 = vmul.f32 %v1380, 0.5
      %v1413 = vmul.f32 %v1381, 0.5
      %v1414 = vmul.f32 %v1382, 0.5
      %v1415 = vmul.f32 %v1383, 0.5
      %v1416 = vmul.f32 %v1384, 0.5
      %v1417 = vmul.f32 %v1385, 0.5
      %v1418 = vmul.f32 %v1386, 0.5
      %v1419 = vmul.f32 %v1387, 0.5
      %v1420 = vmul.f32 %v1388, 0.5
      %v1421 = vmul.f32 %v1389, 0.5
      %v1422 = vmul.f32 %v1390, 0.5
      %v1423 = vmul.f32 %v1391, 0.5
      %v1424 = vmul.f32 %v1392, 0.5
      %v1425 = vmul.f32 %v1393, 0.5
      %v1426 = vmul.f32 %v1394, 0.5
      %v1427 = vmul.f32 %v1395, 0.5
      %v1428 = vmul.f32 %v1396, 0.5
      %v1429 = vmul.f32 %v1397, 0.5
      %v1430 = vmul.f32 %v1398, 0.5
      %v1431 = vmul.f32 %v1399, 0.5
      %v1432 = vmul.f32 %v1400, 0.5
      %v1433 = vmul.f32 %v1401, 0.5
      %v1434 = vmul.f32 %v1402, 0.5
      %v1435 = vmul.f32 %v1403, 0.5
      %v1436 = vmul.f32 %v1404, 0.5
      %v1437 = vsub.f32 %v1085, %v1405
      %v1438 = vsub.f32 %v1086, %v1406
      %v1439 = vsub.f32 %v1087, %v1407
      %v1440 = vsub.f32 %v1088, %v1408
      %v1441 = vsub.f32 %v1089, %v1409
      %v1442 = vsub.f32 %v1090, %v1410
      %v1443 = vsub.f32 %v1091, %v1411
      %v1444 = vsub.f32 %v1092, %v1412
      %v1445 = vsub.f32 %v1093, %v1413
      %v1446 = vsub.f32 %v1094, %v1414
      %v1447 = vsub.f32 %v1095, %v1415
      %v1448 = vsub.f32 %v1096, %v1416
      %v1449 = vsub.f32 %v1097, %v1417
      %v1450 = vsub.f32 %v1098, %v1418
      %v1451 = vsub.f32 %v1099, %v1419
      %v1452 = vsub.f32 %v1100, %v1420
      %v1453 = vsub.f32 %v1101, %v1421
      %v1454 = vsub.f32 %v1102, %v1422
      %v1455 = vsub.f32 %v1103, %v1423
      %v1456 = vsub.f32 %v1104, %v1424
      %v1457 = vsub.f32 %v1105, %v1425
      %v1458 = vsub.f32 %v1106, %v1426
      %v1459 = vsub.f32 %v1107, %v1427
      %v1460 = vsub.f32 %v1108, %v1428
      %v1461 = vsub.f32 %v1109, %v1429
      %v1462 = vsub.f32 %v1110, %v1430
      %v1463 = vsub.f32 %v1111, %v1431
      %v1464 = vsub.f32 %v1112, %v1432
      %v1465 = vsub.f32 %v1113, %v1433
      %v1466 = vsub.f32 %v1114, %v1434
      %v1467 = vsub.f32 %v1115, %v1435
      %v1468 = vsub.f32 %v1116, %v1436
      %v1469 = vmax.f32 %v1437, 0.0
      %v1470 = vmax.f32 %v1438, 0.0
      %v1471 = vmax.f32 %v1439, 0.0
      %v1472 = vmax.f32 %v1440, 0.0
      %v1473 = vmax.f32 %v1441, 0.0
      %v1474 = vmax.f32 %v1442, 0.0
      %v1475 = vmax.f32 %v1443, 0.0
      %v1476 = vmax.f32 %v1444, 0.0
      %v1477 = vmax.f32 %v1445, 0.0
      %v1478 = vmax.f32 %v1446, 0.0
      %v1479 = vmax.f32 %v1447, 0.0
      %v1480 = vmax.f32 %v1448, 0.0
      %v1481 = vmax.f32 %v1449, 0.0
      %v1482 = vmax.f32 %v1450, 0.0
      %v1483 = vmax.f32 %v1451, 0.0
      %v1484 = vmax.f32 %v1452, 0.0
      %v1485 = vmax.f32 %v1453, 0.0
      %v1486 = vmax.f32 %v1454, 0.0
      %v1487 = vmax.f32 %v1455, 0.0
      %v1488 = vmax.f32 %v1456, 0.0
      %v1489 = vmax.f32 %v1457, 0.0
      %v1490 = vmax.f32 %v1458, 0.0
      %v1491 = vmax.f32 %v1459, 0.0
      %v1492 = vmax.f32 %v1460, 0.0
      %v1493 = vmax.f32 %v1461, 0.0
      %v1494 = vmax.f32 %v1462, 0.0
      %v1495 = vmax.f32 %v1463, 0.0
      %v1496 = vmax.f32 %v1464, 0.0
      %v1497 = vmax.f32 %v1465, 0.0
      %v1498 = vmax.f32 %v1466, 0.0
      %v1499 = vmax.f32 %v1467, 0.0
      %v1500 = vmax.f32 %v1468, 0.0
      %v1501 = vsel %vm589, %v1469, 0.0
      %1502 = vadd.xlane.f32.xlu0 %v1501
      %v1503 = vpop.xlane.xlu0 %1502
      %v1504 = vsel %vm589, %v1470, 0.0
      %1505 = vadd.xlane.f32.xlu0 %v1504
      %v1506 = vpop.xlane.xlu0 %1505
      %v1507 = vsel %vm589, %v1471, 0.0
      %1508 = vadd.xlane.f32.xlu0 %v1507
      %v1509 = vpop.xlane.xlu0 %1508
      %v1510 = vsel %vm589, %v1472, 0.0
      %1511 = vadd.xlane.f32.xlu0 %v1510
      %v1512 = vpop.xlane.xlu0 %1511
      %v1513 = vsel %vm589, %v1473, 0.0
      %1514 = vadd.xlane.f32.xlu0 %v1513
      %v1515 = vpop.xlane.xlu0 %1514
      %v1516 = vsel %vm589, %v1474, 0.0
      %1517 = vadd.xlane.f32.xlu0 %v1516
      %v1518 = vpop.xlane.xlu0 %1517
      %v1519 = vsel %vm589, %v1475, 0.0
      %1520 = vadd.xlane.f32.xlu0 %v1519
      %v1521 = vpop.xlane.xlu0 %1520
      %v1522 = vsel %vm589, %v1476, 0.0
      %1523 = vadd.xlane.f32.xlu0 %v1522
      %v1524 = vpop.xlane.xlu0 %1523
      %v1525 = vsel %vm589, %v1477, 0.0
      %1526 = vadd.xlane.f32.xlu0 %v1525
      %v1527 = vpop.xlane.xlu0 %1526
      %v1528 = vsel %vm589, %v1478, 0.0
      %1529 = vadd.xlane.f32.xlu0 %v1528
      %v1530 = vpop.xlane.xlu0 %1529
      %v1531 = vsel %vm589, %v1479, 0.0
      %1532 = vadd.xlane.f32.xlu0 %v1531
      %v1533 = vpop.xlane.xlu0 %1532
      %v1534 = vsel %vm589, %v1480, 0.0
      %1535 = vadd.xlane.f32.xlu0 %v1534
      %v1536 = vpop.xlane.xlu0 %1535
      %v1537 = vsel %vm589, %v1481, 0.0
      %1538 = vadd.xlane.f32.xlu0 %v1537
      %v1539 = vpop.xlane.xlu0 %1538
      %v1540 = vsel %vm589, %v1482, 0.0
      %1541 = vadd.xlane.f32.xlu0 %v1540
      %v1542 = vpop.xlane.xlu0 %1541
      %v1543 = vsel %vm589, %v1483, 0.0
      %1544 = vadd.xlane.f32.xlu0 %v1543
      %v1545 = vpop.xlane.xlu0 %1544
      %v1546 = vsel %vm589, %v1484, 0.0
      %1547 = vadd.xlane.f32.xlu0 %v1546
      %v1548 = vpop.xlane.xlu0 %1547
      %v1549 = vsel %vm589, %v1485, 0.0
      %1550 = vadd.xlane.f32.xlu0 %v1549
      %v1551 = vpop.xlane.xlu0 %1550
      %v1552 = vsel %vm589, %v1486, 0.0
      %1553 = vadd.xlane.f32.xlu0 %v1552
      %v1554 = vpop.xlane.xlu0 %1553
      %v1555 = vsel %vm589, %v1487, 0.0
      %1556 = vadd.xlane.f32.xlu0 %v1555
      %v1557 = vpop.xlane.xlu0 %1556
      %v1558 = vsel %vm589, %v1488, 0.0
      %1559 = vadd.xlane.f32.xlu0 %v1558
      %v1560 = vpop.xlane.xlu0 %1559
      %v1561 = vsel %vm589, %v1489, 0.0
      %1562 = vadd.xlane.f32.xlu0 %v1561
      %v1563 = vpop.xlane.xlu0 %1562
      %v1564 = vsel %vm589, %v1490, 0.0
      %1565 = vadd.xlane.f32.xlu0 %v1564
      %v1566 = vpop.xlane.xlu0 %1565
      %v1567 = vsel %vm589, %v1491, 0.0
      %1568 = vadd.xlane.f32.xlu0 %v1567
      %v1569 = vpop.xlane.xlu0 %1568
      %v1570 = vsel %vm589, %v1492, 0.0
      %1571 = vadd.xlane.f32.xlu0 %v1570
      %v1572 = vpop.xlane.xlu0 %1571
      %v1573 = vsel %vm589, %v1493, 0.0
      %1574 = vadd.xlane.f32.xlu0 %v1573
      %v1575 = vpop.xlane.xlu0 %1574
      %v1576 = vsel %vm589, %v1494, 0.0
      %1577 = vadd.xlane.f32.xlu0 %v1576
      %v1578 = vpop.xlane.xlu0 %1577
      %v1579 = vsel %vm589, %v1495, 0.0
      %1580 = vadd.xlane.f32.xlu0 %v1579
      %v1581 = vpop.xlane.xlu0 %1580
      %v1582 = vsel %vm589, %v1496, 0.0
      %1583 = vadd.xlane.f32.xlu0 %v1582
      %v1584 = vpop.xlane.xlu0 %1583
      %v1585 = vsel %vm589, %v1497, 0.0
      %1586 = vadd.xlane.f32.xlu0 %v1585
      %v1587 = vpop.xlane.xlu0 %1586
      %v1588 = vsel %vm589, %v1498, 0.0
      %1589 = vadd.xlane.f32.xlu0 %v1588
      %v1590 = vpop.xlane.xlu0 %1589
      %v1591 = vsel %vm589, %v1499, 0.0
      %1592 = vadd.xlane.f32.xlu0 %v1591
      %v1593 = vpop.xlane.xlu0 %1592
      %v1594 = vsel %vm589, %v1500, 0.0
      %1595 = vadd.xlane.f32.xlu0 %v1594
      %v1596 = vpop.xlane.xlu0 %1595
      %vm1597 = vcmp.ge.f32.partialorder %v1503, 1.0
      %vm1598 = vcmp.ge.f32.partialorder %v1506, 1.0
      %vm1599 = vcmp.ge.f32.partialorder %v1509, 1.0
      %vm1600 = vcmp.ge.f32.partialorder %v1512, 1.0
      %vm1601 = vcmp.ge.f32.partialorder %v1515, 1.0
      %vm1602 = vcmp.ge.f32.partialorder %v1518, 1.0
      %vm1603 = vcmp.ge.f32.partialorder %v1521, 1.0
      %vm1604 = vcmp.ge.f32.partialorder %v1524, 1.0
      %vm1605 = vcmp.ge.f32.partialorder %v1527, 1.0
      %vm1606 = vcmp.ge.f32.partialorder %v1530, 1.0
      %vm1607 = vcmp.ge.f32.partialorder %v1533, 1.0
      %vm1608 = vcmp.ge.f32.partialorder %v1536, 1.0
      %vm1609 = vcmp.ge.f32.partialorder %v1539, 1.0
      %vm1610 = vcmp.ge.f32.partialorder %v1542, 1.0
      %vm1611 = vcmp.ge.f32.partialorder %v1545, 1.0
      %vm1612 = vcmp.ge.f32.partialorder %v1548, 1.0
      %vm1613 = vcmp.ge.f32.partialorder %v1551, 1.0
      %vm1614 = vcmp.ge.f32.partialorder %v1554, 1.0
      %vm1615 = vcmp.ge.f32.partialorder %v1557, 1.0
      %vm1616 = vcmp.ge.f32.partialorder %v1560, 1.0
      %vm1617 = vcmp.ge.f32.partialorder %v1563, 1.0
      %vm1618 = vcmp.ge.f32.partialorder %v1566, 1.0
      %vm1619 = vcmp.ge.f32.partialorder %v1569, 1.0
      %vm1620 = vcmp.ge.f32.partialorder %v1572, 1.0
      %vm1621 = vcmp.ge.f32.partialorder %v1575, 1.0
      %vm1622 = vcmp.ge.f32.partialorder %v1578, 1.0
      %vm1623 = vcmp.ge.f32.partialorder %v1581, 1.0
      %vm1624 = vcmp.ge.f32.partialorder %v1584, 1.0
      %vm1625 = vcmp.ge.f32.partialorder %v1587, 1.0
      %vm1626 = vcmp.ge.f32.partialorder %v1590, 1.0
      %vm1627 = vcmp.ge.f32.partialorder %v1593, 1.0
      %vm1628 = vcmp.ge.f32.partialorder %v1596, 1.0
      %v1629 = vsel %vm1597, %v1405, %v1309
      %v1630 = vsel %vm1598, %v1406, %v1310
      %v1631 = vsel %vm1599, %v1407, %v1311
      %v1632 = vsel %vm1600, %v1408, %v1312
      %v1633 = vsel %vm1601, %v1409, %v1313
      %v1634 = vsel %vm1602, %v1410, %v1314
      %v1635 = vsel %vm1603, %v1411, %v1315
      %v1636 = vsel %vm1604, %v1412, %v1316
      %v1637 = vsel %vm1605, %v1413, %v1317
      %v1638 = vsel %vm1606, %v1414, %v1318
      %v1639 = vsel %vm1607, %v1415, %v1319
      %v1640 = vsel %vm1608, %v1416, %v1320
      %v1641 = vsel %vm1609, %v1417, %v1321
      %v1642 = vsel %vm1610, %v1418, %v1322
      %v1643 = vsel %vm1611, %v1419, %v1323
      %v1644 = vsel %vm1612, %v1420, %v1324
      %v1645 = vsel %vm1613, %v1421, %v1325
      %v1646 = vsel %vm1614, %v1422, %v1326
      %v1647 = vsel %vm1615, %v1423, %v1327
      %v1648 = vsel %vm1616, %v1424, %v1328
      %v1649 = vsel %vm1617, %v1425, %v1329
      %v1650 = vsel %vm1618, %v1426, %v1330
      %v1651 = vsel %vm1619, %v1427, %v1331
      %v1652 = vsel %vm1620, %v1428, %v1332
      %v1653 = vsel %vm1621, %v1429, %v1333
      %v1654 = vsel %vm1622, %v1430, %v1334
      %v1655 = vsel %vm1623, %v1431, %v1335
      %v1656 = vsel %vm1624, %v1432, %v1336
      %v1657 = vsel %vm1625, %v1433, %v1337
      %v1658 = vsel %vm1626, %v1434, %v1338
      %v1659 = vsel %vm1627, %v1435, %v1339
      %v1660 = vsel %vm1628, %v1436, %v1340
      %v1661 = vsel %vm1597, %v1341, %v1405
      %v1662 = vsel %vm1598, %v1342, %v1406
      %v1663 = vsel %vm1599, %v1343, %v1407
      %v1664 = vsel %vm1600, %v1344, %v1408
      %v1665 = vsel %vm1601, %v1345, %v1409
      %v1666 = vsel %vm1602, %v1346, %v1410
      %v1667 = vsel %vm1603, %v1347, %v1411
      %v1668 = vsel %vm1604, %v1348, %v1412
      %v1669 = vsel %vm1605, %v1349, %v1413
      %v1670 = vsel %vm1606, %v1350, %v1414
      %v1671 = vsel %vm1607, %v1351, %v1415
      %v1672 = vsel %vm1608, %v1352, %v1416
      %v1673 = vsel %vm1609, %v1353, %v1417
      %v1674 = vsel %vm1610, %v1354, %v1418
      %v1675 = vsel %vm1611, %v1355, %v1419
      %v1676 = vsel %vm1612, %v1356, %v1420
      %v1677 = vsel %vm1613, %v1357, %v1421
      %v1678 = vsel %vm1614, %v1358, %v1422
      %v1679 = vsel %vm1615, %v1359, %v1423
      %v1680 = vsel %vm1616, %v1360, %v1424
      %v1681 = vsel %vm1617, %v1361, %v1425
      %v1682 = vsel %vm1618, %v1362, %v1426
      %v1683 = vsel %vm1619, %v1363, %v1427
      %v1684 = vsel %vm1620, %v1364, %v1428
      %v1685 = vsel %vm1621, %v1365, %v1429
      %v1686 = vsel %vm1622, %v1366, %v1430
      %v1687 = vsel %vm1623, %v1367, %v1431
      %v1688 = vsel %vm1624, %v1368, %v1432
      %v1689 = vsel %vm1625, %v1369, %v1433
      %v1690 = vsel %vm1626, %v1370, %v1434
      %v1691 = vsel %vm1627, %v1371, %v1435
      %v1692 = vsel %vm1628, %v1372, %v1436
      %v1693 = vadd.f32 %v1629, %v1661
      %v1694 = vadd.f32 %v1630, %v1662
      %v1695 = vadd.f32 %v1631, %v1663
      %v1696 = vadd.f32 %v1632, %v1664
      %v1697 = vadd.f32 %v1633, %v1665
      %v1698 = vadd.f32 %v1634, %v1666
      %v1699 = vadd.f32 %v1635, %v1667
      %v1700 = vadd.f32 %v1636, %v1668
      %v1701 = vadd.f32 %v1637, %v1669
      %v1702 = vadd.f32 %v1638, %v1670
      %v1703 = vadd.f32 %v1639, %v1671
      %v1704 = vadd.f32 %v1640, %v1672
      %v1705 = vadd.f32 %v1641, %v1673
      %v1706 = vadd.f32 %v1642, %v1674
      %v1707 = vadd.f32 %v1643, %v1675
      %v1708 = vadd.f32 %v1644, %v1676
      %v1709 = vadd.f32 %v1645, %v1677
      %v1710 = vadd.f32 %v1646, %v1678
      %v1711 = vadd.f32 %v1647, %v1679
      %v1712 = vadd.f32 %v1648, %v1680
      %v1713 = vadd.f32 %v1649, %v1681
      %v1714 = vadd.f32 %v1650, %v1682
      %v1715 = vadd.f32 %v1651, %v1683
      %v1716 = vadd.f32 %v1652, %v1684
      %v1717 = vadd.f32 %v1653, %v1685
      %v1718 = vadd.f32 %v1654, %v1686
      %v1719 = vadd.f32 %v1655, %v1687
      %v1720 = vadd.f32 %v1656, %v1688
      %v1721 = vadd.f32 %v1657, %v1689
      %v1722 = vadd.f32 %v1658, %v1690
      %v1723 = vadd.f32 %v1659, %v1691
      %v1724 = vadd.f32 %v1660, %v1692
      %v1725 = vmul.f32 %v1693, 0.5
      %v1726 = vmul.f32 %v1694, 0.5
      %v1727 = vmul.f32 %v1695, 0.5
      %v1728 = vmul.f32 %v1696, 0.5
      %v1729 = vmul.f32 %v1697, 0.5
      %v1730 = vmul.f32 %v1698, 0.5
      %v1731 = vmul.f32 %v1699, 0.5
      %v1732 = vmul.f32 %v1700, 0.5
      %v1733 = vmul.f32 %v1701, 0.5
      %v1734 = vmul.f32 %v1702, 0.5
      %v1735 = vmul.f32 %v1703, 0.5
      %v1736 = vmul.f32 %v1704, 0.5
      %v1737 = vmul.f32 %v1705, 0.5
      %v1738 = vmul.f32 %v1706, 0.5
      %v1739 = vmul.f32 %v1707, 0.5
      %v1740 = vmul.f32 %v1708, 0.5
      %v1741 = vmul.f32 %v1709, 0.5
      %v1742 = vmul.f32 %v1710, 0.5
      %v1743 = vmul.f32 %v1711, 0.5
      %v1744 = vmul.f32 %v1712, 0.5
      %v1745 = vmul.f32 %v1713, 0.5
      %v1746 = vmul.f32 %v1714, 0.5
      %v1747 = vmul.f32 %v1715, 0.5
      %v1748 = vmul.f32 %v1716, 0.5
      %v1749 = vmul.f32 %v1717, 0.5
      %v1750 = vmul.f32 %v1718, 0.5
      %v1751 = vmul.f32 %v1719, 0.5
      %v1752 = vmul.f32 %v1720, 0.5
      %v1753 = vmul.f32 %v1721, 0.5
      %v1754 = vmul.f32 %v1722, 0.5
      %v1755 = vmul.f32 %v1723, 0.5
      %v1756 = vmul.f32 %v1724, 0.5
      %v1757 = vsub.f32 %v1085, %v1725
      %v1758 = vsub.f32 %v1086, %v1726
      %v1759 = vsub.f32 %v1087, %v1727
      %v1760 = vsub.f32 %v1088, %v1728
      %v1761 = vsub.f32 %v1089, %v1729
      %v1762 = vsub.f32 %v1090, %v1730
      %v1763 = vsub.f32 %v1091, %v1731
      %v1764 = vsub.f32 %v1092, %v1732
      %v1765 = vsub.f32 %v1093, %v1733
      %v1766 = vsub.f32 %v1094, %v1734
      %v1767 = vsub.f32 %v1095, %v1735
      %v1768 = vsub.f32 %v1096, %v1736
      %v1769 = vsub.f32 %v1097, %v1737
      %v1770 = vsub.f32 %v1098, %v1738
      %v1771 = vsub.f32 %v1099, %v1739
      %v1772 = vsub.f32 %v1100, %v1740
      %v1773 = vsub.f32 %v1101, %v1741
      %v1774 = vsub.f32 %v1102, %v1742
      %v1775 = vsub.f32 %v1103, %v1743
      %v1776 = vsub.f32 %v1104, %v1744
      %v1777 = vsub.f32 %v1105, %v1745
      %v1778 = vsub.f32 %v1106, %v1746
      %v1779 = vsub.f32 %v1107, %v1747
      %v1780 = vsub.f32 %v1108, %v1748
      %v1781 = vsub.f32 %v1109, %v1749
      %v1782 = vsub.f32 %v1110, %v1750
      %v1783 = vsub.f32 %v1111, %v1751
      %v1784 = vsub.f32 %v1112, %v1752
      %v1785 = vsub.f32 %v1113, %v1753
      %v1786 = vsub.f32 %v1114, %v1754
      %v1787 = vsub.f32 %v1115, %v1755
      %v1788 = vsub.f32 %v1116, %v1756
      %v1789 = vmax.f32 %v1757, 0.0
      %v1790 = vmax.f32 %v1758, 0.0
      %v1791 = vmax.f32 %v1759, 0.0
      %v1792 = vmax.f32 %v1760, 0.0
      %v1793 = vmax.f32 %v1761, 0.0
      %v1794 = vmax.f32 %v1762, 0.0
      %v1795 = vmax.f32 %v1763, 0.0
      %v1796 = vmax.f32 %v1764, 0.0
      %v1797 = vmax.f32 %v1765, 0.0
      %v1798 = vmax.f32 %v1766, 0.0
      %v1799 = vmax.f32 %v1767, 0.0
      %v1800 = vmax.f32 %v1768, 0.0
      %v1801 = vmax.f32 %v1769, 0.0
      %v1802 = vmax.f32 %v1770, 0.0
      %v1803 = vmax.f32 %v1771, 0.0
      %v1804 = vmax.f32 %v1772, 0.0
      %v1805 = vmax.f32 %v1773, 0.0
      %v1806 = vmax.f32 %v1774, 0.0
      %v1807 = vmax.f32 %v1775, 0.0
      %v1808 = vmax.f32 %v1776, 0.0
      %v1809 = vmax.f32 %v1777, 0.0
      %v1810 = vmax.f32 %v1778, 0.0
      %v1811 = vmax.f32 %v1779, 0.0
      %v1812 = vmax.f32 %v1780, 0.0
      %v1813 = vmax.f32 %v1781, 0.0
      %v1814 = vmax.f32 %v1782, 0.0
      %v1815 = vmax.f32 %v1783, 0.0
      %v1816 = vmax.f32 %v1784, 0.0
      %v1817 = vmax.f32 %v1785, 0.0
      %v1818 = vmax.f32 %v1786, 0.0
      %v1819 = vmax.f32 %v1787, 0.0
      %v1820 = vmax.f32 %v1788, 0.0
      %v1821 = vsel %vm589, %v1789, 0.0
      %1822 = vadd.xlane.f32.xlu0 %v1821
      %v1823 = vpop.xlane.xlu0 %1822
      %v1824 = vsel %vm589, %v1790, 0.0
      %1825 = vadd.xlane.f32.xlu0 %v1824
      %v1826 = vpop.xlane.xlu0 %1825
      %v1827 = vsel %vm589, %v1791, 0.0
      %1828 = vadd.xlane.f32.xlu0 %v1827
      %v1829 = vpop.xlane.xlu0 %1828
      %v1830 = vsel %vm589, %v1792, 0.0
      %1831 = vadd.xlane.f32.xlu0 %v1830
      %v1832 = vpop.xlane.xlu0 %1831
      %v1833 = vsel %vm589, %v1793, 0.0
      %1834 = vadd.xlane.f32.xlu0 %v1833
      %v1835 = vpop.xlane.xlu0 %1834
      %v1836 = vsel %vm589, %v1794, 0.0
      %1837 = vadd.xlane.f32.xlu0 %v1836
      %v1838 = vpop.xlane.xlu0 %1837
      %v1839 = vsel %vm589, %v1795, 0.0
      %1840 = vadd.xlane.f32.xlu0 %v1839
      %v1841 = vpop.xlane.xlu0 %1840
      %v1842 = vsel %vm589, %v1796, 0.0
      %1843 = vadd.xlane.f32.xlu0 %v1842
      %v1844 = vpop.xlane.xlu0 %1843
      %v1845 = vsel %vm589, %v1797, 0.0
      %1846 = vadd.xlane.f32.xlu0 %v1845
      %v1847 = vpop.xlane.xlu0 %1846
      %v1848 = vsel %vm589, %v1798, 0.0
      %1849 = vadd.xlane.f32.xlu0 %v1848
      %v1850 = vpop.xlane.xlu0 %1849
      %v1851 = vsel %vm589, %v1799, 0.0
      %1852 = vadd.xlane.f32.xlu0 %v1851
      %v1853 = vpop.xlane.xlu0 %1852
      %v1854 = vsel %vm589, %v1800, 0.0
      %1855 = vadd.xlane.f32.xlu0 %v1854
      %v1856 = vpop.xlane.xlu0 %1855
      %v1857 = vsel %vm589, %v1801, 0.0
      %1858 = vadd.xlane.f32.xlu0 %v1857
      %v1859 = vpop.xlane.xlu0 %1858
      %v1860 = vsel %vm589, %v1802, 0.0
      %1861 = vadd.xlane.f32.xlu0 %v1860
      %v1862 = vpop.xlane.xlu0 %1861
      %v1863 = vsel %vm589, %v1803, 0.0
      %1864 = vadd.xlane.f32.xlu0 %v1863
      %v1865 = vpop.xlane.xlu0 %1864
      %v1866 = vsel %vm589, %v1804, 0.0
      %1867 = vadd.xlane.f32.xlu0 %v1866
      %v1868 = vpop.xlane.xlu0 %1867
      %v1869 = vsel %vm589, %v1805, 0.0
      %1870 = vadd.xlane.f32.xlu0 %v1869
      %v1871 = vpop.xlane.xlu0 %1870
      %v1872 = vsel %vm589, %v1806, 0.0
      %1873 = vadd.xlane.f32.xlu0 %v1872
      %v1874 = vpop.xlane.xlu0 %1873
      %v1875 = vsel %vm589, %v1807, 0.0
      %1876 = vadd.xlane.f32.xlu0 %v1875
      %v1877 = vpop.xlane.xlu0 %1876
      %v1878 = vsel %vm589, %v1808, 0.0
      %1879 = vadd.xlane.f32.xlu0 %v1878
      %v1880 = vpop.xlane.xlu0 %1879
      %v1881 = vsel %vm589, %v1809, 0.0
      %1882 = vadd.xlane.f32.xlu0 %v1881
      %v1883 = vpop.xlane.xlu0 %1882
      %v1884 = vsel %vm589, %v1810, 0.0
      %1885 = vadd.xlane.f32.xlu0 %v1884
      %v1886 = vpop.xlane.xlu0 %1885
      %v1887 = vsel %vm589, %v1811, 0.0
      %1888 = vadd.xlane.f32.xlu0 %v1887
      %v1889 = vpop.xlane.xlu0 %1888
      %v1890 = vsel %vm589, %v1812, 0.0
      %1891 = vadd.xlane.f32.xlu0 %v1890
      %v1892 = vpop.xlane.xlu0 %1891
      %v1893 = vsel %vm589, %v1813, 0.0
      %1894 = vadd.xlane.f32.xlu0 %v1893
      %v1895 = vpop.xlane.xlu0 %1894
      %v1896 = vsel %vm589, %v1814, 0.0
      %1897 = vadd.xlane.f32.xlu0 %v1896
      %v1898 = vpop.xlane.xlu0 %1897
      %v1899 = vsel %vm589, %v1815, 0.0
      %1900 = vadd.xlane.f32.xlu0 %v1899
      %v1901 = vpop.xlane.xlu0 %1900
      %v1902 = vsel %vm589, %v1816, 0.0
      %1903 = vadd.xlane.f32.xlu0 %v1902
      %v1904 = vpop.xlane.xlu0 %1903
      %v1905 = vsel %vm589, %v1817, 0.0
      %1906 = vadd.xlane.f32.xlu0 %v1905
      %v1907 = vpop.xlane.xlu0 %1906
      %v1908 = vsel %vm589, %v1818, 0.0
      %1909 = vadd.xlane.f32.xlu0 %v1908
      %v1910 = vpop.xlane.xlu0 %1909
      %v1911 = vsel %vm589, %v1819, 0.0
      %1912 = vadd.xlane.f32.xlu0 %v1911
      %v1913 = vpop.xlane.xlu0 %1912
      %v1914 = vsel %vm589, %v1820, 0.0
      %1915 = vadd.xlane.f32.xlu0 %v1914
      %v1916 = vpop.xlane.xlu0 %1915
      %vm1917 = vcmp.ge.f32.partialorder %v1823, 1.0
      %vm1918 = vcmp.ge.f32.partialorder %v1826, 1.0
      %vm1919 = vcmp.ge.f32.partialorder %v1829, 1.0
      %vm1920 = vcmp.ge.f32.partialorder %v1832, 1.0
      %vm1921 = vcmp.ge.f32.partialorder %v1835, 1.0
      %vm1922 = vcmp.ge.f32.partialorder %v1838, 1.0
      %vm1923 = vcmp.ge.f32.partialorder %v1841, 1.0
      %vm1924 = vcmp.ge.f32.partialorder %v1844, 1.0
      %vm1925 = vcmp.ge.f32.partialorder %v1847, 1.0
      %vm1926 = vcmp.ge.f32.partialorder %v1850, 1.0
      %vm1927 = vcmp.ge.f32.partialorder %v1853, 1.0
      %vm1928 = vcmp.ge.f32.partialorder %v1856, 1.0
      %vm1929 = vcmp.ge.f32.partialorder %v1859, 1.0
      %vm1930 = vcmp.ge.f32.partialorder %v1862, 1.0
      %vm1931 = vcmp.ge.f32.partialorder %v1865, 1.0
      %vm1932 = vcmp.ge.f32.partialorder %v1868, 1.0
      %vm1933 = vcmp.ge.f32.partialorder %v1871, 1.0
      %vm1934 = vcmp.ge.f32.partialorder %v1874, 1.0
      %vm1935 = vcmp.ge.f32.partialorder %v1877, 1.0
      %vm1936 = vcmp.ge.f32.partialorder %v1880, 1.0
      %vm1937 = vcmp.ge.f32.partialorder %v1883, 1.0
      %vm1938 = vcmp.ge.f32.partialorder %v1886, 1.0
      %vm1939 = vcmp.ge.f32.partialorder %v1889, 1.0
      %vm1940 = vcmp.ge.f32.partialorder %v1892, 1.0
      %vm1941 = vcmp.ge.f32.partialorder %v1895, 1.0
      %vm1942 = vcmp.ge.f32.partialorder %v1898, 1.0
      %vm1943 = vcmp.ge.f32.partialorder %v1901, 1.0
      %vm1944 = vcmp.ge.f32.partialorder %v1904, 1.0
      %vm1945 = vcmp.ge.f32.partialorder %v1907, 1.0
      %vm1946 = vcmp.ge.f32.partialorder %v1910, 1.0
      %vm1947 = vcmp.ge.f32.partialorder %v1913, 1.0
      %vm1948 = vcmp.ge.f32.partialorder %v1916, 1.0
      %v1949 = vsel %vm1917, %v1725, %v1629
      %v1950 = vsel %vm1918, %v1726, %v1630
      %v1951 = vsel %vm1919, %v1727, %v1631
      %v1952 = vsel %vm1920, %v1728, %v1632
      %v1953 = vsel %vm1921, %v1729, %v1633
      %v1954 = vsel %vm1922, %v1730, %v1634
      %v1955 = vsel %vm1923, %v1731, %v1635
      %v1956 = vsel %vm1924, %v1732, %v1636
      %v1957 = vsel %vm1925, %v1733, %v1637
      %v1958 = vsel %vm1926, %v1734, %v1638
      %v1959 = vsel %vm1927, %v1735, %v1639
      %v1960 = vsel %vm1928, %v1736, %v1640
      %v1961 = vsel %vm1929, %v1737, %v1641
      %v1962 = vsel %vm1930, %v1738, %v1642
      %v1963 = vsel %vm1931, %v1739, %v1643
      %v1964 = vsel %vm1932, %v1740, %v1644
      %v1965 = vsel %vm1933, %v1741, %v1645
      %v1966 = vsel %vm1934, %v1742, %v1646
      %v1967 = vsel %vm1935, %v1743, %v1647
      %v1968 = vsel %vm1936, %v1744, %v1648
      %v1969 = vsel %vm1937, %v1745, %v1649
      %v1970 = vsel %vm1938, %v1746, %v1650
      %v1971 = vsel %vm1939, %v1747, %v1651
      %v1972 = vsel %vm1940, %v1748, %v1652
      %v1973 = vsel %vm1941, %v1749, %v1653
      %v1974 = vsel %vm1942, %v1750, %v1654
      %v1975 = vsel %vm1943, %v1751, %v1655
      %v1976 = vsel %vm1944, %v1752, %v1656
      %v1977 = vsel %vm1945, %v1753, %v1657
      %v1978 = vsel %vm1946, %v1754, %v1658
      %v1979 = vsel %vm1947, %v1755, %v1659
      %v1980 = vsel %vm1948, %v1756, %v1660
      %v1981 = vsel %vm1917, %v1661, %v1725
      %v1982 = vsel %vm1918, %v1662, %v1726
      %v1983 = vsel %vm1919, %v1663, %v1727
      %v1984 = vsel %vm1920, %v1664, %v1728
      %v1985 = vsel %vm1921, %v1665, %v1729
      %v1986 = vsel %vm1922, %v1666, %v1730
      %v1987 = vsel %vm1923, %v1667, %v1731
      %v1988 = vsel %vm1924, %v1668, %v1732
      %v1989 = vsel %vm1925, %v1669, %v1733
      %v1990 = vsel %vm1926, %v1670, %v1734
      %v1991 = vsel %vm1927, %v1671, %v1735
      %v1992 = vsel %vm1928, %v1672, %v1736
      %v1993 = vsel %vm1929, %v1673, %v1737
      %v1994 = vsel %vm1930, %v1674, %v1738
      %v1995 = vsel %vm1931, %v1675, %v1739
      %v1996 = vsel %vm1932, %v1676, %v1740
      %v1997 = vsel %vm1933, %v1677, %v1741
      %v1998 = vsel %vm1934, %v1678, %v1742
      %v1999 = vsel %vm1935, %v1679, %v1743
      %v2000 = vsel %vm1936, %v1680, %v1744
      %v2001 = vsel %vm1937, %v1681, %v1745
      %v2002 = vsel %vm1938, %v1682, %v1746
      %v2003 = vsel %vm1939, %v1683, %v1747
      %v2004 = vsel %vm1940, %v1684, %v1748
      %v2005 = vsel %vm1941, %v1685, %v1749
      %v2006 = vsel %vm1942, %v1686, %v1750
      %v2007 = vsel %vm1943, %v1687, %v1751
      %v2008 = vsel %vm1944, %v1688, %v1752
      %v2009 = vsel %vm1945, %v1689, %v1753
      %v2010 = vsel %vm1946, %v1690, %v1754
      %v2011 = vsel %vm1947, %v1691, %v1755
      %v2012 = vsel %vm1948, %v1692, %v1756
      %v2013 = vadd.f32 %v1949, %v1981
      %v2014 = vadd.f32 %v1950, %v1982
      %v2015 = vadd.f32 %v1951, %v1983
      %v2016 = vadd.f32 %v1952, %v1984
      %v2017 = vadd.f32 %v1953, %v1985
      %v2018 = vadd.f32 %v1954, %v1986
      %v2019 = vadd.f32 %v1955, %v1987
      %v2020 = vadd.f32 %v1956, %v1988
      %v2021 = vadd.f32 %v1957, %v1989
      %v2022 = vadd.f32 %v1958, %v1990
      %v2023 = vadd.f32 %v1959, %v1991
      %v2024 = vadd.f32 %v1960, %v1992
      %v2025 = vadd.f32 %v1961, %v1993
      %v2026 = vadd.f32 %v1962, %v1994
      %v2027 = vadd.f32 %v1963, %v1995
      %v2028 = vadd.f32 %v1964, %v1996
      %v2029 = vadd.f32 %v1965, %v1997
      %v2030 = vadd.f32 %v1966, %v1998
      %v2031 = vadd.f32 %v1967, %v1999
      %v2032 = vadd.f32 %v1968, %v2000
      %v2033 = vadd.f32 %v1969, %v2001
      %v2034 = vadd.f32 %v1970, %v2002
      %v2035 = vadd.f32 %v1971, %v2003
      %v2036 = vadd.f32 %v1972, %v2004
      %v2037 = vadd.f32 %v1973, %v2005
      %v2038 = vadd.f32 %v1974, %v2006
      %v2039 = vadd.f32 %v1975, %v2007
      %v2040 = vadd.f32 %v1976, %v2008
      %v2041 = vadd.f32 %v1977, %v2009
      %v2042 = vadd.f32 %v1978, %v2010
      %v2043 = vadd.f32 %v1979, %v2011
      %v2044 = vadd.f32 %v1980, %v2012
      %v2045 = vmul.f32 %v2013, 0.5
      %v2046 = vmul.f32 %v2014, 0.5
      %v2047 = vmul.f32 %v2015, 0.5
      %v2048 = vmul.f32 %v2016, 0.5
      %v2049 = vmul.f32 %v2017, 0.5
      %v2050 = vmul.f32 %v2018, 0.5
      %v2051 = vmul.f32 %v2019, 0.5
      %v2052 = vmul.f32 %v2020, 0.5
      %v2053 = vmul.f32 %v2021, 0.5
      %v2054 = vmul.f32 %v2022, 0.5
      %v2055 = vmul.f32 %v2023, 0.5
      %v2056 = vmul.f32 %v2024, 0.5
      %v2057 = vmul.f32 %v2025, 0.5
      %v2058 = vmul.f32 %v2026, 0.5
      %v2059 = vmul.f32 %v2027, 0.5
      %v2060 = vmul.f32 %v2028, 0.5
      %v2061 = vmul.f32 %v2029, 0.5
      %v2062 = vmul.f32 %v2030, 0.5
      %v2063 = vmul.f32 %v2031, 0.5
      %v2064 = vmul.f32 %v2032, 0.5
      %v2065 = vmul.f32 %v2033, 0.5
      %v2066 = vmul.f32 %v2034, 0.5
      %v2067 = vmul.f32 %v2035, 0.5
      %v2068 = vmul.f32 %v2036, 0.5
      %v2069 = vmul.f32 %v2037, 0.5
      %v2070 = vmul.f32 %v2038, 0.5
      %v2071 = vmul.f32 %v2039, 0.5
      %v2072 = vmul.f32 %v2040, 0.5
      %v2073 = vmul.f32 %v2041, 0.5
      %v2074 = vmul.f32 %v2042, 0.5
      %v2075 = vmul.f32 %v2043, 0.5
      %v2076 = vmul.f32 %v2044, 0.5
      %v2077 = vsub.f32 %v1085, %v2045
      %v2078 = vsub.f32 %v1086, %v2046
      %v2079 = vsub.f32 %v1087, %v2047
      %v2080 = vsub.f32 %v1088, %v2048
      %v2081 = vsub.f32 %v1089, %v2049
      %v2082 = vsub.f32 %v1090, %v2050
      %v2083 = vsub.f32 %v1091, %v2051
      %v2084 = vsub.f32 %v1092, %v2052
      %v2085 = vsub.f32 %v1093, %v2053
      %v2086 = vsub.f32 %v1094, %v2054
      %v2087 = vsub.f32 %v1095, %v2055
      %v2088 = vsub.f32 %v1096, %v2056
      %v2089 = vsub.f32 %v1097, %v2057
      %v2090 = vsub.f32 %v1098, %v2058
      %v2091 = vsub.f32 %v1099, %v2059
      %v2092 = vsub.f32 %v1100, %v2060
      %v2093 = vsub.f32 %v1101, %v2061
      %v2094 = vsub.f32 %v1102, %v2062
      %v2095 = vsub.f32 %v1103, %v2063
      %v2096 = vsub.f32 %v1104, %v2064
      %v2097 = vsub.f32 %v1105, %v2065
      %v2098 = vsub.f32 %v1106, %v2066
      %v2099 = vsub.f32 %v1107, %v2067
      %v2100 = vsub.f32 %v1108, %v2068
      %v2101 = vsub.f32 %v1109, %v2069
      %v2102 = vsub.f32 %v1110, %v2070
      %v2103 = vsub.f32 %v1111, %v2071
      %v2104 = vsub.f32 %v1112, %v2072
      %v2105 = vsub.f32 %v1113, %v2073
      %v2106 = vsub.f32 %v1114, %v2074
      %v2107 = vsub.f32 %v1115, %v2075
      %v2108 = vsub.f32 %v1116, %v2076
      %v2109 = vmax.f32 %v2077, 0.0
      %v2110 = vmax.f32 %v2078, 0.0
      %v2111 = vmax.f32 %v2079, 0.0
      %v2112 = vmax.f32 %v2080, 0.0
      %v2113 = vmax.f32 %v2081, 0.0
      %v2114 = vmax.f32 %v2082, 0.0
      %v2115 = vmax.f32 %v2083, 0.0
      %v2116 = vmax.f32 %v2084, 0.0
      %v2117 = vmax.f32 %v2085, 0.0
      %v2118 = vmax.f32 %v2086, 0.0
      %v2119 = vmax.f32 %v2087, 0.0
      %v2120 = vmax.f32 %v2088, 0.0
      %v2121 = vmax.f32 %v2089, 0.0
      %v2122 = vmax.f32 %v2090, 0.0
      %v2123 = vmax.f32 %v2091, 0.0
      %v2124 = vmax.f32 %v2092, 0.0
      %v2125 = vmax.f32 %v2093, 0.0
      %v2126 = vmax.f32 %v2094, 0.0
      %v2127 = vmax.f32 %v2095, 0.0
      %v2128 = vmax.f32 %v2096, 0.0
      %v2129 = vmax.f32 %v2097, 0.0
      %v2130 = vmax.f32 %v2098, 0.0
      %v2131 = vmax.f32 %v2099, 0.0
      %v2132 = vmax.f32 %v2100, 0.0
      %v2133 = vmax.f32 %v2101, 0.0
      %v2134 = vmax.f32 %v2102, 0.0
      %v2135 = vmax.f32 %v2103, 0.0
      %v2136 = vmax.f32 %v2104, 0.0
      %v2137 = vmax.f32 %v2105, 0.0
      %v2138 = vmax.f32 %v2106, 0.0
      %v2139 = vmax.f32 %v2107, 0.0
      %v2140 = vmax.f32 %v2108, 0.0
      %v2141 = vsel %vm589, %v2109, 0.0
      %2142 = vadd.xlane.f32.xlu0 %v2141
      %v2143 = vpop.xlane.xlu0 %2142
      %v2144 = vsel %vm589, %v2110, 0.0
      %2145 = vadd.xlane.f32.xlu0 %v2144
      %v2146 = vpop.xlane.xlu0 %2145
      %v2147 = vsel %vm589, %v2111, 0.0
      %2148 = vadd.xlane.f32.xlu0 %v2147
      %v2149 = vpop.xlane.xlu0 %2148
      %v2150 = vsel %vm589, %v2112, 0.0
      %2151 = vadd.xlane.f32.xlu0 %v2150
      %v2152 = vpop.xlane.xlu0 %2151
      %v2153 = vsel %vm589, %v2113, 0.0
      %2154 = vadd.xlane.f32.xlu0 %v2153
      %v2155 = vpop.xlane.xlu0 %2154
      %v2156 = vsel %vm589, %v2114, 0.0
      %2157 = vadd.xlane.f32.xlu0 %v2156
      %v2158 = vpop.xlane.xlu0 %2157
      %v2159 = vsel %vm589, %v2115, 0.0
      %2160 = vadd.xlane.f32.xlu0 %v2159
      %v2161 = vpop.xlane.xlu0 %2160
      %v2162 = vsel %vm589, %v2116, 0.0
      %2163 = vadd.xlane.f32.xlu0 %v2162
      %v2164 = vpop.xlane.xlu0 %2163
      %v2165 = vsel %vm589, %v2117, 0.0
      %2166 = vadd.xlane.f32.xlu0 %v2165
      %v2167 = vpop.xlane.xlu0 %2166
      %v2168 = vsel %vm589, %v2118, 0.0
      %2169 = vadd.xlane.f32.xlu0 %v2168
      %v2170 = vpop.xlane.xlu0 %2169
      %v2171 = vsel %vm589, %v2119, 0.0
      %2172 = vadd.xlane.f32.xlu0 %v2171
      %v2173 = vpop.xlane.xlu0 %2172
      %v2174 = vsel %vm589, %v2120, 0.0
      %2175 = vadd.xlane.f32.xlu0 %v2174
      %v2176 = vpop.xlane.xlu0 %2175
      %v2177 = vsel %vm589, %v2121, 0.0
      %2178 = vadd.xlane.f32.xlu0 %v2177
      %v2179 = vpop.xlane.xlu0 %2178
      %v2180 = vsel %vm589, %v2122, 0.0
      %2181 = vadd.xlane.f32.xlu0 %v2180
      %v2182 = vpop.xlane.xlu0 %2181
      %v2183 = vsel %vm589, %v2123, 0.0
      %2184 = vadd.xlane.f32.xlu0 %v2183
      %v2185 = vpop.xlane.xlu0 %2184
      %v2186 = vsel %vm589, %v2124, 0.0
      %2187 = vadd.xlane.f32.xlu0 %v2186
      %v2188 = vpop.xlane.xlu0 %2187
      %v2189 = vsel %vm589, %v2125, 0.0
      %2190 = vadd.xlane.f32.xlu0 %v2189
      %v2191 = vpop.xlane.xlu0 %2190
      %v2192 = vsel %vm589, %v2126, 0.0
      %2193 = vadd.xlane.f32.xlu0 %v2192
      %v2194 = vpop.xlane.xlu0 %2193
      %v2195 = vsel %vm589, %v2127, 0.0
      %2196 = vadd.xlane.f32.xlu0 %v2195
      %v2197 = vpop.xlane.xlu0 %2196
      %v2198 = vsel %vm589, %v2128, 0.0
      %2199 = vadd.xlane.f32.xlu0 %v2198
      %v2200 = vpop.xlane.xlu0 %2199
      %v2201 = vsel %vm589, %v2129, 0.0
      %2202 = vadd.xlane.f32.xlu0 %v2201
      %v2203 = vpop.xlane.xlu0 %2202
      %v2204 = vsel %vm589, %v2130, 0.0
      %2205 = vadd.xlane.f32.xlu0 %v2204
      %v2206 = vpop.xlane.xlu0 %2205
      %v2207 = vsel %vm589, %v2131, 0.0
      %2208 = vadd.xlane.f32.xlu0 %v2207
      %v2209 = vpop.xlane.xlu0 %2208
      %v2210 = vsel %vm589, %v2132, 0.0
      %2211 = vadd.xlane.f32.xlu0 %v2210
      %v2212 = vpop.xlane.xlu0 %2211
      %v2213 = vsel %vm589, %v2133, 0.0
      %2214 = vadd.xlane.f32.xlu0 %v2213
      %v2215 = vpop.xlane.xlu0 %2214
      %v2216 = vsel %vm589, %v2134, 0.0
      %2217 = vadd.xlane.f32.xlu0 %v2216
      %v2218 = vpop.xlane.xlu0 %2217
      %v2219 = vsel %vm589, %v2135, 0.0
      %2220 = vadd.xlane.f32.xlu0 %v2219
      %v2221 = vpop.xlane.xlu0 %2220
      %v2222 = vsel %vm589, %v2136, 0.0
      %2223 = vadd.xlane.f32.xlu0 %v2222
      %v2224 = vpop.xlane.xlu0 %2223
      %v2225 = vsel %vm589, %v2137, 0.0
      %2226 = vadd.xlane.f32.xlu0 %v2225
      %v2227 = vpop.xlane.xlu0 %2226
      %v2228 = vsel %vm589, %v2138, 0.0
      %2229 = vadd.xlane.f32.xlu0 %v2228
      %v2230 = vpop.xlane.xlu0 %2229
      %v2231 = vsel %vm589, %v2139, 0.0
      %2232 = vadd.xlane.f32.xlu0 %v2231
      %v2233 = vpop.xlane.xlu0 %2232
      %v2234 = vsel %vm589, %v2140, 0.0
      %2235 = vadd.xlane.f32.xlu0 %v2234
      %v2236 = vpop.xlane.xlu0 %2235
      %vm2237 = vcmp.ge.f32.partialorder %v2143, 1.0
      %vm2238 = vcmp.ge.f32.partialorder %v2146, 1.0
      %vm2239 = vcmp.ge.f32.partialorder %v2149, 1.0
      %vm2240 = vcmp.ge.f32.partialorder %v2152, 1.0
      %vm2241 = vcmp.ge.f32.partialorder %v2155, 1.0
      %vm2242 = vcmp.ge.f32.partialorder %v2158, 1.0
      %vm2243 = vcmp.ge.f32.partialorder %v2161, 1.0
      %vm2244 = vcmp.ge.f32.partialorder %v2164, 1.0
      %vm2245 = vcmp.ge.f32.partialorder %v2167, 1.0
      %vm2246 = vcmp.ge.f32.partialorder %v2170, 1.0
      %vm2247 = vcmp.ge.f32.partialorder %v2173, 1.0
      %vm2248 = vcmp.ge.f32.partialorder %v2176, 1.0
      %vm2249 = vcmp.ge.f32.partialorder %v2179, 1.0
      %vm2250 = vcmp.ge.f32.partialorder %v2182, 1.0
      %vm2251 = vcmp.ge.f32.partialorder %v2185, 1.0
      %vm2252 = vcmp.ge.f32.partialorder %v2188, 1.0
      %vm2253 = vcmp.ge.f32.partialorder %v2191, 1.0
      %vm2254 = vcmp.ge.f32.partialorder %v2194, 1.0
      %vm2255 = vcmp.ge.f32.partialorder %v2197, 1.0
      %vm2256 = vcmp.ge.f32.partialorder %v2200, 1.0
      %vm2257 = vcmp.ge.f32.partialorder %v2203, 1.0
      %vm2258 = vcmp.ge.f32.partialorder %v2206, 1.0
      %vm2259 = vcmp.ge.f32.partialorder %v2209, 1.0
      %vm2260 = vcmp.ge.f32.partialorder %v2212, 1.0
      %vm2261 = vcmp.ge.f32.partialorder %v2215, 1.0
      %vm2262 = vcmp.ge.f32.partialorder %v2218, 1.0
      %vm2263 = vcmp.ge.f32.partialorder %v2221, 1.0
      %vm2264 = vcmp.ge.f32.partialorder %v2224, 1.0
      %vm2265 = vcmp.ge.f32.partialorder %v2227, 1.0
      %vm2266 = vcmp.ge.f32.partialorder %v2230, 1.0
      %vm2267 = vcmp.ge.f32.partialorder %v2233, 1.0
      %vm2268 = vcmp.ge.f32.partialorder %v2236, 1.0
      %v2269 = vsel %vm2237, %v2045, %v1949
      %v2270 = vsel %vm2238, %v2046, %v1950
      %v2271 = vsel %vm2239, %v2047, %v1951
      %v2272 = vsel %vm2240, %v2048, %v1952
      %v2273 = vsel %vm2241, %v2049, %v1953
      %v2274 = vsel %vm2242, %v2050, %v1954
      %v2275 = vsel %vm2243, %v2051, %v1955
      %v2276 = vsel %vm2244, %v2052, %v1956
      %v2277 = vsel %vm2245, %v2053, %v1957
      %v2278 = vsel %vm2246, %v2054, %v1958
      %v2279 = vsel %vm2247, %v2055, %v1959
      %v2280 = vsel %vm2248, %v2056, %v1960
      %v2281 = vsel %vm2249, %v2057, %v1961
      %v2282 = vsel %vm2250, %v2058, %v1962
      %v2283 = vsel %vm2251, %v2059, %v1963
      %v2284 = vsel %vm2252, %v2060, %v1964
      %v2285 = vsel %vm2253, %v2061, %v1965
      %v2286 = vsel %vm2254, %v2062, %v1966
      %v2287 = vsel %vm2255, %v2063, %v1967
      %v2288 = vsel %vm2256, %v2064, %v1968
      %v2289 = vsel %vm2257, %v2065, %v1969
      %v2290 = vsel %vm2258, %v2066, %v1970
      %v2291 = vsel %vm2259, %v2067, %v1971
      %v2292 = vsel %vm2260, %v2068, %v1972
      %v2293 = vsel %vm2261, %v2069, %v1973
      %v2294 = vsel %vm2262, %v2070, %v1974
      %v2295 = vsel %vm2263, %v2071, %v1975
      %v2296 = vsel %vm2264, %v2072, %v1976
      %v2297 = vsel %vm2265, %v2073, %v1977
      %v2298 = vsel %vm2266, %v2074, %v1978
      %v2299 = vsel %vm2267, %v2075, %v1979
      %v2300 = vsel %vm2268, %v2076, %v1980
      %v2301 = vsel %vm2237, %v1981, %v2045
      %v2302 = vsel %vm2238, %v1982, %v2046
      %v2303 = vsel %vm2239, %v1983, %v2047
      %v2304 = vsel %vm2240, %v1984, %v2048
      %v2305 = vsel %vm2241, %v1985, %v2049
      %v2306 = vsel %vm2242, %v1986, %v2050
      %v2307 = vsel %vm2243, %v1987, %v2051
      %v2308 = vsel %vm2244, %v1988, %v2052
      %v2309 = vsel %vm2245, %v1989, %v2053
      %v2310 = vsel %vm2246, %v1990, %v2054
      %v2311 = vsel %vm2247, %v1991, %v2055
      %v2312 = vsel %vm2248, %v1992, %v2056
      %v2313 = vsel %vm2249, %v1993, %v2057
      %v2314 = vsel %vm2250, %v1994, %v2058
      %v2315 = vsel %vm2251, %v1995, %v2059
      %v2316 = vsel %vm2252, %v1996, %v2060
      %v2317 = vsel %vm2253, %v1997, %v2061
      %v2318 = vsel %vm2254, %v1998, %v2062
      %v2319 = vsel %vm2255, %v1999, %v2063
      %v2320 = vsel %vm2256, %v2000, %v2064
      %v2321 = vsel %vm2257, %v2001, %v2065
      %v2322 = vsel %vm2258, %v2002, %v2066
      %v2323 = vsel %vm2259, %v2003, %v2067
      %v2324 = vsel %vm2260, %v2004, %v2068
      %v2325 = vsel %vm2261, %v2005, %v2069
      %v2326 = vsel %vm2262, %v2006, %v2070
      %v2327 = vsel %vm2263, %v2007, %v2071
      %v2328 = vsel %vm2264, %v2008, %v2072
      %v2329 = vsel %vm2265, %v2009, %v2073
      %v2330 = vsel %vm2266, %v2010, %v2074
      %v2331 = vsel %vm2267, %v2011, %v2075
      %v2332 = vsel %vm2268, %v2012, %v2076
      %v2333 = vadd.f32 %v2269, %v2301
      %v2334 = vadd.f32 %v2270, %v2302
      %v2335 = vadd.f32 %v2271, %v2303
      %v2336 = vadd.f32 %v2272, %v2304
      %v2337 = vadd.f32 %v2273, %v2305
      %v2338 = vadd.f32 %v2274, %v2306
      %v2339 = vadd.f32 %v2275, %v2307
      %v2340 = vadd.f32 %v2276, %v2308
      %v2341 = vadd.f32 %v2277, %v2309
      %v2342 = vadd.f32 %v2278, %v2310
      %v2343 = vadd.f32 %v2279, %v2311
      %v2344 = vadd.f32 %v2280, %v2312
      %v2345 = vadd.f32 %v2281, %v2313
      %v2346 = vadd.f32 %v2282, %v2314
      %v2347 = vadd.f32 %v2283, %v2315
      %v2348 = vadd.f32 %v2284, %v2316
      %v2349 = vadd.f32 %v2285, %v2317
      %v2350 = vadd.f32 %v2286, %v2318
      %v2351 = vadd.f32 %v2287, %v2319
      %v2352 = vadd.f32 %v2288, %v2320
      %v2353 = vadd.f32 %v2289, %v2321
      %v2354 = vadd.f32 %v2290, %v2322
      %v2355 = vadd.f32 %v2291, %v2323
      %v2356 = vadd.f32 %v2292, %v2324
      %v2357 = vadd.f32 %v2293, %v2325
      %v2358 = vadd.f32 %v2294, %v2326
      %v2359 = vadd.f32 %v2295, %v2327
      %v2360 = vadd.f32 %v2296, %v2328
      %v2361 = vadd.f32 %v2297, %v2329
      %v2362 = vadd.f32 %v2298, %v2330
      %v2363 = vadd.f32 %v2299, %v2331
      %v2364 = vadd.f32 %v2300, %v2332
      %v2365 = vmul.f32 %v2333, 0.5
      %v2366 = vmul.f32 %v2334, 0.5
      %v2367 = vmul.f32 %v2335, 0.5
      %v2368 = vmul.f32 %v2336, 0.5
      %v2369 = vmul.f32 %v2337, 0.5
      %v2370 = vmul.f32 %v2338, 0.5
      %v2371 = vmul.f32 %v2339, 0.5
      %v2372 = vmul.f32 %v2340, 0.5
      %v2373 = vmul.f32 %v2341, 0.5
      %v2374 = vmul.f32 %v2342, 0.5
      %v2375 = vmul.f32 %v2343, 0.5
      %v2376 = vmul.f32 %v2344, 0.5
      %v2377 = vmul.f32 %v2345, 0.5
      %v2378 = vmul.f32 %v2346, 0.5
      %v2379 = vmul.f32 %v2347, 0.5
      %v2380 = vmul.f32 %v2348, 0.5
      %v2381 = vmul.f32 %v2349, 0.5
      %v2382 = vmul.f32 %v2350, 0.5
      %v2383 = vmul.f32 %v2351, 0.5
      %v2384 = vmul.f32 %v2352, 0.5
      %v2385 = vmul.f32 %v2353, 0.5
      %v2386 = vmul.f32 %v2354, 0.5
      %v2387 = vmul.f32 %v2355, 0.5
      %v2388 = vmul.f32 %v2356, 0.5
      %v2389 = vmul.f32 %v2357, 0.5
      %v2390 = vmul.f32 %v2358, 0.5
      %v2391 = vmul.f32 %v2359, 0.5
      %v2392 = vmul.f32 %v2360, 0.5
      %v2393 = vmul.f32 %v2361, 0.5
      %v2394 = vmul.f32 %v2362, 0.5
      %v2395 = vmul.f32 %v2363, 0.5
      %v2396 = vmul.f32 %v2364, 0.5
      %v2397 = vsub.f32 %v1085, %v2365
      %v2398 = vsub.f32 %v1086, %v2366
      %v2399 = vsub.f32 %v1087, %v2367
      %v2400 = vsub.f32 %v1088, %v2368
      %v2401 = vsub.f32 %v1089, %v2369
      %v2402 = vsub.f32 %v1090, %v2370
      %v2403 = vsub.f32 %v1091, %v2371
      %v2404 = vsub.f32 %v1092, %v2372
      %v2405 = vsub.f32 %v1093, %v2373
      %v2406 = vsub.f32 %v1094, %v2374
      %v2407 = vsub.f32 %v1095, %v2375
      %v2408 = vsub.f32 %v1096, %v2376
      %v2409 = vsub.f32 %v1097, %v2377
      %v2410 = vsub.f32 %v1098, %v2378
      %v2411 = vsub.f32 %v1099, %v2379
      %v2412 = vsub.f32 %v1100, %v2380
      %v2413 = vsub.f32 %v1101, %v2381
      %v2414 = vsub.f32 %v1102, %v2382
      %v2415 = vsub.f32 %v1103, %v2383
      %v2416 = vsub.f32 %v1104, %v2384
      %v2417 = vsub.f32 %v1105, %v2385
      %v2418 = vsub.f32 %v1106, %v2386
      %v2419 = vsub.f32 %v1107, %v2387
      %v2420 = vsub.f32 %v1108, %v2388
      %v2421 = vsub.f32 %v1109, %v2389
      %v2422 = vsub.f32 %v1110, %v2390
      %v2423 = vsub.f32 %v1111, %v2391
      %v2424 = vsub.f32 %v1112, %v2392
      %v2425 = vsub.f32 %v1113, %v2393
      %v2426 = vsub.f32 %v1114, %v2394
      %v2427 = vsub.f32 %v1115, %v2395
      %v2428 = vsub.f32 %v1116, %v2396
      %v2429 = vmax.f32 %v2397, 0.0
      %v2430 = vmax.f32 %v2398, 0.0
      %v2431 = vmax.f32 %v2399, 0.0
      %v2432 = vmax.f32 %v2400, 0.0
      %v2433 = vmax.f32 %v2401, 0.0
      %v2434 = vmax.f32 %v2402, 0.0
      %v2435 = vmax.f32 %v2403, 0.0
      %v2436 = vmax.f32 %v2404, 0.0
      %v2437 = vmax.f32 %v2405, 0.0
      %v2438 = vmax.f32 %v2406, 0.0
      %v2439 = vmax.f32 %v2407, 0.0
      %v2440 = vmax.f32 %v2408, 0.0
      %v2441 = vmax.f32 %v2409, 0.0
      %v2442 = vmax.f32 %v2410, 0.0
      %v2443 = vmax.f32 %v2411, 0.0
      %v2444 = vmax.f32 %v2412, 0.0
      %v2445 = vmax.f32 %v2413, 0.0
      %v2446 = vmax.f32 %v2414, 0.0
      %v2447 = vmax.f32 %v2415, 0.0
      %v2448 = vmax.f32 %v2416, 0.0
      %v2449 = vmax.f32 %v2417, 0.0
      %v2450 = vmax.f32 %v2418, 0.0
      %v2451 = vmax.f32 %v2419, 0.0
      %v2452 = vmax.f32 %v2420, 0.0
      %v2453 = vmax.f32 %v2421, 0.0
      %v2454 = vmax.f32 %v2422, 0.0
      %v2455 = vmax.f32 %v2423, 0.0
      %v2456 = vmax.f32 %v2424, 0.0
      %v2457 = vmax.f32 %v2425, 0.0
      %v2458 = vmax.f32 %v2426, 0.0
      %v2459 = vmax.f32 %v2427, 0.0
      %v2460 = vmax.f32 %v2428, 0.0
      %v2461 = vsel %vm589, %v2429, 0.0
      %2462 = vadd.xlane.f32.xlu0 %v2461
      %v2463 = vpop.xlane.xlu0 %2462
      %v2464 = vsel %vm589, %v2430, 0.0
      %2465 = vadd.xlane.f32.xlu0 %v2464
      %v2466 = vpop.xlane.xlu0 %2465
      %v2467 = vsel %vm589, %v2431, 0.0
      %2468 = vadd.xlane.f32.xlu0 %v2467
      %v2469 = vpop.xlane.xlu0 %2468
      %v2470 = vsel %vm589, %v2432, 0.0
      %2471 = vadd.xlane.f32.xlu0 %v2470
      %v2472 = vpop.xlane.xlu0 %2471
      %v2473 = vsel %vm589, %v2433, 0.0
      %2474 = vadd.xlane.f32.xlu0 %v2473
      %v2475 = vpop.xlane.xlu0 %2474
      %v2476 = vsel %vm589, %v2434, 0.0
      %2477 = vadd.xlane.f32.xlu0 %v2476
      %v2478 = vpop.xlane.xlu0 %2477
      %v2479 = vsel %vm589, %v2435, 0.0
      %2480 = vadd.xlane.f32.xlu0 %v2479
      %v2481 = vpop.xlane.xlu0 %2480
      %v2482 = vsel %vm589, %v2436, 0.0
      %2483 = vadd.xlane.f32.xlu0 %v2482
      %v2484 = vpop.xlane.xlu0 %2483
      %v2485 = vsel %vm589, %v2437, 0.0
      %2486 = vadd.xlane.f32.xlu0 %v2485
      %v2487 = vpop.xlane.xlu0 %2486
      %v2488 = vsel %vm589, %v2438, 0.0
      %2489 = vadd.xlane.f32.xlu0 %v2488
      %v2490 = vpop.xlane.xlu0 %2489
      %v2491 = vsel %vm589, %v2439, 0.0
      %2492 = vadd.xlane.f32.xlu0 %v2491
      %v2493 = vpop.xlane.xlu0 %2492
      %v2494 = vsel %vm589, %v2440, 0.0
      %2495 = vadd.xlane.f32.xlu0 %v2494
      %v2496 = vpop.xlane.xlu0 %2495
      %v2497 = vsel %vm589, %v2441, 0.0
      %2498 = vadd.xlane.f32.xlu0 %v2497
      %v2499 = vpop.xlane.xlu0 %2498
      %v2500 = vsel %vm589, %v2442, 0.0
      %2501 = vadd.xlane.f32.xlu0 %v2500
      %v2502 = vpop.xlane.xlu0 %2501
      %v2503 = vsel %vm589, %v2443, 0.0
      %2504 = vadd.xlane.f32.xlu0 %v2503
      %v2505 = vpop.xlane.xlu0 %2504
      %v2506 = vsel %vm589, %v2444, 0.0
      %2507 = vadd.xlane.f32.xlu0 %v2506
      %v2508 = vpop.xlane.xlu0 %2507
      %v2509 = vsel %vm589, %v2445, 0.0
      %2510 = vadd.xlane.f32.xlu0 %v2509
      %v2511 = vpop.xlane.xlu0 %2510
      %v2512 = vsel %vm589, %v2446, 0.0
      %2513 = vadd.xlane.f32.xlu0 %v2512
      %v2514 = vpop.xlane.xlu0 %2513
      %v2515 = vsel %vm589, %v2447, 0.0
      %2516 = vadd.xlane.f32.xlu0 %v2515
      %v2517 = vpop.xlane.xlu0 %2516
      %v2518 = vsel %vm589, %v2448, 0.0
      %2519 = vadd.xlane.f32.xlu0 %v2518
      %v2520 = vpop.xlane.xlu0 %2519
      %v2521 = vsel %vm589, %v2449, 0.0
      %2522 = vadd.xlane.f32.xlu0 %v2521
      %v2523 = vpop.xlane.xlu0 %2522
      %v2524 = vsel %vm589, %v2450, 0.0
      %2525 = vadd.xlane.f32.xlu0 %v2524
      %v2526 = vpop.xlane.xlu0 %2525
      %v2527 = vsel %vm589, %v2451, 0.0
      %2528 = vadd.xlane.f32.xlu0 %v2527
      %v2529 = vpop.xlane.xlu0 %2528
      %v2530 = vsel %vm589, %v2452, 0.0
      %2531 = vadd.xlane.f32.xlu0 %v2530
      %v2532 = vpop.xlane.xlu0 %2531
      %v2533 = vsel %vm589, %v2453, 0.0
      %2534 = vadd.xlane.f32.xlu0 %v2533
      %v2535 = vpop.xlane.xlu0 %2534
      %v2536 = vsel %vm589, %v2454, 0.0
      %2537 = vadd.xlane.f32.xlu0 %v2536
      %v2538 = vpop.xlane.xlu0 %2537
      %v2539 = vsel %vm589, %v2455, 0.0
      %2540 = vadd.xlane.f32.xlu0 %v2539
      %v2541 = vpop.xlane.xlu0 %2540
      %v2542 = vsel %vm589, %v2456, 0.0
      %2543 = vadd.xlane.f32.xlu0 %v2542
      %v2544 = vpop.xlane.xlu0 %2543
      %v2545 = vsel %vm589, %v2457, 0.0
      %2546 = vadd.xlane.f32.xlu0 %v2545
      %v2547 = vpop.xlane.xlu0 %2546
      %v2548 = vsel %vm589, %v2458, 0.0
      %2549 = vadd.xlane.f32.xlu0 %v2548
      %v2550 = vpop.xlane.xlu0 %2549
      %v2551 = vsel %vm589, %v2459, 0.0
      %2552 = vadd.xlane.f32.xlu0 %v2551
      %v2553 = vpop.xlane.xlu0 %2552
      %v2554 = vsel %vm589, %v2460, 0.0
      %2555 = vadd.xlane.f32.xlu0 %v2554
      %v2556 = vpop.xlane.xlu0 %2555
      %vm2557 = vcmp.ge.f32.partialorder %v2463, 1.0
      %vm2558 = vcmp.ge.f32.partialorder %v2466, 1.0
      %vm2559 = vcmp.ge.f32.partialorder %v2469, 1.0
      %vm2560 = vcmp.ge.f32.partialorder %v2472, 1.0
      %vm2561 = vcmp.ge.f32.partialorder %v2475, 1.0
      %vm2562 = vcmp.ge.f32.partialorder %v2478, 1.0
      %vm2563 = vcmp.ge.f32.partialorder %v2481, 1.0
      %vm2564 = vcmp.ge.f32.partialorder %v2484, 1.0
      %vm2565 = vcmp.ge.f32.partialorder %v2487, 1.0
      %vm2566 = vcmp.ge.f32.partialorder %v2490, 1.0
      %vm2567 = vcmp.ge.f32.partialorder %v2493, 1.0
      %vm2568 = vcmp.ge.f32.partialorder %v2496, 1.0
      %vm2569 = vcmp.ge.f32.partialorder %v2499, 1.0
      %vm2570 = vcmp.ge.f32.partialorder %v2502, 1.0
      %vm2571 = vcmp.ge.f32.partialorder %v2505, 1.0
      %vm2572 = vcmp.ge.f32.partialorder %v2508, 1.0
      %vm2573 = vcmp.ge.f32.partialorder %v2511, 1.0
      %vm2574 = vcmp.ge.f32.partialorder %v2514, 1.0
      %vm2575 = vcmp.ge.f32.partialorder %v2517, 1.0
      %vm2576 = vcmp.ge.f32.partialorder %v2520, 1.0
      %vm2577 = vcmp.ge.f32.partialorder %v2523, 1.0
      %vm2578 = vcmp.ge.f32.partialorder %v2526, 1.0
      %vm2579 = vcmp.ge.f32.partialorder %v2529, 1.0
      %vm2580 = vcmp.ge.f32.partialorder %v2532, 1.0
      %vm2581 = vcmp.ge.f32.partialorder %v2535, 1.0
      %vm2582 = vcmp.ge.f32.partialorder %v2538, 1.0
      %vm2583 = vcmp.ge.f32.partialorder %v2541, 1.0
      %vm2584 = vcmp.ge.f32.partialorder %v2544, 1.0
      %vm2585 = vcmp.ge.f32.partialorder %v2547, 1.0
      %vm2586 = vcmp.ge.f32.partialorder %v2550, 1.0
      %vm2587 = vcmp.ge.f32.partialorder %v2553, 1.0
      %vm2588 = vcmp.ge.f32.partialorder %v2556, 1.0
      %v2589 = vsel %vm2557, %v2365, %v2269
      %v2590 = vsel %vm2558, %v2366, %v2270
      %v2591 = vsel %vm2559, %v2367, %v2271
      %v2592 = vsel %vm2560, %v2368, %v2272
      %v2593 = vsel %vm2561, %v2369, %v2273
      %v2594 = vsel %vm2562, %v2370, %v2274
      %v2595 = vsel %vm2563, %v2371, %v2275
      %v2596 = vsel %vm2564, %v2372, %v2276
      %v2597 = vsel %vm2565, %v2373, %v2277
      %v2598 = vsel %vm2566, %v2374, %v2278
      %v2599 = vsel %vm2567, %v2375, %v2279
      %v2600 = vsel %vm2568, %v2376, %v2280
      %v2601 = vsel %vm2569, %v2377, %v2281
      %v2602 = vsel %vm2570, %v2378, %v2282
      %v2603 = vsel %vm2571, %v2379, %v2283
      %v2604 = vsel %vm2572, %v2380, %v2284
      %v2605 = vsel %vm2573, %v2381, %v2285
      %v2606 = vsel %vm2574, %v2382, %v2286
      %v2607 = vsel %vm2575, %v2383, %v2287
      %v2608 = vsel %vm2576, %v2384, %v2288
      %v2609 = vsel %vm2577, %v2385, %v2289
      %v2610 = vsel %vm2578, %v2386, %v2290
      %v2611 = vsel %vm2579, %v2387, %v2291
      %v2612 = vsel %vm2580, %v2388, %v2292
      %v2613 = vsel %vm2581, %v2389, %v2293
      %v2614 = vsel %vm2582, %v2390, %v2294
      %v2615 = vsel %vm2583, %v2391, %v2295
      %v2616 = vsel %vm2584, %v2392, %v2296
      %v2617 = vsel %vm2585, %v2393, %v2297
      %v2618 = vsel %vm2586, %v2394, %v2298
      %v2619 = vsel %vm2587, %v2395, %v2299
      %v2620 = vsel %vm2588, %v2396, %v2300
      %v2621 = vsel %vm2557, %v2301, %v2365
      %v2622 = vsel %vm2558, %v2302, %v2366
      %v2623 = vsel %vm2559, %v2303, %v2367
      %v2624 = vsel %vm2560, %v2304, %v2368
      %v2625 = vsel %vm2561, %v2305, %v2369
      %v2626 = vsel %vm2562, %v2306, %v2370
      %v2627 = vsel %vm2563, %v2307, %v2371
      %v2628 = vsel %vm2564, %v2308, %v2372
      %v2629 = vsel %vm2565, %v2309, %v2373
      %v2630 = vsel %vm2566, %v2310, %v2374
      %v2631 = vsel %vm2567, %v2311, %v2375
      %v2632 = vsel %vm2568, %v2312, %v2376
      %v2633 = vsel %vm2569, %v2313, %v2377
      %v2634 = vsel %vm2570, %v2314, %v2378
      %v2635 = vsel %vm2571, %v2315, %v2379
      %v2636 = vsel %vm2572, %v2316, %v2380
      %v2637 = vsel %vm2573, %v2317, %v2381
      %v2638 = vsel %vm2574, %v2318, %v2382
      %v2639 = vsel %vm2575, %v2319, %v2383
      %v2640 = vsel %vm2576, %v2320, %v2384
      %v2641 = vsel %vm2577, %v2321, %v2385
      %v2642 = vsel %vm2578, %v2322, %v2386
      %v2643 = vsel %vm2579, %v2323, %v2387
      %v2644 = vsel %vm2580, %v2324, %v2388
      %v2645 = vsel %vm2581, %v2325, %v2389
      %v2646 = vsel %vm2582, %v2326, %v2390
      %v2647 = vsel %vm2583, %v2327, %v2391
      %v2648 = vsel %vm2584, %v2328, %v2392
      %v2649 = vsel %vm2585, %v2329, %v2393
      %v2650 = vsel %vm2586, %v2330, %v2394
      %v2651 = vsel %vm2587, %v2331, %v2395
      %v2652 = vsel %vm2588, %v2332, %v2396
      %v2653 = vadd.f32 %v2589, %v2621
      %v2654 = vadd.f32 %v2590, %v2622
      %v2655 = vadd.f32 %v2591, %v2623
      %v2656 = vadd.f32 %v2592, %v2624
      %v2657 = vadd.f32 %v2593, %v2625
      %v2658 = vadd.f32 %v2594, %v2626
      %v2659 = vadd.f32 %v2595, %v2627
      %v2660 = vadd.f32 %v2596, %v2628
      %v2661 = vadd.f32 %v2597, %v2629
      %v2662 = vadd.f32 %v2598, %v2630
      %v2663 = vadd.f32 %v2599, %v2631
      %v2664 = vadd.f32 %v2600, %v2632
      %v2665 = vadd.f32 %v2601, %v2633
      %v2666 = vadd.f32 %v2602, %v2634
      %v2667 = vadd.f32 %v2603, %v2635
      %v2668 = vadd.f32 %v2604, %v2636
      %v2669 = vadd.f32 %v2605, %v2637
      %v2670 = vadd.f32 %v2606, %v2638
      %v2671 = vadd.f32 %v2607, %v2639
      %v2672 = vadd.f32 %v2608, %v2640
      %v2673 = vadd.f32 %v2609, %v2641
      %v2674 = vadd.f32 %v2610, %v2642
      %v2675 = vadd.f32 %v2611, %v2643
      %v2676 = vadd.f32 %v2612, %v2644
      %v2677 = vadd.f32 %v2613, %v2645
      %v2678 = vadd.f32 %v2614, %v2646
      %v2679 = vadd.f32 %v2615, %v2647
      %v2680 = vadd.f32 %v2616, %v2648
      %v2681 = vadd.f32 %v2617, %v2649
      %v2682 = vadd.f32 %v2618, %v2650
      %v2683 = vadd.f32 %v2619, %v2651
      %v2684 = vadd.f32 %v2620, %v2652
      %v2685 = vmul.f32 %v2653, 0.5
      %v2686 = vmul.f32 %v2654, 0.5
      %v2687 = vmul.f32 %v2655, 0.5
      %v2688 = vmul.f32 %v2656, 0.5
      %v2689 = vmul.f32 %v2657, 0.5
      %v2690 = vmul.f32 %v2658, 0.5
      %v2691 = vmul.f32 %v2659, 0.5
      %v2692 = vmul.f32 %v2660, 0.5
      %v2693 = vmul.f32 %v2661, 0.5
      %v2694 = vmul.f32 %v2662, 0.5
      %v2695 = vmul.f32 %v2663, 0.5
      %v2696 = vmul.f32 %v2664, 0.5
      %v2697 = vmul.f32 %v2665, 0.5
      %v2698 = vmul.f32 %v2666, 0.5
      %v2699 = vmul.f32 %v2667, 0.5
      %v2700 = vmul.f32 %v2668, 0.5
      %v2701 = vmul.f32 %v2669, 0.5
      %v2702 = vmul.f32 %v2670, 0.5
      %v2703 = vmul.f32 %v2671, 0.5
      %v2704 = vmul.f32 %v2672, 0.5
      %v2705 = vmul.f32 %v2673, 0.5
      %v2706 = vmul.f32 %v2674, 0.5
      %v2707 = vmul.f32 %v2675, 0.5
      %v2708 = vmul.f32 %v2676, 0.5
      %v2709 = vmul.f32 %v2677, 0.5
      %v2710 = vmul.f32 %v2678, 0.5
      %v2711 = vmul.f32 %v2679, 0.5
      %v2712 = vmul.f32 %v2680, 0.5
      %v2713 = vmul.f32 %v2681, 0.5
      %v2714 = vmul.f32 %v2682, 0.5
      %v2715 = vmul.f32 %v2683, 0.5
      %v2716 = vmul.f32 %v2684, 0.5
      %v2717 = vsub.f32 %v1085, %v2685
      %v2718 = vsub.f32 %v1086, %v2686
      %v2719 = vsub.f32 %v1087, %v2687
      %v2720 = vsub.f32 %v1088, %v2688
      %v2721 = vsub.f32 %v1089, %v2689
      %v2722 = vsub.f32 %v1090, %v2690
      %v2723 = vsub.f32 %v1091, %v2691
      %v2724 = vsub.f32 %v1092, %v2692
      %v2725 = vsub.f32 %v1093, %v2693
      %v2726 = vsub.f32 %v1094, %v2694
      %v2727 = vsub.f32 %v1095, %v2695
      %v2728 = vsub.f32 %v1096, %v2696
      %v2729 = vsub.f32 %v1097, %v2697
      %v2730 = vsub.f32 %v1098, %v2698
      %v2731 = vsub.f32 %v1099, %v2699
      %v2732 = vsub.f32 %v1100, %v2700
      %v2733 = vsub.f32 %v1101, %v2701
      %v2734 = vsub.f32 %v1102, %v2702
      %v2735 = vsub.f32 %v1103, %v2703
      %v2736 = vsub.f32 %v1104, %v2704
      %v2737 = vsub.f32 %v1105, %v2705
      %v2738 = vsub.f32 %v1106, %v2706
      %v2739 = vsub.f32 %v1107, %v2707
      %v2740 = vsub.f32 %v1108, %v2708
      %v2741 = vsub.f32 %v1109, %v2709
      %v2742 = vsub.f32 %v1110, %v2710
      %v2743 = vsub.f32 %v1111, %v2711
      %v2744 = vsub.f32 %v1112, %v2712
      %v2745 = vsub.f32 %v1113, %v2713
      %v2746 = vsub.f32 %v1114, %v2714
      %v2747 = vsub.f32 %v1115, %v2715
      %v2748 = vsub.f32 %v1116, %v2716
      %v2749 = vmax.f32 %v2717, 0.0
      %v2750 = vmax.f32 %v2718, 0.0
      %v2751 = vmax.f32 %v2719, 0.0
      %v2752 = vmax.f32 %v2720, 0.0
      %v2753 = vmax.f32 %v2721, 0.0
      %v2754 = vmax.f32 %v2722, 0.0
      %v2755 = vmax.f32 %v2723, 0.0
      %v2756 = vmax.f32 %v2724, 0.0
      %v2757 = vmax.f32 %v2725, 0.0
      %v2758 = vmax.f32 %v2726, 0.0
      %v2759 = vmax.f32 %v2727, 0.0
      %v2760 = vmax.f32 %v2728, 0.0
      %v2761 = vmax.f32 %v2729, 0.0
      %v2762 = vmax.f32 %v2730, 0.0
      %v2763 = vmax.f32 %v2731, 0.0
      %v2764 = vmax.f32 %v2732, 0.0
      %v2765 = vmax.f32 %v2733, 0.0
      %v2766 = vmax.f32 %v2734, 0.0
      %v2767 = vmax.f32 %v2735, 0.0
      %v2768 = vmax.f32 %v2736, 0.0
      %v2769 = vmax.f32 %v2737, 0.0
      %v2770 = vmax.f32 %v2738, 0.0
      %v2771 = vmax.f32 %v2739, 0.0
      %v2772 = vmax.f32 %v2740, 0.0
      %v2773 = vmax.f32 %v2741, 0.0
      %v2774 = vmax.f32 %v2742, 0.0
      %v2775 = vmax.f32 %v2743, 0.0
      %v2776 = vmax.f32 %v2744, 0.0
      %v2777 = vmax.f32 %v2745, 0.0
      %v2778 = vmax.f32 %v2746, 0.0
      %v2779 = vmax.f32 %v2747, 0.0
      %v2780 = vmax.f32 %v2748, 0.0
      %v2781 = vsel %vm589, %v2749, 0.0
      %2782 = vadd.xlane.f32.xlu0 %v2781
      %v2783 = vpop.xlane.xlu0 %2782
      %v2784 = vsel %vm589, %v2750, 0.0
      %2785 = vadd.xlane.f32.xlu0 %v2784
      %v2786 = vpop.xlane.xlu0 %2785
      %v2787 = vsel %vm589, %v2751, 0.0
      %2788 = vadd.xlane.f32.xlu0 %v2787
      %v2789 = vpop.xlane.xlu0 %2788
      %v2790 = vsel %vm589, %v2752, 0.0
      %2791 = vadd.xlane.f32.xlu0 %v2790
      %v2792 = vpop.xlane.xlu0 %2791
      %v2793 = vsel %vm589, %v2753, 0.0
      %2794 = vadd.xlane.f32.xlu0 %v2793
      %v2795 = vpop.xlane.xlu0 %2794
      %v2796 = vsel %vm589, %v2754, 0.0
      %2797 = vadd.xlane.f32.xlu0 %v2796
      %v2798 = vpop.xlane.xlu0 %2797
      %v2799 = vsel %vm589, %v2755, 0.0
      %2800 = vadd.xlane.f32.xlu0 %v2799
      %v2801 = vpop.xlane.xlu0 %2800
      %v2802 = vsel %vm589, %v2756, 0.0
      %2803 = vadd.xlane.f32.xlu0 %v2802
      %v2804 = vpop.xlane.xlu0 %2803
      %v2805 = vsel %vm589, %v2757, 0.0
      %2806 = vadd.xlane.f32.xlu0 %v2805
      %v2807 = vpop.xlane.xlu0 %2806
      %v2808 = vsel %vm589, %v2758, 0.0
      %2809 = vadd.xlane.f32.xlu0 %v2808
      %v2810 = vpop.xlane.xlu0 %2809
      %v2811 = vsel %vm589, %v2759, 0.0
      %2812 = vadd.xlane.f32.xlu0 %v2811
      %v2813 = vpop.xlane.xlu0 %2812
      %v2814 = vsel %vm589, %v2760, 0.0
      %2815 = vadd.xlane.f32.xlu0 %v2814
      %v2816 = vpop.xlane.xlu0 %2815
      %v2817 = vsel %vm589, %v2761, 0.0
      %2818 = vadd.xlane.f32.xlu0 %v2817
      %v2819 = vpop.xlane.xlu0 %2818
      %v2820 = vsel %vm589, %v2762, 0.0
      %2821 = vadd.xlane.f32.xlu0 %v2820
      %v2822 = vpop.xlane.xlu0 %2821
      %v2823 = vsel %vm589, %v2763, 0.0
      %2824 = vadd.xlane.f32.xlu0 %v2823
      %v2825 = vpop.xlane.xlu0 %2824
      %v2826 = vsel %vm589, %v2764, 0.0
      %2827 = vadd.xlane.f32.xlu0 %v2826
      %v2828 = vpop.xlane.xlu0 %2827
      %v2829 = vsel %vm589, %v2765, 0.0
      %2830 = vadd.xlane.f32.xlu0 %v2829
      %v2831 = vpop.xlane.xlu0 %2830
      %v2832 = vsel %vm589, %v2766, 0.0
      %2833 = vadd.xlane.f32.xlu0 %v2832
      %v2834 = vpop.xlane.xlu0 %2833
      %v2835 = vsel %vm589, %v2767, 0.0
      %2836 = vadd.xlane.f32.xlu0 %v2835
      %v2837 = vpop.xlane.xlu0 %2836
      %v2838 = vsel %vm589, %v2768, 0.0
      %2839 = vadd.xlane.f32.xlu0 %v2838
      %v2840 = vpop.xlane.xlu0 %2839
      %v2841 = vsel %vm589, %v2769, 0.0
      %2842 = vadd.xlane.f32.xlu0 %v2841
      %v2843 = vpop.xlane.xlu0 %2842
      %v2844 = vsel %vm589, %v2770, 0.0
      %2845 = vadd.xlane.f32.xlu0 %v2844
      %v2846 = vpop.xlane.xlu0 %2845
      %v2847 = vsel %vm589, %v2771, 0.0
      %2848 = vadd.xlane.f32.xlu0 %v2847
      %v2849 = vpop.xlane.xlu0 %2848
      %v2850 = vsel %vm589, %v2772, 0.0
      %2851 = vadd.xlane.f32.xlu0 %v2850
      %v2852 = vpop.xlane.xlu0 %2851
      %v2853 = vsel %vm589, %v2773, 0.0
      %2854 = vadd.xlane.f32.xlu0 %v2853
      %v2855 = vpop.xlane.xlu0 %2854
      %v2856 = vsel %vm589, %v2774, 0.0
      %2857 = vadd.xlane.f32.xlu0 %v2856
      %v2858 = vpop.xlane.xlu0 %2857
      %v2859 = vsel %vm589, %v2775, 0.0
      %2860 = vadd.xlane.f32.xlu0 %v2859
      %v2861 = vpop.xlane.xlu0 %2860
      %v2862 = vsel %vm589, %v2776, 0.0
      %2863 = vadd.xlane.f32.xlu0 %v2862
      %v2864 = vpop.xlane.xlu0 %2863
      %v2865 = vsel %vm589, %v2777, 0.0
      %2866 = vadd.xlane.f32.xlu0 %v2865
      %v2867 = vpop.xlane.xlu0 %2866
      %v2868 = vsel %vm589, %v2778, 0.0
      %2869 = vadd.xlane.f32.xlu0 %v2868
      %v2870 = vpop.xlane.xlu0 %2869
      %v2871 = vsel %vm589, %v2779, 0.0
      %2872 = vadd.xlane.f32.xlu0 %v2871
      %v2873 = vpop.xlane.xlu0 %2872
      %v2874 = vsel %vm589, %v2780, 0.0
      %2875 = vadd.xlane.f32.xlu0 %v2874
      %v2876 = vpop.xlane.xlu0 %2875
      %vm2877 = vcmp.ge.f32.partialorder %v2783, 1.0
      %vm2878 = vcmp.ge.f32.partialorder %v2786, 1.0
      %vm2879 = vcmp.ge.f32.partialorder %v2789, 1.0
      %vm2880 = vcmp.ge.f32.partialorder %v2792, 1.0
      %vm2881 = vcmp.ge.f32.partialorder %v2795, 1.0
      %vm2882 = vcmp.ge.f32.partialorder %v2798, 1.0
      %vm2883 = vcmp.ge.f32.partialorder %v2801, 1.0
      %vm2884 = vcmp.ge.f32.partialorder %v2804, 1.0
      %vm2885 = vcmp.ge.f32.partialorder %v2807, 1.0
      %vm2886 = vcmp.ge.f32.partialorder %v2810, 1.0
      %vm2887 = vcmp.ge.f32.partialorder %v2813, 1.0
      %vm2888 = vcmp.ge.f32.partialorder %v2816, 1.0
      %vm2889 = vcmp.ge.f32.partialorder %v2819, 1.0
      %vm2890 = vcmp.ge.f32.partialorder %v2822, 1.0
      %vm2891 = vcmp.ge.f32.partialorder %v2825, 1.0
      %vm2892 = vcmp.ge.f32.partialorder %v2828, 1.0
      %vm2893 = vcmp.ge.f32.partialorder %v2831, 1.0
      %vm2894 = vcmp.ge.f32.partialorder %v2834, 1.0
      %vm2895 = vcmp.ge.f32.partialorder %v2837, 1.0
      %vm2896 = vcmp.ge.f32.partialorder %v2840, 1.0
      %vm2897 = vcmp.ge.f32.partialorder %v2843, 1.0
      %vm2898 = vcmp.ge.f32.partialorder %v2846, 1.0
      %vm2899 = vcmp.ge.f32.partialorder %v2849, 1.0
      %vm2900 = vcmp.ge.f32.partialorder %v2852, 1.0
      %vm2901 = vcmp.ge.f32.partialorder %v2855, 1.0
      %vm2902 = vcmp.ge.f32.partialorder %v2858, 1.0
      %vm2903 = vcmp.ge.f32.partialorder %v2861, 1.0
      %vm2904 = vcmp.ge.f32.partialorder %v2864, 1.0
      %vm2905 = vcmp.ge.f32.partialorder %v2867, 1.0
      %vm2906 = vcmp.ge.f32.partialorder %v2870, 1.0
      %vm2907 = vcmp.ge.f32.partialorder %v2873, 1.0
      %vm2908 = vcmp.ge.f32.partialorder %v2876, 1.0
      %v2909 = vsel %vm2877, %v2685, %v2589
      %v2910 = vsel %vm2878, %v2686, %v2590
      %v2911 = vsel %vm2879, %v2687, %v2591
      %v2912 = vsel %vm2880, %v2688, %v2592
      %v2913 = vsel %vm2881, %v2689, %v2593
      %v2914 = vsel %vm2882, %v2690, %v2594
      %v2915 = vsel %vm2883, %v2691, %v2595
      %v2916 = vsel %vm2884, %v2692, %v2596
      %v2917 = vsel %vm2885, %v2693, %v2597
      %v2918 = vsel %vm2886, %v2694, %v2598
      %v2919 = vsel %vm2887, %v2695, %v2599
      %v2920 = vsel %vm2888, %v2696, %v2600
      %v2921 = vsel %vm2889, %v2697, %v2601
      %v2922 = vsel %vm2890, %v2698, %v2602
      %v2923 = vsel %vm2891, %v2699, %v2603
      %v2924 = vsel %vm2892, %v2700, %v2604
      %v2925 = vsel %vm2893, %v2701, %v2605
      %v2926 = vsel %vm2894, %v2702, %v2606
      %v2927 = vsel %vm2895, %v2703, %v2607
      %v2928 = vsel %vm2896, %v2704, %v2608
      %v2929 = vsel %vm2897, %v2705, %v2609
      %v2930 = vsel %vm2898, %v2706, %v2610
      %v2931 = vsel %vm2899, %v2707, %v2611
      %v2932 = vsel %vm2900, %v2708, %v2612
      %v2933 = vsel %vm2901, %v2709, %v2613
      %v2934 = vsel %vm2902, %v2710, %v2614
      %v2935 = vsel %vm2903, %v2711, %v2615
      %v2936 = vsel %vm2904, %v2712, %v2616
      %v2937 = vsel %vm2905, %v2713, %v2617
      %v2938 = vsel %vm2906, %v2714, %v2618
      %v2939 = vsel %vm2907, %v2715, %v2619
      %v2940 = vsel %vm2908, %v2716, %v2620
      %v2941 = vsel %vm2877, %v2621, %v2685
      %v2942 = vsel %vm2878, %v2622, %v2686
      %v2943 = vsel %vm2879, %v2623, %v2687
      %v2944 = vsel %vm2880, %v2624, %v2688
      %v2945 = vsel %vm2881, %v2625, %v2689
      %v2946 = vsel %vm2882, %v2626, %v2690
      %v2947 = vsel %vm2883, %v2627, %v2691
      %v2948 = vsel %vm2884, %v2628, %v2692
      %v2949 = vsel %vm2885, %v2629, %v2693
      %v2950 = vsel %vm2886, %v2630, %v2694
      %v2951 = vsel %vm2887, %v2631, %v2695
      %v2952 = vsel %vm2888, %v2632, %v2696
      %v2953 = vsel %vm2889, %v2633, %v2697
      %v2954 = vsel %vm2890, %v2634, %v2698
      %v2955 = vsel %vm2891, %v2635, %v2699
      %v2956 = vsel %vm2892, %v2636, %v2700
      %v2957 = vsel %vm2893, %v2637, %v2701
      %v2958 = vsel %vm2894, %v2638, %v2702
      %v2959 = vsel %vm2895, %v2639, %v2703
      %v2960 = vsel %vm2896, %v2640, %v2704
      %v2961 = vsel %vm2897, %v2641, %v2705
      %v2962 = vsel %vm2898, %v2642, %v2706
      %v2963 = vsel %vm2899, %v2643, %v2707
      %v2964 = vsel %vm2900, %v2644, %v2708
      %v2965 = vsel %vm2901, %v2645, %v2709
      %v2966 = vsel %vm2902, %v2646, %v2710
      %v2967 = vsel %vm2903, %v2647, %v2711
      %v2968 = vsel %vm2904, %v2648, %v2712
      %v2969 = vsel %vm2905, %v2649, %v2713
      %v2970 = vsel %vm2906, %v2650, %v2714
      %v2971 = vsel %vm2907, %v2651, %v2715
      %v2972 = vsel %vm2908, %v2652, %v2716
      %v2973 = vadd.f32 %v2909, %v2941
      %v2974 = vadd.f32 %v2910, %v2942
      %v2975 = vadd.f32 %v2911, %v2943
      %v2976 = vadd.f32 %v2912, %v2944
      %v2977 = vadd.f32 %v2913, %v2945
      %v2978 = vadd.f32 %v2914, %v2946
      %v2979 = vadd.f32 %v2915, %v2947
      %v2980 = vadd.f32 %v2916, %v2948
      %v2981 = vadd.f32 %v2917, %v2949
      %v2982 = vadd.f32 %v2918, %v2950
      %v2983 = vadd.f32 %v2919, %v2951
      %v2984 = vadd.f32 %v2920, %v2952
      %v2985 = vadd.f32 %v2921, %v2953
      %v2986 = vadd.f32 %v2922, %v2954
      %v2987 = vadd.f32 %v2923, %v2955
      %v2988 = vadd.f32 %v2924, %v2956
      %v2989 = vadd.f32 %v2925, %v2957
      %v2990 = vadd.f32 %v2926, %v2958
      %v2991 = vadd.f32 %v2927, %v2959
      %v2992 = vadd.f32 %v2928, %v2960
      %v2993 = vadd.f32 %v2929, %v2961
      %v2994 = vadd.f32 %v2930, %v2962
      %v2995 = vadd.f32 %v2931, %v2963
      %v2996 = vadd.f32 %v2932, %v2964
      %v2997 = vadd.f32 %v2933, %v2965
      %v2998 = vadd.f32 %v2934, %v2966
      %v2999 = vadd.f32 %v2935, %v2967
      %v3000 = vadd.f32 %v2936, %v2968
      %v3001 = vadd.f32 %v2937, %v2969
      %v3002 = vadd.f32 %v2938, %v2970
      %v3003 = vadd.f32 %v2939, %v2971
      %v3004 = vadd.f32 %v2940, %v2972
      %v3005 = vmul.f32 %v2973, 0.5
      %v3006 = vmul.f32 %v2974, 0.5
      %v3007 = vmul.f32 %v2975, 0.5
      %v3008 = vmul.f32 %v2976, 0.5
      %v3009 = vmul.f32 %v2977, 0.5
      %v3010 = vmul.f32 %v2978, 0.5
      %v3011 = vmul.f32 %v2979, 0.5
      %v3012 = vmul.f32 %v2980, 0.5
      %v3013 = vmul.f32 %v2981, 0.5
      %v3014 = vmul.f32 %v2982, 0.5
      %v3015 = vmul.f32 %v2983, 0.5
      %v3016 = vmul.f32 %v2984, 0.5
      %v3017 = vmul.f32 %v2985, 0.5
      %v3018 = vmul.f32 %v2986, 0.5
      %v3019 = vmul.f32 %v2987, 0.5
      %v3020 = vmul.f32 %v2988, 0.5
      %v3021 = vmul.f32 %v2989, 0.5
      %v3022 = vmul.f32 %v2990, 0.5
      %v3023 = vmul.f32 %v2991, 0.5
      %v3024 = vmul.f32 %v2992, 0.5
      %v3025 = vmul.f32 %v2993, 0.5
      %v3026 = vmul.f32 %v2994, 0.5
      %v3027 = vmul.f32 %v2995, 0.5
      %v3028 = vmul.f32 %v2996, 0.5
      %v3029 = vmul.f32 %v2997, 0.5
      %v3030 = vmul.f32 %v2998, 0.5
      %v3031 = vmul.f32 %v2999, 0.5
      %v3032 = vmul.f32 %v3000, 0.5
      %v3033 = vmul.f32 %v3001, 0.5
      %v3034 = vmul.f32 %v3002, 0.5
      %v3035 = vmul.f32 %v3003, 0.5
      %v3036 = vmul.f32 %v3004, 0.5
      %v3037 = vsub.f32 %v1085, %v3005
      %v3038 = vsub.f32 %v1086, %v3006
      %v3039 = vsub.f32 %v1087, %v3007
      %v3040 = vsub.f32 %v1088, %v3008
      %v3041 = vsub.f32 %v1089, %v3009
      %v3042 = vsub.f32 %v1090, %v3010
      %v3043 = vsub.f32 %v1091, %v3011
      %v3044 = vsub.f32 %v1092, %v3012
      %v3045 = vsub.f32 %v1093, %v3013
      %v3046 = vsub.f32 %v1094, %v3014
      %v3047 = vsub.f32 %v1095, %v3015
      %v3048 = vsub.f32 %v1096, %v3016
      %v3049 = vsub.f32 %v1097, %v3017
      %v3050 = vsub.f32 %v1098, %v3018
      %v3051 = vsub.f32 %v1099, %v3019
      %v3052 = vsub.f32 %v1100, %v3020
      %v3053 = vsub.f32 %v1101, %v3021
      %v3054 = vsub.f32 %v1102, %v3022
      %v3055 = vsub.f32 %v1103, %v3023
      %v3056 = vsub.f32 %v1104, %v3024
      %v3057 = vsub.f32 %v1105, %v3025
      %v3058 = vsub.f32 %v1106, %v3026
      %v3059 = vsub.f32 %v1107, %v3027
      %v3060 = vsub.f32 %v1108, %v3028
      %v3061 = vsub.f32 %v1109, %v3029
      %v3062 = vsub.f32 %v1110, %v3030
      %v3063 = vsub.f32 %v1111, %v3031
      %v3064 = vsub.f32 %v1112, %v3032
      %v3065 = vsub.f32 %v1113, %v3033
      %v3066 = vsub.f32 %v1114, %v3034
      %v3067 = vsub.f32 %v1115, %v3035
      %v3068 = vsub.f32 %v1116, %v3036
      %v3069 = vmax.f32 %v3037, 0.0
      %v3070 = vmax.f32 %v3038, 0.0
      %v3071 = vmax.f32 %v3039, 0.0
      %v3072 = vmax.f32 %v3040, 0.0
      %v3073 = vmax.f32 %v3041, 0.0
      %v3074 = vmax.f32 %v3042, 0.0
      %v3075 = vmax.f32 %v3043, 0.0
      %v3076 = vmax.f32 %v3044, 0.0
      %v3077 = vmax.f32 %v3045, 0.0
      %v3078 = vmax.f32 %v3046, 0.0
      %v3079 = vmax.f32 %v3047, 0.0
      %v3080 = vmax.f32 %v3048, 0.0
      %v3081 = vmax.f32 %v3049, 0.0
      %v3082 = vmax.f32 %v3050, 0.0
      %v3083 = vmax.f32 %v3051, 0.0
      %v3084 = vmax.f32 %v3052, 0.0
      %v3085 = vmax.f32 %v3053, 0.0
      %v3086 = vmax.f32 %v3054, 0.0
      %v3087 = vmax.f32 %v3055, 0.0
      %v3088 = vmax.f32 %v3056, 0.0
      %v3089 = vmax.f32 %v3057, 0.0
      %v3090 = vmax.f32 %v3058, 0.0
      %v3091 = vmax.f32 %v3059, 0.0
      %v3092 = vmax.f32 %v3060, 0.0
      %v3093 = vmax.f32 %v3061, 0.0
      %v3094 = vmax.f32 %v3062, 0.0
      %v3095 = vmax.f32 %v3063, 0.0
      %v3096 = vmax.f32 %v3064, 0.0
      %v3097 = vmax.f32 %v3065, 0.0
      %v3098 = vmax.f32 %v3066, 0.0
      %v3099 = vmax.f32 %v3067, 0.0
      %v3100 = vmax.f32 %v3068, 0.0
      %v3101 = vsel %vm589, %v3069, 0.0
      %3102 = vadd.xlane.f32.xlu0 %v3101
      %v3103 = vpop.xlane.xlu0 %3102
      %v3104 = vsel %vm589, %v3070, 0.0
      %3105 = vadd.xlane.f32.xlu0 %v3104
      %v3106 = vpop.xlane.xlu0 %3105
      %v3107 = vsel %vm589, %v3071, 0.0
      %3108 = vadd.xlane.f32.xlu0 %v3107
      %v3109 = vpop.xlane.xlu0 %3108
      %v3110 = vsel %vm589, %v3072, 0.0
      %3111 = vadd.xlane.f32.xlu0 %v3110
      %v3112 = vpop.xlane.xlu0 %3111
      %v3113 = vsel %vm589, %v3073, 0.0
      %3114 = vadd.xlane.f32.xlu0 %v3113
      %v3115 = vpop.xlane.xlu0 %3114
      %v3116 = vsel %vm589, %v3074, 0.0
      %3117 = vadd.xlane.f32.xlu0 %v3116
      %v3118 = vpop.xlane.xlu0 %3117
      %v3119 = vsel %vm589, %v3075, 0.0
      %3120 = vadd.xlane.f32.xlu0 %v3119
      %v3121 = vpop.xlane.xlu0 %3120
      %v3122 = vsel %vm589, %v3076, 0.0
      %3123 = vadd.xlane.f32.xlu0 %v3122
      %v3124 = vpop.xlane.xlu0 %3123
      %v3125 = vsel %vm589, %v3077, 0.0
      %3126 = vadd.xlane.f32.xlu0 %v3125
      %v3127 = vpop.xlane.xlu0 %3126
      %v3128 = vsel %vm589, %v3078, 0.0
      %3129 = vadd.xlane.f32.xlu0 %v3128
      %v3130 = vpop.xlane.xlu0 %3129
      %v3131 = vsel %vm589, %v3079, 0.0
      %3132 = vadd.xlane.f32.xlu0 %v3131
      %v3133 = vpop.xlane.xlu0 %3132
      %v3134 = vsel %vm589, %v3080, 0.0
      %3135 = vadd.xlane.f32.xlu0 %v3134
      %v3136 = vpop.xlane.xlu0 %3135
      %v3137 = vsel %vm589, %v3081, 0.0
      %3138 = vadd.xlane.f32.xlu0 %v3137
      %v3139 = vpop.xlane.xlu0 %3138
      %v3140 = vsel %vm589, %v3082, 0.0
      %3141 = vadd.xlane.f32.xlu0 %v3140
      %v3142 = vpop.xlane.xlu0 %3141
      %v3143 = vsel %vm589, %v3083, 0.0
      %3144 = vadd.xlane.f32.xlu0 %v3143
      %v3145 = vpop.xlane.xlu0 %3144
      %v3146 = vsel %vm589, %v3084, 0.0
      %3147 = vadd.xlane.f32.xlu0 %v3146
      %v3148 = vpop.xlane.xlu0 %3147
      %v3149 = vsel %vm589, %v3085, 0.0
      %3150 = vadd.xlane.f32.xlu0 %v3149
      %v3151 = vpop.xlane.xlu0 %3150
      %v3152 = vsel %vm589, %v3086, 0.0
      %3153 = vadd.xlane.f32.xlu0 %v3152
      %v3154 = vpop.xlane.xlu0 %3153
      %v3155 = vsel %vm589, %v3087, 0.0
      %3156 = vadd.xlane.f32.xlu0 %v3155
      %v3157 = vpop.xlane.xlu0 %3156
      %v3158 = vsel %vm589, %v3088, 0.0
      %3159 = vadd.xlane.f32.xlu0 %v3158
      %v3160 = vpop.xlane.xlu0 %3159
      %v3161 = vsel %vm589, %v3089, 0.0
      %3162 = vadd.xlane.f32.xlu0 %v3161
      %v3163 = vpop.xlane.xlu0 %3162
      %v3164 = vsel %vm589, %v3090, 0.0
      %3165 = vadd.xlane.f32.xlu0 %v3164
      %v3166 = vpop.xlane.xlu0 %3165
      %v3167 = vsel %vm589, %v3091, 0.0
      %3168 = vadd.xlane.f32.xlu0 %v3167
      %v3169 = vpop.xlane.xlu0 %3168
      %v3170 = vsel %vm589, %v3092, 0.0
      %3171 = vadd.xlane.f32.xlu0 %v3170
      %v3172 = vpop.xlane.xlu0 %3171
      %v3173 = vsel %vm589, %v3093, 0.0
      %3174 = vadd.xlane.f32.xlu0 %v3173
      %v3175 = vpop.xlane.xlu0 %3174
      %v3176 = vsel %vm589, %v3094, 0.0
      %3177 = vadd.xlane.f32.xlu0 %v3176
      %v3178 = vpop.xlane.xlu0 %3177
      %v3179 = vsel %vm589, %v3095, 0.0
      %3180 = vadd.xlane.f32.xlu0 %v3179
      %v3181 = vpop.xlane.xlu0 %3180
      %v3182 = vsel %vm589, %v3096, 0.0
      %3183 = vadd.xlane.f32.xlu0 %v3182
      %v3184 = vpop.xlane.xlu0 %3183
      %v3185 = vsel %vm589, %v3097, 0.0
      %3186 = vadd.xlane.f32.xlu0 %v3185
      %v3187 = vpop.xlane.xlu0 %3186
      %v3188 = vsel %vm589, %v3098, 0.0
      %3189 = vadd.xlane.f32.xlu0 %v3188
      %v3190 = vpop.xlane.xlu0 %3189
      %v3191 = vsel %vm589, %v3099, 0.0
      %3192 = vadd.xlane.f32.xlu0 %v3191
      %v3193 = vpop.xlane.xlu0 %3192
      %v3194 = vsel %vm589, %v3100, 0.0
      %3195 = vadd.xlane.f32.xlu0 %v3194
      %v3196 = vpop.xlane.xlu0 %3195
      %vm3197 = vcmp.ge.f32.partialorder %v3103, 1.0
      %vm3198 = vcmp.ge.f32.partialorder %v3106, 1.0
      %vm3199 = vcmp.ge.f32.partialorder %v3109, 1.0
      %vm3200 = vcmp.ge.f32.partialorder %v3112, 1.0
      %vm3201 = vcmp.ge.f32.partialorder %v3115, 1.0
      %vm3202 = vcmp.ge.f32.partialorder %v3118, 1.0
      %vm3203 = vcmp.ge.f32.partialorder %v3121, 1.0
      %vm3204 = vcmp.ge.f32.partialorder %v3124, 1.0
      %vm3205 = vcmp.ge.f32.partialorder %v3127, 1.0
      %vm3206 = vcmp.ge.f32.partialorder %v3130, 1.0
      %vm3207 = vcmp.ge.f32.partialorder %v3133, 1.0
      %vm3208 = vcmp.ge.f32.partialorder %v3136, 1.0
      %vm3209 = vcmp.ge.f32.partialorder %v3139, 1.0
      %vm3210 = vcmp.ge.f32.partialorder %v3142, 1.0
      %vm3211 = vcmp.ge.f32.partialorder %v3145, 1.0
      %vm3212 = vcmp.ge.f32.partialorder %v3148, 1.0
      %vm3213 = vcmp.ge.f32.partialorder %v3151, 1.0
      %vm3214 = vcmp.ge.f32.partialorder %v3154, 1.0
      %vm3215 = vcmp.ge.f32.partialorder %v3157, 1.0
      %vm3216 = vcmp.ge.f32.partialorder %v3160, 1.0
      %vm3217 = vcmp.ge.f32.partialorder %v3163, 1.0
      %vm3218 = vcmp.ge.f32.partialorder %v3166, 1.0
      %vm3219 = vcmp.ge.f32.partialorder %v3169, 1.0
      %vm3220 = vcmp.ge.f32.partialorder %v3172, 1.0
      %vm3221 = vcmp.ge.f32.partialorder %v3175, 1.0
      %vm3222 = vcmp.ge.f32.partialorder %v3178, 1.0
      %vm3223 = vcmp.ge.f32.partialorder %v3181, 1.0
      %vm3224 = vcmp.ge.f32.partialorder %v3184, 1.0
      %vm3225 = vcmp.ge.f32.partialorder %v3187, 1.0
      %vm3226 = vcmp.ge.f32.partialorder %v3190, 1.0
      %vm3227 = vcmp.ge.f32.partialorder %v3193, 1.0
      %vm3228 = vcmp.ge.f32.partialorder %v3196, 1.0
      %v3229 = vsel %vm3197, %v3005, %v2909
      %v3230 = vsel %vm3198, %v3006, %v2910
      %v3231 = vsel %vm3199, %v3007, %v2911
      %v3232 = vsel %vm3200, %v3008, %v2912
      %v3233 = vsel %vm3201, %v3009, %v2913
      %v3234 = vsel %vm3202, %v3010, %v2914
      %v3235 = vsel %vm3203, %v3011, %v2915
      %v3236 = vsel %vm3204, %v3012, %v2916
      %v3237 = vsel %vm3205, %v3013, %v2917
      %v3238 = vsel %vm3206, %v3014, %v2918
      %v3239 = vsel %vm3207, %v3015, %v2919
      %v3240 = vsel %vm3208, %v3016, %v2920
      %v3241 = vsel %vm3209, %v3017, %v2921
      %v3242 = vsel %vm3210, %v3018, %v2922
      %v3243 = vsel %vm3211, %v3019, %v2923
      %v3244 = vsel %vm3212, %v3020, %v2924
      %v3245 = vsel %vm3213, %v3021, %v2925
      %v3246 = vsel %vm3214, %v3022, %v2926
      %v3247 = vsel %vm3215, %v3023, %v2927
      %v3248 = vsel %vm3216, %v3024, %v2928
      %v3249 = vsel %vm3217, %v3025, %v2929
      %v3250 = vsel %vm3218, %v3026, %v2930
      %v3251 = vsel %vm3219, %v3027, %v2931
      %v3252 = vsel %vm3220, %v3028, %v2932
      %v3253 = vsel %vm3221, %v3029, %v2933
      %v3254 = vsel %vm3222, %v3030, %v2934
      %v3255 = vsel %vm3223, %v3031, %v2935
      %v3256 = vsel %vm3224, %v3032, %v2936
      %v3257 = vsel %vm3225, %v3033, %v2937
      %v3258 = vsel %vm3226, %v3034, %v2938
      %v3259 = vsel %vm3227, %v3035, %v2939
      %v3260 = vsel %vm3228, %v3036, %v2940
      %v3261 = vsel %vm3197, %v2941, %v3005
      %v3262 = vsel %vm3198, %v2942, %v3006
      %v3263 = vsel %vm3199, %v2943, %v3007
      %v3264 = vsel %vm3200, %v2944, %v3008
      %v3265 = vsel %vm3201, %v2945, %v3009
      %v3266 = vsel %vm3202, %v2946, %v3010
      %v3267 = vsel %vm3203, %v2947, %v3011
      %v3268 = vsel %vm3204, %v2948, %v3012
      %v3269 = vsel %vm3205, %v2949, %v3013
      %v3270 = vsel %vm3206, %v2950, %v3014
      %v3271 = vsel %vm3207, %v2951, %v3015
      %v3272 = vsel %vm3208, %v2952, %v3016
      %v3273 = vsel %vm3209, %v2953, %v3017
      %v3274 = vsel %vm3210, %v2954, %v3018
      %v3275 = vsel %vm3211, %v2955, %v3019
      %v3276 = vsel %vm3212, %v2956, %v3020
      %v3277 = vsel %vm3213, %v2957, %v3021
      %v3278 = vsel %vm3214, %v2958, %v3022
      %v3279 = vsel %vm3215, %v2959, %v3023
      %v3280 = vsel %vm3216, %v2960, %v3024
      %v3281 = vsel %vm3217, %v2961, %v3025
      %v3282 = vsel %vm3218, %v2962, %v3026
      %v3283 = vsel %vm3219, %v2963, %v3027
      %v3284 = vsel %vm3220, %v2964, %v3028
      %v3285 = vsel %vm3221, %v2965, %v3029
      %v3286 = vsel %vm3222, %v2966, %v3030
      %v3287 = vsel %vm3223, %v2967, %v3031
      %v3288 = vsel %vm3224, %v2968, %v3032
      %v3289 = vsel %vm3225, %v2969, %v3033
      %v3290 = vsel %vm3226, %v2970, %v3034
      %v3291 = vsel %vm3227, %v2971, %v3035
      %v3292 = vsel %vm3228, %v2972, %v3036
      %v3293 = vadd.f32 %v3229, %v3261
      %v3294 = vadd.f32 %v3230, %v3262
      %v3295 = vadd.f32 %v3231, %v3263
      %v3296 = vadd.f32 %v3232, %v3264
      %v3297 = vadd.f32 %v3233, %v3265
      %v3298 = vadd.f32 %v3234, %v3266
      %v3299 = vadd.f32 %v3235, %v3267
      %v3300 = vadd.f32 %v3236, %v3268
      %v3301 = vadd.f32 %v3237, %v3269
      %v3302 = vadd.f32 %v3238, %v3270
      %v3303 = vadd.f32 %v3239, %v3271
      %v3304 = vadd.f32 %v3240, %v3272
      %v3305 = vadd.f32 %v3241, %v3273
      %v3306 = vadd.f32 %v3242, %v3274
      %v3307 = vadd.f32 %v3243, %v3275
      %v3308 = vadd.f32 %v3244, %v3276
      %v3309 = vadd.f32 %v3245, %v3277
      %v3310 = vadd.f32 %v3246, %v3278
      %v3311 = vadd.f32 %v3247, %v3279
      %v3312 = vadd.f32 %v3248, %v3280
      %v3313 = vadd.f32 %v3249, %v3281
      %v3314 = vadd.f32 %v3250, %v3282
      %v3315 = vadd.f32 %v3251, %v3283
      %v3316 = vadd.f32 %v3252, %v3284
      %v3317 = vadd.f32 %v3253, %v3285
      %v3318 = vadd.f32 %v3254, %v3286
      %v3319 = vadd.f32 %v3255, %v3287
      %v3320 = vadd.f32 %v3256, %v3288
      %v3321 = vadd.f32 %v3257, %v3289
      %v3322 = vadd.f32 %v3258, %v3290
      %v3323 = vadd.f32 %v3259, %v3291
      %v3324 = vadd.f32 %v3260, %v3292
      %v3325 = vmul.f32 %v3293, 0.5
      %v3326 = vmul.f32 %v3294, 0.5
      %v3327 = vmul.f32 %v3295, 0.5
      %v3328 = vmul.f32 %v3296, 0.5
      %v3329 = vmul.f32 %v3297, 0.5
      %v3330 = vmul.f32 %v3298, 0.5
      %v3331 = vmul.f32 %v3299, 0.5
      %v3332 = vmul.f32 %v3300, 0.5
      %v3333 = vmul.f32 %v3301, 0.5
      %v3334 = vmul.f32 %v3302, 0.5
      %v3335 = vmul.f32 %v3303, 0.5
      %v3336 = vmul.f32 %v3304, 0.5
      %v3337 = vmul.f32 %v3305, 0.5
      %v3338 = vmul.f32 %v3306, 0.5
      %v3339 = vmul.f32 %v3307, 0.5
      %v3340 = vmul.f32 %v3308, 0.5
      %v3341 = vmul.f32 %v3309, 0.5
      %v3342 = vmul.f32 %v3310, 0.5
      %v3343 = vmul.f32 %v3311, 0.5
      %v3344 = vmul.f32 %v3312, 0.5
      %v3345 = vmul.f32 %v3313, 0.5
      %v3346 = vmul.f32 %v3314, 0.5
      %v3347 = vmul.f32 %v3315, 0.5
      %v3348 = vmul.f32 %v3316, 0.5
      %v3349 = vmul.f32 %v3317, 0.5
      %v3350 = vmul.f32 %v3318, 0.5
      %v3351 = vmul.f32 %v3319, 0.5
      %v3352 = vmul.f32 %v3320, 0.5
      %v3353 = vmul.f32 %v3321, 0.5
      %v3354 = vmul.f32 %v3322, 0.5
      %v3355 = vmul.f32 %v3323, 0.5
      %v3356 = vmul.f32 %v3324, 0.5
      %v3357 = vsub.f32 %v1085, %v3325
      %v3358 = vsub.f32 %v1086, %v3326
      %v3359 = vsub.f32 %v1087, %v3327
      %v3360 = vsub.f32 %v1088, %v3328
      %v3361 = vsub.f32 %v1089, %v3329
      %v3362 = vsub.f32 %v1090, %v3330
      %v3363 = vsub.f32 %v1091, %v3331
      %v3364 = vsub.f32 %v1092, %v3332
      %v3365 = vsub.f32 %v1093, %v3333
      %v3366 = vsub.f32 %v1094, %v3334
      %v3367 = vsub.f32 %v1095, %v3335
      %v3368 = vsub.f32 %v1096, %v3336
      %v3369 = vsub.f32 %v1097, %v3337
      %v3370 = vsub.f32 %v1098, %v3338
      %v3371 = vsub.f32 %v1099, %v3339
      %v3372 = vsub.f32 %v1100, %v3340
      %v3373 = vsub.f32 %v1101, %v3341
      %v3374 = vsub.f32 %v1102, %v3342
      %v3375 = vsub.f32 %v1103, %v3343
      %v3376 = vsub.f32 %v1104, %v3344
      %v3377 = vsub.f32 %v1105, %v3345
      %v3378 = vsub.f32 %v1106, %v3346
      %v3379 = vsub.f32 %v1107, %v3347
      %v3380 = vsub.f32 %v1108, %v3348
      %v3381 = vsub.f32 %v1109, %v3349
      %v3382 = vsub.f32 %v1110, %v3350
      %v3383 = vsub.f32 %v1111, %v3351
      %v3384 = vsub.f32 %v1112, %v3352
      %v3385 = vsub.f32 %v1113, %v3353
      %v3386 = vsub.f32 %v1114, %v3354
      %v3387 = vsub.f32 %v1115, %v3355
      %v3388 = vsub.f32 %v1116, %v3356
      %v3389 = vmax.f32 %v3357, 0.0
      %v3390 = vmax.f32 %v3358, 0.0
      %v3391 = vmax.f32 %v3359, 0.0
      %v3392 = vmax.f32 %v3360, 0.0
      %v3393 = vmax.f32 %v3361, 0.0
      %v3394 = vmax.f32 %v3362, 0.0
      %v3395 = vmax.f32 %v3363, 0.0
      %v3396 = vmax.f32 %v3364, 0.0
      %v3397 = vmax.f32 %v3365, 0.0
      %v3398 = vmax.f32 %v3366, 0.0
      %v3399 = vmax.f32 %v3367, 0.0
      %v3400 = vmax.f32 %v3368, 0.0
      %v3401 = vmax.f32 %v3369, 0.0
      %v3402 = vmax.f32 %v3370, 0.0
      %v3403 = vmax.f32 %v3371, 0.0
      %v3404 = vmax.f32 %v3372, 0.0
      %v3405 = vmax.f32 %v3373, 0.0
      %v3406 = vmax.f32 %v3374, 0.0
      %v3407 = vmax.f32 %v3375, 0.0
      %v3408 = vmax.f32 %v3376, 0.0
      %v3409 = vmax.f32 %v3377, 0.0
      %v3410 = vmax.f32 %v3378, 0.0
      %v3411 = vmax.f32 %v3379, 0.0
      %v3412 = vmax.f32 %v3380, 0.0
      %v3413 = vmax.f32 %v3381, 0.0
      %v3414 = vmax.f32 %v3382, 0.0
      %v3415 = vmax.f32 %v3383, 0.0
      %v3416 = vmax.f32 %v3384, 0.0
      %v3417 = vmax.f32 %v3385, 0.0
      %v3418 = vmax.f32 %v3386, 0.0
      %v3419 = vmax.f32 %v3387, 0.0
      %v3420 = vmax.f32 %v3388, 0.0
      %v3421 = vsel %vm589, %v3389, 0.0
      %3422 = vadd.xlane.f32.xlu0 %v3421
      %v3423 = vpop.xlane.xlu0 %3422
      %v3424 = vsel %vm589, %v3390, 0.0
      %3425 = vadd.xlane.f32.xlu0 %v3424
      %v3426 = vpop.xlane.xlu0 %3425
      %v3427 = vsel %vm589, %v3391, 0.0
      %3428 = vadd.xlane.f32.xlu0 %v3427
      %v3429 = vpop.xlane.xlu0 %3428
      %v3430 = vsel %vm589, %v3392, 0.0
      %3431 = vadd.xlane.f32.xlu0 %v3430
      %v3432 = vpop.xlane.xlu0 %3431
      %v3433 = vsel %vm589, %v3393, 0.0
      %3434 = vadd.xlane.f32.xlu0 %v3433
      %v3435 = vpop.xlane.xlu0 %3434
      %v3436 = vsel %vm589, %v3394, 0.0
      %3437 = vadd.xlane.f32.xlu0 %v3436
      %v3438 = vpop.xlane.xlu0 %3437
      %v3439 = vsel %vm589, %v3395, 0.0
      %3440 = vadd.xlane.f32.xlu0 %v3439
      %v3441 = vpop.xlane.xlu0 %3440
      %v3442 = vsel %vm589, %v3396, 0.0
      %3443 = vadd.xlane.f32.xlu0 %v3442
      %v3444 = vpop.xlane.xlu0 %3443
      %v3445 = vsel %vm589, %v3397, 0.0
      %3446 = vadd.xlane.f32.xlu0 %v3445
      %v3447 = vpop.xlane.xlu0 %3446
      %v3448 = vsel %vm589, %v3398, 0.0
      %3449 = vadd.xlane.f32.xlu0 %v3448
      %v3450 = vpop.xlane.xlu0 %3449
      %v3451 = vsel %vm589, %v3399, 0.0
      %3452 = vadd.xlane.f32.xlu0 %v3451
      %v3453 = vpop.xlane.xlu0 %3452
      %v3454 = vsel %vm589, %v3400, 0.0
      %3455 = vadd.xlane.f32.xlu0 %v3454
      %v3456 = vpop.xlane.xlu0 %3455
      %v3457 = vsel %vm589, %v3401, 0.0
      %3458 = vadd.xlane.f32.xlu0 %v3457
      %v3459 = vpop.xlane.xlu0 %3458
      %v3460 = vsel %vm589, %v3402, 0.0
      %3461 = vadd.xlane.f32.xlu0 %v3460
      %v3462 = vpop.xlane.xlu0 %3461
      %v3463 = vsel %vm589, %v3403, 0.0
      %3464 = vadd.xlane.f32.xlu0 %v3463
      %v3465 = vpop.xlane.xlu0 %3464
      %v3466 = vsel %vm589, %v3404, 0.0
      %3467 = vadd.xlane.f32.xlu0 %v3466
      %v3468 = vpop.xlane.xlu0 %3467
      %v3469 = vsel %vm589, %v3405, 0.0
      %3470 = vadd.xlane.f32.xlu0 %v3469
      %v3471 = vpop.xlane.xlu0 %3470
      %v3472 = vsel %vm589, %v3406, 0.0
      %3473 = vadd.xlane.f32.xlu0 %v3472
      %v3474 = vpop.xlane.xlu0 %3473
      %v3475 = vsel %vm589, %v3407, 0.0
      %3476 = vadd.xlane.f32.xlu0 %v3475
      %v3477 = vpop.xlane.xlu0 %3476
      %v3478 = vsel %vm589, %v3408, 0.0
      %3479 = vadd.xlane.f32.xlu0 %v3478
      %v3480 = vpop.xlane.xlu0 %3479
      %v3481 = vsel %vm589, %v3409, 0.0
      %3482 = vadd.xlane.f32.xlu0 %v3481
      %v3483 = vpop.xlane.xlu0 %3482
      %v3484 = vsel %vm589, %v3410, 0.0
      %3485 = vadd.xlane.f32.xlu0 %v3484
      %v3486 = vpop.xlane.xlu0 %3485
      %v3487 = vsel %vm589, %v3411, 0.0
      %3488 = vadd.xlane.f32.xlu0 %v3487
      %v3489 = vpop.xlane.xlu0 %3488
      %v3490 = vsel %vm589, %v3412, 0.0
      %3491 = vadd.xlane.f32.xlu0 %v3490
      %v3492 = vpop.xlane.xlu0 %3491
      %v3493 = vsel %vm589, %v3413, 0.0
      %3494 = vadd.xlane.f32.xlu0 %v3493
      %v3495 = vpop.xlane.xlu0 %3494
      %v3496 = vsel %vm589, %v3414, 0.0
      %3497 = vadd.xlane.f32.xlu0 %v3496
      %v3498 = vpop.xlane.xlu0 %3497
      %v3499 = vsel %vm589, %v3415, 0.0
      %3500 = vadd.xlane.f32.xlu0 %v3499
      %v3501 = vpop.xlane.xlu0 %3500
      %v3502 = vsel %vm589, %v3416, 0.0
      %3503 = vadd.xlane.f32.xlu0 %v3502
      %v3504 = vpop.xlane.xlu0 %3503
      %v3505 = vsel %vm589, %v3417, 0.0
      %3506 = vadd.xlane.f32.xlu0 %v3505
      %v3507 = vpop.xlane.xlu0 %3506
      %v3508 = vsel %vm589, %v3418, 0.0
      %3509 = vadd.xlane.f32.xlu0 %v3508
      %v3510 = vpop.xlane.xlu0 %3509
      %v3511 = vsel %vm589, %v3419, 0.0
      %3512 = vadd.xlane.f32.xlu0 %v3511
      %v3513 = vpop.xlane.xlu0 %3512
      %v3514 = vsel %vm589, %v3420, 0.0
      %3515 = vadd.xlane.f32.xlu0 %v3514
      %v3516 = vpop.xlane.xlu0 %3515
      %vm3517 = vcmp.ge.f32.partialorder %v3423, 1.0
      %vm3518 = vcmp.ge.f32.partialorder %v3426, 1.0
      %vm3519 = vcmp.ge.f32.partialorder %v3429, 1.0
      %vm3520 = vcmp.ge.f32.partialorder %v3432, 1.0
      %vm3521 = vcmp.ge.f32.partialorder %v3435, 1.0
      %vm3522 = vcmp.ge.f32.partialorder %v3438, 1.0
      %vm3523 = vcmp.ge.f32.partialorder %v3441, 1.0
      %vm3524 = vcmp.ge.f32.partialorder %v3444, 1.0
      %vm3525 = vcmp.ge.f32.partialorder %v3447, 1.0
      %vm3526 = vcmp.ge.f32.partialorder %v3450, 1.0
      %vm3527 = vcmp.ge.f32.partialorder %v3453, 1.0
      %vm3528 = vcmp.ge.f32.partialorder %v3456, 1.0
      %vm3529 = vcmp.ge.f32.partialorder %v3459, 1.0
      %vm3530 = vcmp.ge.f32.partialorder %v3462, 1.0
      %vm3531 = vcmp.ge.f32.partialorder %v3465, 1.0
      %vm3532 = vcmp.ge.f32.partialorder %v3468, 1.0
      %vm3533 = vcmp.ge.f32.partialorder %v3471, 1.0
      %vm3534 = vcmp.ge.f32.partialorder %v3474, 1.0
      %vm3535 = vcmp.ge.f32.partialorder %v3477, 1.0
      %vm3536 = vcmp.ge.f32.partialorder %v3480, 1.0
      %vm3537 = vcmp.ge.f32.partialorder %v3483, 1.0
      %vm3538 = vcmp.ge.f32.partialorder %v3486, 1.0
      %vm3539 = vcmp.ge.f32.partialorder %v3489, 1.0
      %vm3540 = vcmp.ge.f32.partialorder %v3492, 1.0
      %vm3541 = vcmp.ge.f32.partialorder %v3495, 1.0
      %vm3542 = vcmp.ge.f32.partialorder %v3498, 1.0
      %vm3543 = vcmp.ge.f32.partialorder %v3501, 1.0
      %vm3544 = vcmp.ge.f32.partialorder %v3504, 1.0
      %vm3545 = vcmp.ge.f32.partialorder %v3507, 1.0
      %vm3546 = vcmp.ge.f32.partialorder %v3510, 1.0
      %vm3547 = vcmp.ge.f32.partialorder %v3513, 1.0
      %vm3548 = vcmp.ge.f32.partialorder %v3516, 1.0
      %v3549 = vsel %vm3517, %v3325, %v3229
      %v3550 = vsel %vm3518, %v3326, %v3230
      %v3551 = vsel %vm3519, %v3327, %v3231
      %v3552 = vsel %vm3520, %v3328, %v3232
      %v3553 = vsel %vm3521, %v3329, %v3233
      %v3554 = vsel %vm3522, %v3330, %v3234
      %v3555 = vsel %vm3523, %v3331, %v3235
      %v3556 = vsel %vm3524, %v3332, %v3236
      %v3557 = vsel %vm3525, %v3333, %v3237
      %v3558 = vsel %vm3526, %v3334, %v3238
      %v3559 = vsel %vm3527, %v3335, %v3239
      %v3560 = vsel %vm3528, %v3336, %v3240
      %v3561 = vsel %vm3529, %v3337, %v3241
      %v3562 = vsel %vm3530, %v3338, %v3242
      %v3563 = vsel %vm3531, %v3339, %v3243
      %v3564 = vsel %vm3532, %v3340, %v3244
      %v3565 = vsel %vm3533, %v3341, %v3245
      %v3566 = vsel %vm3534, %v3342, %v3246
      %v3567 = vsel %vm3535, %v3343, %v3247
      %v3568 = vsel %vm3536, %v3344, %v3248
      %v3569 = vsel %vm3537, %v3345, %v3249
      %v3570 = vsel %vm3538, %v3346, %v3250
      %v3571 = vsel %vm3539, %v3347, %v3251
      %v3572 = vsel %vm3540, %v3348, %v3252
      %v3573 = vsel %vm3541, %v3349, %v3253
      %v3574 = vsel %vm3542, %v3350, %v3254
      %v3575 = vsel %vm3543, %v3351, %v3255
      %v3576 = vsel %vm3544, %v3352, %v3256
      %v3577 = vsel %vm3545, %v3353, %v3257
      %v3578 = vsel %vm3546, %v3354, %v3258
      %v3579 = vsel %vm3547, %v3355, %v3259
      %v3580 = vsel %vm3548, %v3356, %v3260
      %v3581 = vsel %vm3517, %v3261, %v3325
      %v3582 = vsel %vm3518, %v3262, %v3326
      %v3583 = vsel %vm3519, %v3263, %v3327
      %v3584 = vsel %vm3520, %v3264, %v3328
      %v3585 = vsel %vm3521, %v3265, %v3329
      %v3586 = vsel %vm3522, %v3266, %v3330
      %v3587 = vsel %vm3523, %v3267, %v3331
      %v3588 = vsel %vm3524, %v3268, %v3332
      %v3589 = vsel %vm3525, %v3269, %v3333
      %v3590 = vsel %vm3526, %v3270, %v3334
      %v3591 = vsel %vm3527, %v3271, %v3335
      %v3592 = vsel %vm3528, %v3272, %v3336
      %v3593 = vsel %vm3529, %v3273, %v3337
      %v3594 = vsel %vm3530, %v3274, %v3338
      %v3595 = vsel %vm3531, %v3275, %v3339
      %v3596 = vsel %vm3532, %v3276, %v3340
      %v3597 = vsel %vm3533, %v3277, %v3341
      %v3598 = vsel %vm3534, %v3278, %v3342
      %v3599 = vsel %vm3535, %v3279, %v3343
      %v3600 = vsel %vm3536, %v3280, %v3344
      %v3601 = vsel %vm3537, %v3281, %v3345
      %v3602 = vsel %vm3538, %v3282, %v3346
      %v3603 = vsel %vm3539, %v3283, %v3347
      %v3604 = vsel %vm3540, %v3284, %v3348
      %v3605 = vsel %vm3541, %v3285, %v3349
      %v3606 = vsel %vm3542, %v3286, %v3350
      %v3607 = vsel %vm3543, %v3287, %v3351
      %v3608 = vsel %vm3544, %v3288, %v3352
      %v3609 = vsel %vm3545, %v3289, %v3353
      %v3610 = vsel %vm3546, %v3290, %v3354
      %v3611 = vsel %vm3547, %v3291, %v3355
      %v3612 = vsel %vm3548, %v3292, %v3356
      %v3613 = vadd.f32 %v3549, %v3581
      %v3614 = vadd.f32 %v3550, %v3582
      %v3615 = vadd.f32 %v3551, %v3583
      %v3616 = vadd.f32 %v3552, %v3584
      %v3617 = vadd.f32 %v3553, %v3585
      %v3618 = vadd.f32 %v3554, %v3586
      %v3619 = vadd.f32 %v3555, %v3587
      %v3620 = vadd.f32 %v3556, %v3588
      %v3621 = vadd.f32 %v3557, %v3589
      %v3622 = vadd.f32 %v3558, %v3590
      %v3623 = vadd.f32 %v3559, %v3591
      %v3624 = vadd.f32 %v3560, %v3592
      %v3625 = vadd.f32 %v3561, %v3593
      %v3626 = vadd.f32 %v3562, %v3594
      %v3627 = vadd.f32 %v3563, %v3595
      %v3628 = vadd.f32 %v3564, %v3596
      %v3629 = vadd.f32 %v3565, %v3597
      %v3630 = vadd.f32 %v3566, %v3598
      %v3631 = vadd.f32 %v3567, %v3599
      %v3632 = vadd.f32 %v3568, %v3600
      %v3633 = vadd.f32 %v3569, %v3601
      %v3634 = vadd.f32 %v3570, %v3602
      %v3635 = vadd.f32 %v3571, %v3603
      %v3636 = vadd.f32 %v3572, %v3604
      %v3637 = vadd.f32 %v3573, %v3605
      %v3638 = vadd.f32 %v3574, %v3606
      %v3639 = vadd.f32 %v3575, %v3607
      %v3640 = vadd.f32 %v3576, %v3608
      %v3641 = vadd.f32 %v3577, %v3609
      %v3642 = vadd.f32 %v3578, %v3610
      %v3643 = vadd.f32 %v3579, %v3611
      %v3644 = vadd.f32 %v3580, %v3612
      %v3645 = vmul.f32 %v3613, 0.5
      %v3646 = vmul.f32 %v3614, 0.5
      %v3647 = vmul.f32 %v3615, 0.5
      %v3648 = vmul.f32 %v3616, 0.5
      %v3649 = vmul.f32 %v3617, 0.5
      %v3650 = vmul.f32 %v3618, 0.5
      %v3651 = vmul.f32 %v3619, 0.5
      %v3652 = vmul.f32 %v3620, 0.5
      %v3653 = vmul.f32 %v3621, 0.5
      %v3654 = vmul.f32 %v3622, 0.5
      %v3655 = vmul.f32 %v3623, 0.5
      %v3656 = vmul.f32 %v3624, 0.5
      %v3657 = vmul.f32 %v3625, 0.5
      %v3658 = vmul.f32 %v3626, 0.5
      %v3659 = vmul.f32 %v3627, 0.5
      %v3660 = vmul.f32 %v3628, 0.5
      %v3661 = vmul.f32 %v3629, 0.5
      %v3662 = vmul.f32 %v3630, 0.5
      %v3663 = vmul.f32 %v3631, 0.5
      %v3664 = vmul.f32 %v3632, 0.5
      %v3665 = vmul.f32 %v3633, 0.5
      %v3666 = vmul.f32 %v3634, 0.5
      %v3667 = vmul.f32 %v3635, 0.5
      %v3668 = vmul.f32 %v3636, 0.5
      %v3669 = vmul.f32 %v3637, 0.5
      %v3670 = vmul.f32 %v3638, 0.5
      %v3671 = vmul.f32 %v3639, 0.5
      %v3672 = vmul.f32 %v3640, 0.5
      %v3673 = vmul.f32 %v3641, 0.5
      %v3674 = vmul.f32 %v3642, 0.5
      %v3675 = vmul.f32 %v3643, 0.5
      %v3676 = vmul.f32 %v3644, 0.5
      %v3677 = vsub.f32 %v1085, %v3645
      %v3678 = vsub.f32 %v1086, %v3646
      %v3679 = vsub.f32 %v1087, %v3647
      %v3680 = vsub.f32 %v1088, %v3648
      %v3681 = vsub.f32 %v1089, %v3649
      %v3682 = vsub.f32 %v1090, %v3650
      %v3683 = vsub.f32 %v1091, %v3651
      %v3684 = vsub.f32 %v1092, %v3652
      %v3685 = vsub.f32 %v1093, %v3653
      %v3686 = vsub.f32 %v1094, %v3654
      %v3687 = vsub.f32 %v1095, %v3655
      %v3688 = vsub.f32 %v1096, %v3656
      %v3689 = vsub.f32 %v1097, %v3657
      %v3690 = vsub.f32 %v1098, %v3658
      %v3691 = vsub.f32 %v1099, %v3659
      %v3692 = vsub.f32 %v1100, %v3660
      %v3693 = vsub.f32 %v1101, %v3661
      %v3694 = vsub.f32 %v1102, %v3662
      %v3695 = vsub.f32 %v1103, %v3663
      %v3696 = vsub.f32 %v1104, %v3664
      %v3697 = vsub.f32 %v1105, %v3665
      %v3698 = vsub.f32 %v1106, %v3666
      %v3699 = vsub.f32 %v1107, %v3667
      %v3700 = vsub.f32 %v1108, %v3668
      %v3701 = vsub.f32 %v1109, %v3669
      %v3702 = vsub.f32 %v1110, %v3670
      %v3703 = vsub.f32 %v1111, %v3671
      %v3704 = vsub.f32 %v1112, %v3672
      %v3705 = vsub.f32 %v1113, %v3673
      %v3706 = vsub.f32 %v1114, %v3674
      %v3707 = vsub.f32 %v1115, %v3675
      %v3708 = vsub.f32 %v1116, %v3676
      %v3709 = vmax.f32 %v3677, 0.0
      %v3710 = vmax.f32 %v3678, 0.0
      %v3711 = vmax.f32 %v3679, 0.0
      %v3712 = vmax.f32 %v3680, 0.0
      %v3713 = vmax.f32 %v3681, 0.0
      %v3714 = vmax.f32 %v3682, 0.0
      %v3715 = vmax.f32 %v3683, 0.0
      %v3716 = vmax.f32 %v3684, 0.0
      %v3717 = vmax.f32 %v3685, 0.0
      %v3718 = vmax.f32 %v3686, 0.0
      %v3719 = vmax.f32 %v3687, 0.0
      %v3720 = vmax.f32 %v3688, 0.0
      %v3721 = vmax.f32 %v3689, 0.0
      %v3722 = vmax.f32 %v3690, 0.0
      %v3723 = vmax.f32 %v3691, 0.0
      %v3724 = vmax.f32 %v3692, 0.0
      %v3725 = vmax.f32 %v3693, 0.0
      %v3726 = vmax.f32 %v3694, 0.0
      %v3727 = vmax.f32 %v3695, 0.0
      %v3728 = vmax.f32 %v3696, 0.0
      %v3729 = vmax.f32 %v3697, 0.0
      %v3730 = vmax.f32 %v3698, 0.0
      %v3731 = vmax.f32 %v3699, 0.0
      %v3732 = vmax.f32 %v3700, 0.0
      %v3733 = vmax.f32 %v3701, 0.0
      %v3734 = vmax.f32 %v3702, 0.0
      %v3735 = vmax.f32 %v3703, 0.0
      %v3736 = vmax.f32 %v3704, 0.0
      %v3737 = vmax.f32 %v3705, 0.0
      %v3738 = vmax.f32 %v3706, 0.0
      %v3739 = vmax.f32 %v3707, 0.0
      %v3740 = vmax.f32 %v3708, 0.0
      %v3741 = vsel %vm589, %v3709, 0.0
      %3742 = vadd.xlane.f32.xlu0 %v3741
      %v3743 = vpop.xlane.xlu0 %3742
      %v3744 = vsel %vm589, %v3710, 0.0
      %3745 = vadd.xlane.f32.xlu0 %v3744
      %v3746 = vpop.xlane.xlu0 %3745
      %v3747 = vsel %vm589, %v3711, 0.0
      %3748 = vadd.xlane.f32.xlu0 %v3747
      %v3749 = vpop.xlane.xlu0 %3748
      %v3750 = vsel %vm589, %v3712, 0.0
      %3751 = vadd.xlane.f32.xlu0 %v3750
      %v3752 = vpop.xlane.xlu0 %3751
      %v3753 = vsel %vm589, %v3713, 0.0
      %3754 = vadd.xlane.f32.xlu0 %v3753
      %v3755 = vpop.xlane.xlu0 %3754
      %v3756 = vsel %vm589, %v3714, 0.0
      %3757 = vadd.xlane.f32.xlu0 %v3756
      %v3758 = vpop.xlane.xlu0 %3757
      %v3759 = vsel %vm589, %v3715, 0.0
      %3760 = vadd.xlane.f32.xlu0 %v3759
      %v3761 = vpop.xlane.xlu0 %3760
      %v3762 = vsel %vm589, %v3716, 0.0
      %3763 = vadd.xlane.f32.xlu0 %v3762
      %v3764 = vpop.xlane.xlu0 %3763
      %v3765 = vsel %vm589, %v3717, 0.0
      %3766 = vadd.xlane.f32.xlu0 %v3765
      %v3767 = vpop.xlane.xlu0 %3766
      %v3768 = vsel %vm589, %v3718, 0.0
      %3769 = vadd.xlane.f32.xlu0 %v3768
      %v3770 = vpop.xlane.xlu0 %3769
      %v3771 = vsel %vm589, %v3719, 0.0
      %3772 = vadd.xlane.f32.xlu0 %v3771
      %v3773 = vpop.xlane.xlu0 %3772
      %v3774 = vsel %vm589, %v3720, 0.0
      %3775 = vadd.xlane.f32.xlu0 %v3774
      %v3776 = vpop.xlane.xlu0 %3775
      %v3777 = vsel %vm589, %v3721, 0.0
      %3778 = vadd.xlane.f32.xlu0 %v3777
      %v3779 = vpop.xlane.xlu0 %3778
      %v3780 = vsel %vm589, %v3722, 0.0
      %3781 = vadd.xlane.f32.xlu0 %v3780
      %v3782 = vpop.xlane.xlu0 %3781
      %v3783 = vsel %vm589, %v3723, 0.0
      %3784 = vadd.xlane.f32.xlu0 %v3783
      %v3785 = vpop.xlane.xlu0 %3784
      %v3786 = vsel %vm589, %v3724, 0.0
      %3787 = vadd.xlane.f32.xlu0 %v3786
      %v3788 = vpop.xlane.xlu0 %3787
      %v3789 = vsel %vm589, %v3725, 0.0
      %3790 = vadd.xlane.f32.xlu0 %v3789
      %v3791 = vpop.xlane.xlu0 %3790
      %v3792 = vsel %vm589, %v3726, 0.0
      %3793 = vadd.xlane.f32.xlu0 %v3792
      %v3794 = vpop.xlane.xlu0 %3793
      %v3795 = vsel %vm589, %v3727, 0.0
      %3796 = vadd.xlane.f32.xlu0 %v3795
      %v3797 = vpop.xlane.xlu0 %3796
      %v3798 = vsel %vm589, %v3728, 0.0
      %3799 = vadd.xlane.f32.xlu0 %v3798
      %v3800 = vpop.xlane.xlu0 %3799
      %v3801 = vsel %vm589, %v3729, 0.0
      %3802 = vadd.xlane.f32.xlu0 %v3801
      %v3803 = vpop.xlane.xlu0 %3802
      %v3804 = vsel %vm589, %v3730, 0.0
      %3805 = vadd.xlane.f32.xlu0 %v3804
      %v3806 = vpop.xlane.xlu0 %3805
      %v3807 = vsel %vm589, %v3731, 0.0
      %3808 = vadd.xlane.f32.xlu0 %v3807
      %v3809 = vpop.xlane.xlu0 %3808
      %v3810 = vsel %vm589, %v3732, 0.0
      %3811 = vadd.xlane.f32.xlu0 %v3810
      %v3812 = vpop.xlane.xlu0 %3811
      %v3813 = vsel %vm589, %v3733, 0.0
      %3814 = vadd.xlane.f32.xlu0 %v3813
      %v3815 = vpop.xlane.xlu0 %3814
      %v3816 = vsel %vm589, %v3734, 0.0
      %3817 = vadd.xlane.f32.xlu0 %v3816
      %v3818 = vpop.xlane.xlu0 %3817
      %v3819 = vsel %vm589, %v3735, 0.0
      %3820 = vadd.xlane.f32.xlu0 %v3819
      %v3821 = vpop.xlane.xlu0 %3820
      %v3822 = vsel %vm589, %v3736, 0.0
      %3823 = vadd.xlane.f32.xlu0 %v3822
      %v3824 = vpop.xlane.xlu0 %3823
      %v3825 = vsel %vm589, %v3737, 0.0
      %3826 = vadd.xlane.f32.xlu0 %v3825
      %v3827 = vpop.xlane.xlu0 %3826
      %v3828 = vsel %vm589, %v3738, 0.0
      %3829 = vadd.xlane.f32.xlu0 %v3828
      %v3830 = vpop.xlane.xlu0 %3829
      %v3831 = vsel %vm589, %v3739, 0.0
      %3832 = vadd.xlane.f32.xlu0 %v3831
      %v3833 = vpop.xlane.xlu0 %3832
      %v3834 = vsel %vm589, %v3740, 0.0
      %3835 = vadd.xlane.f32.xlu0 %v3834
      %v3836 = vpop.xlane.xlu0 %3835
      %vm3837 = vcmp.ge.f32.partialorder %v3743, 1.0
      %vm3838 = vcmp.ge.f32.partialorder %v3746, 1.0
      %vm3839 = vcmp.ge.f32.partialorder %v3749, 1.0
      %vm3840 = vcmp.ge.f32.partialorder %v3752, 1.0
      %vm3841 = vcmp.ge.f32.partialorder %v3755, 1.0
      %vm3842 = vcmp.ge.f32.partialorder %v3758, 1.0
      %vm3843 = vcmp.ge.f32.partialorder %v3761, 1.0
      %vm3844 = vcmp.ge.f32.partialorder %v3764, 1.0
      %vm3845 = vcmp.ge.f32.partialorder %v3767, 1.0
      %vm3846 = vcmp.ge.f32.partialorder %v3770, 1.0
      %vm3847 = vcmp.ge.f32.partialorder %v3773, 1.0
      %vm3848 = vcmp.ge.f32.partialorder %v3776, 1.0
      %vm3849 = vcmp.ge.f32.partialorder %v3779, 1.0
      %vm3850 = vcmp.ge.f32.partialorder %v3782, 1.0
      %vm3851 = vcmp.ge.f32.partialorder %v3785, 1.0
      %vm3852 = vcmp.ge.f32.partialorder %v3788, 1.0
      %vm3853 = vcmp.ge.f32.partialorder %v3791, 1.0
      %vm3854 = vcmp.ge.f32.partialorder %v3794, 1.0
      %vm3855 = vcmp.ge.f32.partialorder %v3797, 1.0
      %vm3856 = vcmp.ge.f32.partialorder %v3800, 1.0
      %vm3857 = vcmp.ge.f32.partialorder %v3803, 1.0
      %vm3858 = vcmp.ge.f32.partialorder %v3806, 1.0
      %vm3859 = vcmp.ge.f32.partialorder %v3809, 1.0
      %vm3860 = vcmp.ge.f32.partialorder %v3812, 1.0
      %vm3861 = vcmp.ge.f32.partialorder %v3815, 1.0
      %vm3862 = vcmp.ge.f32.partialorder %v3818, 1.0
      %vm3863 = vcmp.ge.f32.partialorder %v3821, 1.0
      %vm3864 = vcmp.ge.f32.partialorder %v3824, 1.0
      %vm3865 = vcmp.ge.f32.partialorder %v3827, 1.0
      %vm3866 = vcmp.ge.f32.partialorder %v3830, 1.0
      %vm3867 = vcmp.ge.f32.partialorder %v3833, 1.0
      %vm3868 = vcmp.ge.f32.partialorder %v3836, 1.0
      %v3869 = vsel %vm3837, %v3645, %v3549
      %v3870 = vsel %vm3838, %v3646, %v3550
      %v3871 = vsel %vm3839, %v3647, %v3551
      %v3872 = vsel %vm3840, %v3648, %v3552
      %v3873 = vsel %vm3841, %v3649, %v3553
      %v3874 = vsel %vm3842, %v3650, %v3554
      %v3875 = vsel %vm3843, %v3651, %v3555
      %v3876 = vsel %vm3844, %v3652, %v3556
      %v3877 = vsel %vm3845, %v3653, %v3557
      %v3878 = vsel %vm3846, %v3654, %v3558
      %v3879 = vsel %vm3847, %v3655, %v3559
      %v3880 = vsel %vm3848, %v3656, %v3560
      %v3881 = vsel %vm3849, %v3657, %v3561
      %v3882 = vsel %vm3850, %v3658, %v3562
      %v3883 = vsel %vm3851, %v3659, %v3563
      %v3884 = vsel %vm3852, %v3660, %v3564
      %v3885 = vsel %vm3853, %v3661, %v3565
      %v3886 = vsel %vm3854, %v3662, %v3566
      %v3887 = vsel %vm3855, %v3663, %v3567
      %v3888 = vsel %vm3856, %v3664, %v3568
      %v3889 = vsel %vm3857, %v3665, %v3569
      %v3890 = vsel %vm3858, %v3666, %v3570
      %v3891 = vsel %vm3859, %v3667, %v3571
      %v3892 = vsel %vm3860, %v3668, %v3572
      %v3893 = vsel %vm3861, %v3669, %v3573
      %v3894 = vsel %vm3862, %v3670, %v3574
      %v3895 = vsel %vm3863, %v3671, %v3575
      %v3896 = vsel %vm3864, %v3672, %v3576
      %v3897 = vsel %vm3865, %v3673, %v3577
      %v3898 = vsel %vm3866, %v3674, %v3578
      %v3899 = vsel %vm3867, %v3675, %v3579
      %v3900 = vsel %vm3868, %v3676, %v3580
      %v3901 = vsel %vm3837, %v3581, %v3645
      %v3902 = vsel %vm3838, %v3582, %v3646
      %v3903 = vsel %vm3839, %v3583, %v3647
      %v3904 = vsel %vm3840, %v3584, %v3648
      %v3905 = vsel %vm3841, %v3585, %v3649
      %v3906 = vsel %vm3842, %v3586, %v3650
      %v3907 = vsel %vm3843, %v3587, %v3651
      %v3908 = vsel %vm3844, %v3588, %v3652
      %v3909 = vsel %vm3845, %v3589, %v3653
      %v3910 = vsel %vm3846, %v3590, %v3654
      %v3911 = vsel %vm3847, %v3591, %v3655
      %v3912 = vsel %vm3848, %v3592, %v3656
      %v3913 = vsel %vm3849, %v3593, %v3657
      %v3914 = vsel %vm3850, %v3594, %v3658
      %v3915 = vsel %vm3851, %v3595, %v3659
      %v3916 = vsel %vm3852, %v3596, %v3660
      %v3917 = vsel %vm3853, %v3597, %v3661
      %v3918 = vsel %vm3854, %v3598, %v3662
      %v3919 = vsel %vm3855, %v3599, %v3663
      %v3920 = vsel %vm3856, %v3600, %v3664
      %v3921 = vsel %vm3857, %v3601, %v3665
      %v3922 = vsel %vm3858, %v3602, %v3666
      %v3923 = vsel %vm3859, %v3603, %v3667
      %v3924 = vsel %vm3860, %v3604, %v3668
      %v3925 = vsel %vm3861, %v3605, %v3669
      %v3926 = vsel %vm3862, %v3606, %v3670
      %v3927 = vsel %vm3863, %v3607, %v3671
      %v3928 = vsel %vm3864, %v3608, %v3672
      %v3929 = vsel %vm3865, %v3609, %v3673
      %v3930 = vsel %vm3866, %v3610, %v3674
      %v3931 = vsel %vm3867, %v3611, %v3675
      %v3932 = vsel %vm3868, %v3612, %v3676
      %v3933 = vadd.f32 %v3869, %v3901
      %v3934 = vadd.f32 %v3870, %v3902
      %v3935 = vadd.f32 %v3871, %v3903
      %v3936 = vadd.f32 %v3872, %v3904
      %v3937 = vadd.f32 %v3873, %v3905
      %v3938 = vadd.f32 %v3874, %v3906
      %v3939 = vadd.f32 %v3875, %v3907
      %v3940 = vadd.f32 %v3876, %v3908
      %v3941 = vadd.f32 %v3877, %v3909
      %v3942 = vadd.f32 %v3878, %v3910
      %v3943 = vadd.f32 %v3879, %v3911
      %v3944 = vadd.f32 %v3880, %v3912
      %v3945 = vadd.f32 %v3881, %v3913
      %v3946 = vadd.f32 %v3882, %v3914
      %v3947 = vadd.f32 %v3883, %v3915
      %v3948 = vadd.f32 %v3884, %v3916
      %v3949 = vadd.f32 %v3885, %v3917
      %v3950 = vadd.f32 %v3886, %v3918
      %v3951 = vadd.f32 %v3887, %v3919
      %v3952 = vadd.f32 %v3888, %v3920
      %v3953 = vadd.f32 %v3889, %v3921
      %v3954 = vadd.f32 %v3890, %v3922
      %v3955 = vadd.f32 %v3891, %v3923
      %v3956 = vadd.f32 %v3892, %v3924
      %v3957 = vadd.f32 %v3893, %v3925
      %v3958 = vadd.f32 %v3894, %v3926
      %v3959 = vadd.f32 %v3895, %v3927
      %v3960 = vadd.f32 %v3896, %v3928
      %v3961 = vadd.f32 %v3897, %v3929
      %v3962 = vadd.f32 %v3898, %v3930
      %v3963 = vadd.f32 %v3899, %v3931
      %v3964 = vadd.f32 %v3900, %v3932
      %v3965 = vmul.f32 %v3933, 0.5
      %v3966 = vmul.f32 %v3934, 0.5
      %v3967 = vmul.f32 %v3935, 0.5
      %v3968 = vmul.f32 %v3936, 0.5
      %v3969 = vmul.f32 %v3937, 0.5
      %v3970 = vmul.f32 %v3938, 0.5
      %v3971 = vmul.f32 %v3939, 0.5
      %v3972 = vmul.f32 %v3940, 0.5
      %v3973 = vmul.f32 %v3941, 0.5
      %v3974 = vmul.f32 %v3942, 0.5
      %v3975 = vmul.f32 %v3943, 0.5
      %v3976 = vmul.f32 %v3944, 0.5
      %v3977 = vmul.f32 %v3945, 0.5
      %v3978 = vmul.f32 %v3946, 0.5
      %v3979 = vmul.f32 %v3947, 0.5
      %v3980 = vmul.f32 %v3948, 0.5
      %v3981 = vmul.f32 %v3949, 0.5
      %v3982 = vmul.f32 %v3950, 0.5
      %v3983 = vmul.f32 %v3951, 0.5
      %v3984 = vmul.f32 %v3952, 0.5
      %v3985 = vmul.f32 %v3953, 0.5
      %v3986 = vmul.f32 %v3954, 0.5
      %v3987 = vmul.f32 %v3955, 0.5
      %v3988 = vmul.f32 %v3956, 0.5
      %v3989 = vmul.f32 %v3957, 0.5
      %v3990 = vmul.f32 %v3958, 0.5
      %v3991 = vmul.f32 %v3959, 0.5
      %v3992 = vmul.f32 %v3960, 0.5
      %v3993 = vmul.f32 %v3961, 0.5
      %v3994 = vmul.f32 %v3962, 0.5
      %v3995 = vmul.f32 %v3963, 0.5
      %v3996 = vmul.f32 %v3964, 0.5
      %v3997 = vsub.f32 %v1085, %v3965
      %v3998 = vsub.f32 %v1086, %v3966
      %v3999 = vsub.f32 %v1087, %v3967
      %v4000 = vsub.f32 %v1088, %v3968
      %v4001 = vsub.f32 %v1089, %v3969
      %v4002 = vsub.f32 %v1090, %v3970
      %v4003 = vsub.f32 %v1091, %v3971
      %v4004 = vsub.f32 %v1092, %v3972
      %v4005 = vsub.f32 %v1093, %v3973
      %v4006 = vsub.f32 %v1094, %v3974
      %v4007 = vsub.f32 %v1095, %v3975
      %v4008 = vsub.f32 %v1096, %v3976
      %v4009 = vsub.f32 %v1097, %v3977
      %v4010 = vsub.f32 %v1098, %v3978
      %v4011 = vsub.f32 %v1099, %v3979
      %v4012 = vsub.f32 %v1100, %v3980
      %v4013 = vsub.f32 %v1101, %v3981
      %v4014 = vsub.f32 %v1102, %v3982
      %v4015 = vsub.f32 %v1103, %v3983
      %v4016 = vsub.f32 %v1104, %v3984
      %v4017 = vsub.f32 %v1105, %v3985
      %v4018 = vsub.f32 %v1106, %v3986
      %v4019 = vsub.f32 %v1107, %v3987
      %v4020 = vsub.f32 %v1108, %v3988
      %v4021 = vsub.f32 %v1109, %v3989
      %v4022 = vsub.f32 %v1110, %v3990
      %v4023 = vsub.f32 %v1111, %v3991
      %v4024 = vsub.f32 %v1112, %v3992
      %v4025 = vsub.f32 %v1113, %v3993
      %v4026 = vsub.f32 %v1114, %v3994
      %v4027 = vsub.f32 %v1115, %v3995
      %v4028 = vsub.f32 %v1116, %v3996
      %v4029 = vmax.f32 %v3997, 0.0
      %v4030 = vmax.f32 %v3998, 0.0
      %v4031 = vmax.f32 %v3999, 0.0
      %v4032 = vmax.f32 %v4000, 0.0
      %v4033 = vmax.f32 %v4001, 0.0
      %v4034 = vmax.f32 %v4002, 0.0
      %v4035 = vmax.f32 %v4003, 0.0
      %v4036 = vmax.f32 %v4004, 0.0
      %v4037 = vmax.f32 %v4005, 0.0
      %v4038 = vmax.f32 %v4006, 0.0
      %v4039 = vmax.f32 %v4007, 0.0
      %v4040 = vmax.f32 %v4008, 0.0
      %v4041 = vmax.f32 %v4009, 0.0
      %v4042 = vmax.f32 %v4010, 0.0
      %v4043 = vmax.f32 %v4011, 0.0
      %v4044 = vmax.f32 %v4012, 0.0
      %v4045 = vmax.f32 %v4013, 0.0
      %v4046 = vmax.f32 %v4014, 0.0
      %v4047 = vmax.f32 %v4015, 0.0
      %v4048 = vmax.f32 %v4016, 0.0
      %v4049 = vmax.f32 %v4017, 0.0
      %v4050 = vmax.f32 %v4018, 0.0
      %v4051 = vmax.f32 %v4019, 0.0
      %v4052 = vmax.f32 %v4020, 0.0
      %v4053 = vmax.f32 %v4021, 0.0
      %v4054 = vmax.f32 %v4022, 0.0
      %v4055 = vmax.f32 %v4023, 0.0
      %v4056 = vmax.f32 %v4024, 0.0
      %v4057 = vmax.f32 %v4025, 0.0
      %v4058 = vmax.f32 %v4026, 0.0
      %v4059 = vmax.f32 %v4027, 0.0
      %v4060 = vmax.f32 %v4028, 0.0
      %v4061 = vsel %vm589, %v4029, 0.0
      %4062 = vadd.xlane.f32.xlu0 %v4061
      %v4063 = vpop.xlane.xlu0 %4062
      %v4064 = vsel %vm589, %v4030, 0.0
      %4065 = vadd.xlane.f32.xlu0 %v4064
      %v4066 = vpop.xlane.xlu0 %4065
      %v4067 = vsel %vm589, %v4031, 0.0
      %4068 = vadd.xlane.f32.xlu0 %v4067
      %v4069 = vpop.xlane.xlu0 %4068
      %v4070 = vsel %vm589, %v4032, 0.0
      %4071 = vadd.xlane.f32.xlu0 %v4070
      %v4072 = vpop.xlane.xlu0 %4071
      %v4073 = vsel %vm589, %v4033, 0.0
      %4074 = vadd.xlane.f32.xlu0 %v4073
      %v4075 = vpop.xlane.xlu0 %4074
      %v4076 = vsel %vm589, %v4034, 0.0
      %4077 = vadd.xlane.f32.xlu0 %v4076
      %v4078 = vpop.xlane.xlu0 %4077
      %v4079 = vsel %vm589, %v4035, 0.0
      %4080 = vadd.xlane.f32.xlu0 %v4079
      %v4081 = vpop.xlane.xlu0 %4080
      %v4082 = vsel %vm589, %v4036, 0.0
      %4083 = vadd.xlane.f32.xlu0 %v4082
      %v4084 = vpop.xlane.xlu0 %4083
      %v4085 = vsel %vm589, %v4037, 0.0
      %4086 = vadd.xlane.f32.xlu0 %v4085
      %v4087 = vpop.xlane.xlu0 %4086
      %v4088 = vsel %vm589, %v4038, 0.0
      %4089 = vadd.xlane.f32.xlu0 %v4088
      %v4090 = vpop.xlane.xlu0 %4089
      %v4091 = vsel %vm589, %v4039, 0.0
      %4092 = vadd.xlane.f32.xlu0 %v4091
      %v4093 = vpop.xlane.xlu0 %4092
      %v4094 = vsel %vm589, %v4040, 0.0
      %4095 = vadd.xlane.f32.xlu0 %v4094
      %v4096 = vpop.xlane.xlu0 %4095
      %v4097 = vsel %vm589, %v4041, 0.0
      %4098 = vadd.xlane.f32.xlu0 %v4097
      %v4099 = vpop.xlane.xlu0 %4098
      %v4100 = vsel %vm589, %v4042, 0.0
      %4101 = vadd.xlane.f32.xlu0 %v4100
      %v4102 = vpop.xlane.xlu0 %4101
      %v4103 = vsel %vm589, %v4043, 0.0
      %4104 = vadd.xlane.f32.xlu0 %v4103
      %v4105 = vpop.xlane.xlu0 %4104
      %v4106 = vsel %vm589, %v4044, 0.0
      %4107 = vadd.xlane.f32.xlu0 %v4106
      %v4108 = vpop.xlane.xlu0 %4107
      %v4109 = vsel %vm589, %v4045, 0.0
      %4110 = vadd.xlane.f32.xlu0 %v4109
      %v4111 = vpop.xlane.xlu0 %4110
      %v4112 = vsel %vm589, %v4046, 0.0
      %4113 = vadd.xlane.f32.xlu0 %v4112
      %v4114 = vpop.xlane.xlu0 %4113
      %v4115 = vsel %vm589, %v4047, 0.0
      %4116 = vadd.xlane.f32.xlu0 %v4115
      %v4117 = vpop.xlane.xlu0 %4116
      %v4118 = vsel %vm589, %v4048, 0.0
      %4119 = vadd.xlane.f32.xlu0 %v4118
      %v4120 = vpop.xlane.xlu0 %4119
      %v4121 = vsel %vm589, %v4049, 0.0
      %4122 = vadd.xlane.f32.xlu0 %v4121
      %v4123 = vpop.xlane.xlu0 %4122
      %v4124 = vsel %vm589, %v4050, 0.0
      %4125 = vadd.xlane.f32.xlu0 %v4124
      %v4126 = vpop.xlane.xlu0 %4125
      %v4127 = vsel %vm589, %v4051, 0.0
      %4128 = vadd.xlane.f32.xlu0 %v4127
      %v4129 = vpop.xlane.xlu0 %4128
      %v4130 = vsel %vm589, %v4052, 0.0
      %4131 = vadd.xlane.f32.xlu0 %v4130
      %v4132 = vpop.xlane.xlu0 %4131
      %v4133 = vsel %vm589, %v4053, 0.0
      %4134 = vadd.xlane.f32.xlu0 %v4133
      %v4135 = vpop.xlane.xlu0 %4134
      %v4136 = vsel %vm589, %v4054, 0.0
      %4137 = vadd.xlane.f32.xlu0 %v4136
      %v4138 = vpop.xlane.xlu0 %4137
      %v4139 = vsel %vm589, %v4055, 0.0
      %4140 = vadd.xlane.f32.xlu0 %v4139
      %v4141 = vpop.xlane.xlu0 %4140
      %v4142 = vsel %vm589, %v4056, 0.0
      %4143 = vadd.xlane.f32.xlu0 %v4142
      %v4144 = vpop.xlane.xlu0 %4143
      %v4145 = vsel %vm589, %v4057, 0.0
      %4146 = vadd.xlane.f32.xlu0 %v4145
      %v4147 = vpop.xlane.xlu0 %4146
      %v4148 = vsel %vm589, %v4058, 0.0
      %4149 = vadd.xlane.f32.xlu0 %v4148
      %v4150 = vpop.xlane.xlu0 %4149
      %v4151 = vsel %vm589, %v4059, 0.0
      %4152 = vadd.xlane.f32.xlu0 %v4151
      %v4153 = vpop.xlane.xlu0 %4152
      %v4154 = vsel %vm589, %v4060, 0.0
      %4155 = vadd.xlane.f32.xlu0 %v4154
      %v4156 = vpop.xlane.xlu0 %4155
      %vm4157 = vcmp.ge.f32.partialorder %v4063, 1.0
      %vm4158 = vcmp.ge.f32.partialorder %v4066, 1.0
      %vm4159 = vcmp.ge.f32.partialorder %v4069, 1.0
      %vm4160 = vcmp.ge.f32.partialorder %v4072, 1.0
      %vm4161 = vcmp.ge.f32.partialorder %v4075, 1.0
      %vm4162 = vcmp.ge.f32.partialorder %v4078, 1.0
      %vm4163 = vcmp.ge.f32.partialorder %v4081, 1.0
      %vm4164 = vcmp.ge.f32.partialorder %v4084, 1.0
      %vm4165 = vcmp.ge.f32.partialorder %v4087, 1.0
      %vm4166 = vcmp.ge.f32.partialorder %v4090, 1.0
      %vm4167 = vcmp.ge.f32.partialorder %v4093, 1.0
      %vm4168 = vcmp.ge.f32.partialorder %v4096, 1.0
      %vm4169 = vcmp.ge.f32.partialorder %v4099, 1.0
      %vm4170 = vcmp.ge.f32.partialorder %v4102, 1.0
      %vm4171 = vcmp.ge.f32.partialorder %v4105, 1.0
      %vm4172 = vcmp.ge.f32.partialorder %v4108, 1.0
      %vm4173 = vcmp.ge.f32.partialorder %v4111, 1.0
      %vm4174 = vcmp.ge.f32.partialorder %v4114, 1.0
      %vm4175 = vcmp.ge.f32.partialorder %v4117, 1.0
      %vm4176 = vcmp.ge.f32.partialorder %v4120, 1.0
      %vm4177 = vcmp.ge.f32.partialorder %v4123, 1.0
      %vm4178 = vcmp.ge.f32.partialorder %v4126, 1.0
      %vm4179 = vcmp.ge.f32.partialorder %v4129, 1.0
      %vm4180 = vcmp.ge.f32.partialorder %v4132, 1.0
      %vm4181 = vcmp.ge.f32.partialorder %v4135, 1.0
      %vm4182 = vcmp.ge.f32.partialorder %v4138, 1.0
      %vm4183 = vcmp.ge.f32.partialorder %v4141, 1.0
      %vm4184 = vcmp.ge.f32.partialorder %v4144, 1.0
      %vm4185 = vcmp.ge.f32.partialorder %v4147, 1.0
      %vm4186 = vcmp.ge.f32.partialorder %v4150, 1.0
      %vm4187 = vcmp.ge.f32.partialorder %v4153, 1.0
      %vm4188 = vcmp.ge.f32.partialorder %v4156, 1.0
      %v4189 = vsel %vm4157, %v3965, %v3869
      %v4190 = vsel %vm4158, %v3966, %v3870
      %v4191 = vsel %vm4159, %v3967, %v3871
      %v4192 = vsel %vm4160, %v3968, %v3872
      %v4193 = vsel %vm4161, %v3969, %v3873
      %v4194 = vsel %vm4162, %v3970, %v3874
      %v4195 = vsel %vm4163, %v3971, %v3875
      %v4196 = vsel %vm4164, %v3972, %v3876
      %v4197 = vsel %vm4165, %v3973, %v3877
      %v4198 = vsel %vm4166, %v3974, %v3878
      %v4199 = vsel %vm4167, %v3975, %v3879
      %v4200 = vsel %vm4168, %v3976, %v3880
      %v4201 = vsel %vm4169, %v3977, %v3881
      %v4202 = vsel %vm4170, %v3978, %v3882
      %v4203 = vsel %vm4171, %v3979, %v3883
      %v4204 = vsel %vm4172, %v3980, %v3884
      %v4205 = vsel %vm4173, %v3981, %v3885
      %v4206 = vsel %vm4174, %v3982, %v3886
      %v4207 = vsel %vm4175, %v3983, %v3887
      %v4208 = vsel %vm4176, %v3984, %v3888
      %v4209 = vsel %vm4177, %v3985, %v3889
      %v4210 = vsel %vm4178, %v3986, %v3890
      %v4211 = vsel %vm4179, %v3987, %v3891
      %v4212 = vsel %vm4180, %v3988, %v3892
      %v4213 = vsel %vm4181, %v3989, %v3893
      %v4214 = vsel %vm4182, %v3990, %v3894
      %v4215 = vsel %vm4183, %v3991, %v3895
      %v4216 = vsel %vm4184, %v3992, %v3896
      %v4217 = vsel %vm4185, %v3993, %v3897
      %v4218 = vsel %vm4186, %v3994, %v3898
      %v4219 = vsel %vm4187, %v3995, %v3899
      %v4220 = vsel %vm4188, %v3996, %v3900
      %v4221 = vsel %vm4157, %v3901, %v3965
      %v4222 = vsel %vm4158, %v3902, %v3966
      %v4223 = vsel %vm4159, %v3903, %v3967
      %v4224 = vsel %vm4160, %v3904, %v3968
      %v4225 = vsel %vm4161, %v3905, %v3969
      %v4226 = vsel %vm4162, %v3906, %v3970
      %v4227 = vsel %vm4163, %v3907, %v3971
      %v4228 = vsel %vm4164, %v3908, %v3972
      %v4229 = vsel %vm4165, %v3909, %v3973
      %v4230 = vsel %vm4166, %v3910, %v3974
      %v4231 = vsel %vm4167, %v3911, %v3975
      %v4232 = vsel %vm4168, %v3912, %v3976
      %v4233 = vsel %vm4169, %v3913, %v3977
      %v4234 = vsel %vm4170, %v3914, %v3978
      %v4235 = vsel %vm4171, %v3915, %v3979
      %v4236 = vsel %vm4172, %v3916, %v3980
      %v4237 = vsel %vm4173, %v3917, %v3981
      %v4238 = vsel %vm4174, %v3918, %v3982
      %v4239 = vsel %vm4175, %v3919, %v3983
      %v4240 = vsel %vm4176, %v3920, %v3984
      %v4241 = vsel %vm4177, %v3921, %v3985
      %v4242 = vsel %vm4178, %v3922, %v3986
      %v4243 = vsel %vm4179, %v3923, %v3987
      %v4244 = vsel %vm4180, %v3924, %v3988
      %v4245 = vsel %vm4181, %v3925, %v3989
      %v4246 = vsel %vm4182, %v3926, %v3990
      %v4247 = vsel %vm4183, %v3927, %v3991
      %v4248 = vsel %vm4184, %v3928, %v3992
      %v4249 = vsel %vm4185, %v3929, %v3993
      %v4250 = vsel %vm4186, %v3930, %v3994
      %v4251 = vsel %vm4187, %v3931, %v3995
      %v4252 = vsel %vm4188, %v3932, %v3996
      %v4253 = vadd.f32 %v4189, %v4221
      %v4254 = vadd.f32 %v4190, %v4222
      %v4255 = vadd.f32 %v4191, %v4223
      %v4256 = vadd.f32 %v4192, %v4224
      %v4257 = vadd.f32 %v4193, %v4225
      %v4258 = vadd.f32 %v4194, %v4226
      %v4259 = vadd.f32 %v4195, %v4227
      %v4260 = vadd.f32 %v4196, %v4228
      %v4261 = vadd.f32 %v4197, %v4229
      %v4262 = vadd.f32 %v4198, %v4230
      %v4263 = vadd.f32 %v4199, %v4231
      %v4264 = vadd.f32 %v4200, %v4232
      %v4265 = vadd.f32 %v4201, %v4233
      %v4266 = vadd.f32 %v4202, %v4234
      %v4267 = vadd.f32 %v4203, %v4235
      %v4268 = vadd.f32 %v4204, %v4236
      %v4269 = vadd.f32 %v4205, %v4237
      %v4270 = vadd.f32 %v4206, %v4238
      %v4271 = vadd.f32 %v4207, %v4239
      %v4272 = vadd.f32 %v4208, %v4240
      %v4273 = vadd.f32 %v4209, %v4241
      %v4274 = vadd.f32 %v4210, %v4242
      %v4275 = vadd.f32 %v4211, %v4243
      %v4276 = vadd.f32 %v4212, %v4244
      %v4277 = vadd.f32 %v4213, %v4245
      %v4278 = vadd.f32 %v4214, %v4246
      %v4279 = vadd.f32 %v4215, %v4247
      %v4280 = vadd.f32 %v4216, %v4248
      %v4281 = vadd.f32 %v4217, %v4249
      %v4282 = vadd.f32 %v4218, %v4250
      %v4283 = vadd.f32 %v4219, %v4251
      %v4284 = vadd.f32 %v4220, %v4252
      %v4285 = vmul.f32 %v4253, 0.5
      %v4286 = vmul.f32 %v4254, 0.5
      %v4287 = vmul.f32 %v4255, 0.5
      %v4288 = vmul.f32 %v4256, 0.5
      %v4289 = vmul.f32 %v4257, 0.5
      %v4290 = vmul.f32 %v4258, 0.5
      %v4291 = vmul.f32 %v4259, 0.5
      %v4292 = vmul.f32 %v4260, 0.5
      %v4293 = vmul.f32 %v4261, 0.5
      %v4294 = vmul.f32 %v4262, 0.5
      %v4295 = vmul.f32 %v4263, 0.5
      %v4296 = vmul.f32 %v4264, 0.5
      %v4297 = vmul.f32 %v4265, 0.5
      %v4298 = vmul.f32 %v4266, 0.5
      %v4299 = vmul.f32 %v4267, 0.5
      %v4300 = vmul.f32 %v4268, 0.5
      %v4301 = vmul.f32 %v4269, 0.5
      %v4302 = vmul.f32 %v4270, 0.5
      %v4303 = vmul.f32 %v4271, 0.5
      %v4304 = vmul.f32 %v4272, 0.5
      %v4305 = vmul.f32 %v4273, 0.5
      %v4306 = vmul.f32 %v4274, 0.5
      %v4307 = vmul.f32 %v4275, 0.5
      %v4308 = vmul.f32 %v4276, 0.5
      %v4309 = vmul.f32 %v4277, 0.5
      %v4310 = vmul.f32 %v4278, 0.5
      %v4311 = vmul.f32 %v4279, 0.5
      %v4312 = vmul.f32 %v4280, 0.5
      %v4313 = vmul.f32 %v4281, 0.5
      %v4314 = vmul.f32 %v4282, 0.5
      %v4315 = vmul.f32 %v4283, 0.5
      %v4316 = vmul.f32 %v4284, 0.5
      %v4317 = vsub.f32 %v1085, %v4285
      %v4318 = vsub.f32 %v1086, %v4286
      %v4319 = vsub.f32 %v1087, %v4287
      %v4320 = vsub.f32 %v1088, %v4288
      %v4321 = vsub.f32 %v1089, %v4289
      %v4322 = vsub.f32 %v1090, %v4290
      %v4323 = vsub.f32 %v1091, %v4291
      %v4324 = vsub.f32 %v1092, %v4292
      %v4325 = vsub.f32 %v1093, %v4293
      %v4326 = vsub.f32 %v1094, %v4294
      %v4327 = vsub.f32 %v1095, %v4295
      %v4328 = vsub.f32 %v1096, %v4296
      %v4329 = vsub.f32 %v1097, %v4297
      %v4330 = vsub.f32 %v1098, %v4298
      %v4331 = vsub.f32 %v1099, %v4299
      %v4332 = vsub.f32 %v1100, %v4300
      %v4333 = vsub.f32 %v1101, %v4301
      %v4334 = vsub.f32 %v1102, %v4302
      %v4335 = vsub.f32 %v1103, %v4303
      %v4336 = vsub.f32 %v1104, %v4304
      %v4337 = vsub.f32 %v1105, %v4305
      %v4338 = vsub.f32 %v1106, %v4306
      %v4339 = vsub.f32 %v1107, %v4307
      %v4340 = vsub.f32 %v1108, %v4308
      %v4341 = vsub.f32 %v1109, %v4309
      %v4342 = vsub.f32 %v1110, %v4310
      %v4343 = vsub.f32 %v1111, %v4311
      %v4344 = vsub.f32 %v1112, %v4312
      %v4345 = vsub.f32 %v1113, %v4313
      %v4346 = vsub.f32 %v1114, %v4314
      %v4347 = vsub.f32 %v1115, %v4315
      %v4348 = vsub.f32 %v1116, %v4316
      %v4349 = vmax.f32 %v4317, 0.0
      %v4350 = vmax.f32 %v4318, 0.0
      %v4351 = vmax.f32 %v4319, 0.0
      %v4352 = vmax.f32 %v4320, 0.0
      %v4353 = vmax.f32 %v4321, 0.0
      %v4354 = vmax.f32 %v4322, 0.0
      %v4355 = vmax.f32 %v4323, 0.0
      %v4356 = vmax.f32 %v4324, 0.0
      %v4357 = vmax.f32 %v4325, 0.0
      %v4358 = vmax.f32 %v4326, 0.0
      %v4359 = vmax.f32 %v4327, 0.0
      %v4360 = vmax.f32 %v4328, 0.0
      %v4361 = vmax.f32 %v4329, 0.0
      %v4362 = vmax.f32 %v4330, 0.0
      %v4363 = vmax.f32 %v4331, 0.0
      %v4364 = vmax.f32 %v4332, 0.0
      %v4365 = vmax.f32 %v4333, 0.0
      %v4366 = vmax.f32 %v4334, 0.0
      %v4367 = vmax.f32 %v4335, 0.0
      %v4368 = vmax.f32 %v4336, 0.0
      %v4369 = vmax.f32 %v4337, 0.0
      %v4370 = vmax.f32 %v4338, 0.0
      %v4371 = vmax.f32 %v4339, 0.0
      %v4372 = vmax.f32 %v4340, 0.0
      %v4373 = vmax.f32 %v4341, 0.0
      %v4374 = vmax.f32 %v4342, 0.0
      %v4375 = vmax.f32 %v4343, 0.0
      %v4376 = vmax.f32 %v4344, 0.0
      %v4377 = vmax.f32 %v4345, 0.0
      %v4378 = vmax.f32 %v4346, 0.0
      %v4379 = vmax.f32 %v4347, 0.0
      %v4380 = vmax.f32 %v4348, 0.0
      %v4381 = vsel %vm589, %v4349, 0.0
      %4382 = vadd.xlane.f32.xlu0 %v4381
      %v4383 = vpop.xlane.xlu0 %4382
      %v4384 = vsel %vm589, %v4350, 0.0
      %4385 = vadd.xlane.f32.xlu0 %v4384
      %v4386 = vpop.xlane.xlu0 %4385
      %v4387 = vsel %vm589, %v4351, 0.0
      %4388 = vadd.xlane.f32.xlu0 %v4387
      %v4389 = vpop.xlane.xlu0 %4388
      %v4390 = vsel %vm589, %v4352, 0.0
      %4391 = vadd.xlane.f32.xlu0 %v4390
      %v4392 = vpop.xlane.xlu0 %4391
      %v4393 = vsel %vm589, %v4353, 0.0
      %4394 = vadd.xlane.f32.xlu0 %v4393
      %v4395 = vpop.xlane.xlu0 %4394
      %v4396 = vsel %vm589, %v4354, 0.0
      %4397 = vadd.xlane.f32.xlu0 %v4396
      %v4398 = vpop.xlane.xlu0 %4397
      %v4399 = vsel %vm589, %v4355, 0.0
      %4400 = vadd.xlane.f32.xlu0 %v4399
      %v4401 = vpop.xlane.xlu0 %4400
      %v4402 = vsel %vm589, %v4356, 0.0
      %4403 = vadd.xlane.f32.xlu0 %v4402
      %v4404 = vpop.xlane.xlu0 %4403
      %v4405 = vsel %vm589, %v4357, 0.0
      %4406 = vadd.xlane.f32.xlu0 %v4405
      %v4407 = vpop.xlane.xlu0 %4406
      %v4408 = vsel %vm589, %v4358, 0.0
      %4409 = vadd.xlane.f32.xlu0 %v4408
      %v4410 = vpop.xlane.xlu0 %4409
      %v4411 = vsel %vm589, %v4359, 0.0
      %4412 = vadd.xlane.f32.xlu0 %v4411
      %v4413 = vpop.xlane.xlu0 %4412
      %v4414 = vsel %vm589, %v4360, 0.0
      %4415 = vadd.xlane.f32.xlu0 %v4414
      %v4416 = vpop.xlane.xlu0 %4415
      %v4417 = vsel %vm589, %v4361, 0.0
      %4418 = vadd.xlane.f32.xlu0 %v4417
      %v4419 = vpop.xlane.xlu0 %4418
      %v4420 = vsel %vm589, %v4362, 0.0
      %4421 = vadd.xlane.f32.xlu0 %v4420
      %v4422 = vpop.xlane.xlu0 %4421
      %v4423 = vsel %vm589, %v4363, 0.0
      %4424 = vadd.xlane.f32.xlu0 %v4423
      %v4425 = vpop.xlane.xlu0 %4424
      %v4426 = vsel %vm589, %v4364, 0.0
      %4427 = vadd.xlane.f32.xlu0 %v4426
      %v4428 = vpop.xlane.xlu0 %4427
      %v4429 = vsel %vm589, %v4365, 0.0
      %4430 = vadd.xlane.f32.xlu0 %v4429
      %v4431 = vpop.xlane.xlu0 %4430
      %v4432 = vsel %vm589, %v4366, 0.0
      %4433 = vadd.xlane.f32.xlu0 %v4432
      %v4434 = vpop.xlane.xlu0 %4433
      %v4435 = vsel %vm589, %v4367, 0.0
      %4436 = vadd.xlane.f32.xlu0 %v4435
      %v4437 = vpop.xlane.xlu0 %4436
      %v4438 = vsel %vm589, %v4368, 0.0
      %4439 = vadd.xlane.f32.xlu0 %v4438
      %v4440 = vpop.xlane.xlu0 %4439
      %v4441 = vsel %vm589, %v4369, 0.0
      %4442 = vadd.xlane.f32.xlu0 %v4441
      %v4443 = vpop.xlane.xlu0 %4442
      %v4444 = vsel %vm589, %v4370, 0.0
      %4445 = vadd.xlane.f32.xlu0 %v4444
      %v4446 = vpop.xlane.xlu0 %4445
      %v4447 = vsel %vm589, %v4371, 0.0
      %4448 = vadd.xlane.f32.xlu0 %v4447
      %v4449 = vpop.xlane.xlu0 %4448
      %v4450 = vsel %vm589, %v4372, 0.0
      %4451 = vadd.xlane.f32.xlu0 %v4450
      %v4452 = vpop.xlane.xlu0 %4451
      %v4453 = vsel %vm589, %v4373, 0.0
      %4454 = vadd.xlane.f32.xlu0 %v4453
      %v4455 = vpop.xlane.xlu0 %4454
      %v4456 = vsel %vm589, %v4374, 0.0
      %4457 = vadd.xlane.f32.xlu0 %v4456
      %v4458 = vpop.xlane.xlu0 %4457
      %v4459 = vsel %vm589, %v4375, 0.0
      %4460 = vadd.xlane.f32.xlu0 %v4459
      %v4461 = vpop.xlane.xlu0 %4460
      %v4462 = vsel %vm589, %v4376, 0.0
      %4463 = vadd.xlane.f32.xlu0 %v4462
      %v4464 = vpop.xlane.xlu0 %4463
      %v4465 = vsel %vm589, %v4377, 0.0
      %4466 = vadd.xlane.f32.xlu0 %v4465
      %v4467 = vpop.xlane.xlu0 %4466
      %v4468 = vsel %vm589, %v4378, 0.0
      %4469 = vadd.xlane.f32.xlu0 %v4468
      %v4470 = vpop.xlane.xlu0 %4469
      %v4471 = vsel %vm589, %v4379, 0.0
      %4472 = vadd.xlane.f32.xlu0 %v4471
      %v4473 = vpop.xlane.xlu0 %4472
      %v4474 = vsel %vm589, %v4380, 0.0
      %4475 = vadd.xlane.f32.xlu0 %v4474
      %v4476 = vpop.xlane.xlu0 %4475
      %vm4477 = vcmp.ge.f32.partialorder %v4383, 1.0
      %vm4478 = vcmp.ge.f32.partialorder %v4386, 1.0
      %vm4479 = vcmp.ge.f32.partialorder %v4389, 1.0
      %vm4480 = vcmp.ge.f32.partialorder %v4392, 1.0
      %vm4481 = vcmp.ge.f32.partialorder %v4395, 1.0
      %vm4482 = vcmp.ge.f32.partialorder %v4398, 1.0
      %vm4483 = vcmp.ge.f32.partialorder %v4401, 1.0
      %vm4484 = vcmp.ge.f32.partialorder %v4404, 1.0
      %vm4485 = vcmp.ge.f32.partialorder %v4407, 1.0
      %vm4486 = vcmp.ge.f32.partialorder %v4410, 1.0
      %vm4487 = vcmp.ge.f32.partialorder %v4413, 1.0
      %vm4488 = vcmp.ge.f32.partialorder %v4416, 1.0
      %vm4489 = vcmp.ge.f32.partialorder %v4419, 1.0
      %vm4490 = vcmp.ge.f32.partialorder %v4422, 1.0
      %vm4491 = vcmp.ge.f32.partialorder %v4425, 1.0
      %vm4492 = vcmp.ge.f32.partialorder %v4428, 1.0
      %vm4493 = vcmp.ge.f32.partialorder %v4431, 1.0
      %vm4494 = vcmp.ge.f32.partialorder %v4434, 1.0
      %vm4495 = vcmp.ge.f32.partialorder %v4437, 1.0
      %vm4496 = vcmp.ge.f32.partialorder %v4440, 1.0
      %vm4497 = vcmp.ge.f32.partialorder %v4443, 1.0
      %vm4498 = vcmp.ge.f32.partialorder %v4446, 1.0
      %vm4499 = vcmp.ge.f32.partialorder %v4449, 1.0
      %vm4500 = vcmp.ge.f32.partialorder %v4452, 1.0
      %vm4501 = vcmp.ge.f32.partialorder %v4455, 1.0
      %vm4502 = vcmp.ge.f32.partialorder %v4458, 1.0
      %vm4503 = vcmp.ge.f32.partialorder %v4461, 1.0
      %vm4504 = vcmp.ge.f32.partialorder %v4464, 1.0
      %vm4505 = vcmp.ge.f32.partialorder %v4467, 1.0
      %vm4506 = vcmp.ge.f32.partialorder %v4470, 1.0
      %vm4507 = vcmp.ge.f32.partialorder %v4473, 1.0
      %vm4508 = vcmp.ge.f32.partialorder %v4476, 1.0
      %v4509 = vsel %vm4477, %v4285, %v4189
      %v4510 = vsel %vm4478, %v4286, %v4190
      %v4511 = vsel %vm4479, %v4287, %v4191
      %v4512 = vsel %vm4480, %v4288, %v4192
      %v4513 = vsel %vm4481, %v4289, %v4193
      %v4514 = vsel %vm4482, %v4290, %v4194
      %v4515 = vsel %vm4483, %v4291, %v4195
      %v4516 = vsel %vm4484, %v4292, %v4196
      %v4517 = vsel %vm4485, %v4293, %v4197
      %v4518 = vsel %vm4486, %v4294, %v4198
      %v4519 = vsel %vm4487, %v4295, %v4199
      %v4520 = vsel %vm4488, %v4296, %v4200
      %v4521 = vsel %vm4489, %v4297, %v4201
      %v4522 = vsel %vm4490, %v4298, %v4202
      %v4523 = vsel %vm4491, %v4299, %v4203
      %v4524 = vsel %vm4492, %v4300, %v4204
      %v4525 = vsel %vm4493, %v4301, %v4205
      %v4526 = vsel %vm4494, %v4302, %v4206
      %v4527 = vsel %vm4495, %v4303, %v4207
      %v4528 = vsel %vm4496, %v4304, %v4208
      %v4529 = vsel %vm4497, %v4305, %v4209
      %v4530 = vsel %vm4498, %v4306, %v4210
      %v4531 = vsel %vm4499, %v4307, %v4211
      %v4532 = vsel %vm4500, %v4308, %v4212
      %v4533 = vsel %vm4501, %v4309, %v4213
      %v4534 = vsel %vm4502, %v4310, %v4214
      %v4535 = vsel %vm4503, %v4311, %v4215
      %v4536 = vsel %vm4504, %v4312, %v4216
      %v4537 = vsel %vm4505, %v4313, %v4217
      %v4538 = vsel %vm4506, %v4314, %v4218
      %v4539 = vsel %vm4507, %v4315, %v4219
      %v4540 = vsel %vm4508, %v4316, %v4220
      %v4541 = vsel %vm4477, %v4221, %v4285
      %v4542 = vsel %vm4478, %v4222, %v4286
      %v4543 = vsel %vm4479, %v4223, %v4287
      %v4544 = vsel %vm4480, %v4224, %v4288
      %v4545 = vsel %vm4481, %v4225, %v4289
      %v4546 = vsel %vm4482, %v4226, %v4290
      %v4547 = vsel %vm4483, %v4227, %v4291
      %v4548 = vsel %vm4484, %v4228, %v4292
      %v4549 = vsel %vm4485, %v4229, %v4293
      %v4550 = vsel %vm4486, %v4230, %v4294
      %v4551 = vsel %vm4487, %v4231, %v4295
      %v4552 = vsel %vm4488, %v4232, %v4296
      %v4553 = vsel %vm4489, %v4233, %v4297
      %v4554 = vsel %vm4490, %v4234, %v4298
      %v4555 = vsel %vm4491, %v4235, %v4299
      %v4556 = vsel %vm4492, %v4236, %v4300
      %v4557 = vsel %vm4493, %v4237, %v4301
      %v4558 = vsel %vm4494, %v4238, %v4302
      %v4559 = vsel %vm4495, %v4239, %v4303
      %v4560 = vsel %vm4496, %v4240, %v4304
      %v4561 = vsel %vm4497, %v4241, %v4305
      %v4562 = vsel %vm4498, %v4242, %v4306
      %v4563 = vsel %vm4499, %v4243, %v4307
      %v4564 = vsel %vm4500, %v4244, %v4308
      %v4565 = vsel %vm4501, %v4245, %v4309
      %v4566 = vsel %vm4502, %v4246, %v4310
      %v4567 = vsel %vm4503, %v4247, %v4311
      %v4568 = vsel %vm4504, %v4248, %v4312
      %v4569 = vsel %vm4505, %v4249, %v4313
      %v4570 = vsel %vm4506, %v4250, %v4314
      %v4571 = vsel %vm4507, %v4251, %v4315
      %v4572 = vsel %vm4508, %v4252, %v4316
      %v4573 = vadd.f32 %v4509, %v4541
      %v4574 = vadd.f32 %v4510, %v4542
      %v4575 = vadd.f32 %v4511, %v4543
      %v4576 = vadd.f32 %v4512, %v4544
      %v4577 = vadd.f32 %v4513, %v4545
      %v4578 = vadd.f32 %v4514, %v4546
      %v4579 = vadd.f32 %v4515, %v4547
      %v4580 = vadd.f32 %v4516, %v4548
      %v4581 = vadd.f32 %v4517, %v4549
      %v4582 = vadd.f32 %v4518, %v4550
      %v4583 = vadd.f32 %v4519, %v4551
      %v4584 = vadd.f32 %v4520, %v4552
      %v4585 = vadd.f32 %v4521, %v4553
      %v4586 = vadd.f32 %v4522, %v4554
      %v4587 = vadd.f32 %v4523, %v4555
      %v4588 = vadd.f32 %v4524, %v4556
      %v4589 = vadd.f32 %v4525, %v4557
      %v4590 = vadd.f32 %v4526, %v4558
      %v4591 = vadd.f32 %v4527, %v4559
      %v4592 = vadd.f32 %v4528, %v4560
      %v4593 = vadd.f32 %v4529, %v4561
      %v4594 = vadd.f32 %v4530, %v4562
      %v4595 = vadd.f32 %v4531, %v4563
      %v4596 = vadd.f32 %v4532, %v4564
      %v4597 = vadd.f32 %v4533, %v4565
      %v4598 = vadd.f32 %v4534, %v4566
      %v4599 = vadd.f32 %v4535, %v4567
      %v4600 = vadd.f32 %v4536, %v4568
      %v4601 = vadd.f32 %v4537, %v4569
      %v4602 = vadd.f32 %v4538, %v4570
      %v4603 = vadd.f32 %v4539, %v4571
      %v4604 = vadd.f32 %v4540, %v4572
      %v4605 = vmul.f32 %v4573, 0.5
      %v4606 = vmul.f32 %v4574, 0.5
      %v4607 = vmul.f32 %v4575, 0.5
      %v4608 = vmul.f32 %v4576, 0.5
      %v4609 = vmul.f32 %v4577, 0.5
      %v4610 = vmul.f32 %v4578, 0.5
      %v4611 = vmul.f32 %v4579, 0.5
      %v4612 = vmul.f32 %v4580, 0.5
      %v4613 = vmul.f32 %v4581, 0.5
      %v4614 = vmul.f32 %v4582, 0.5
      %v4615 = vmul.f32 %v4583, 0.5
      %v4616 = vmul.f32 %v4584, 0.5
      %v4617 = vmul.f32 %v4585, 0.5
      %v4618 = vmul.f32 %v4586, 0.5
      %v4619 = vmul.f32 %v4587, 0.5
      %v4620 = vmul.f32 %v4588, 0.5
      %v4621 = vmul.f32 %v4589, 0.5
      %v4622 = vmul.f32 %v4590, 0.5
      %v4623 = vmul.f32 %v4591, 0.5
      %v4624 = vmul.f32 %v4592, 0.5
      %v4625 = vmul.f32 %v4593, 0.5
      %v4626 = vmul.f32 %v4594, 0.5
      %v4627 = vmul.f32 %v4595, 0.5
      %v4628 = vmul.f32 %v4596, 0.5
      %v4629 = vmul.f32 %v4597, 0.5
      %v4630 = vmul.f32 %v4598, 0.5
      %v4631 = vmul.f32 %v4599, 0.5
      %v4632 = vmul.f32 %v4600, 0.5
      %v4633 = vmul.f32 %v4601, 0.5
      %v4634 = vmul.f32 %v4602, 0.5
      %v4635 = vmul.f32 %v4603, 0.5
      %v4636 = vmul.f32 %v4604, 0.5
      %v4637 = vsub.f32 %v1085, %v4605
      %v4638 = vsub.f32 %v1086, %v4606
      %v4639 = vsub.f32 %v1087, %v4607
      %v4640 = vsub.f32 %v1088, %v4608
      %v4641 = vsub.f32 %v1089, %v4609
      %v4642 = vsub.f32 %v1090, %v4610
      %v4643 = vsub.f32 %v1091, %v4611
      %v4644 = vsub.f32 %v1092, %v4612
      %v4645 = vsub.f32 %v1093, %v4613
      %v4646 = vsub.f32 %v1094, %v4614
      %v4647 = vsub.f32 %v1095, %v4615
      %v4648 = vsub.f32 %v1096, %v4616
      %v4649 = vsub.f32 %v1097, %v4617
      %v4650 = vsub.f32 %v1098, %v4618
      %v4651 = vsub.f32 %v1099, %v4619
      %v4652 = vsub.f32 %v1100, %v4620
      %v4653 = vsub.f32 %v1101, %v4621
      %v4654 = vsub.f32 %v1102, %v4622
      %v4655 = vsub.f32 %v1103, %v4623
      %v4656 = vsub.f32 %v1104, %v4624
      %v4657 = vsub.f32 %v1105, %v4625
      %v4658 = vsub.f32 %v1106, %v4626
      %v4659 = vsub.f32 %v1107, %v4627
      %v4660 = vsub.f32 %v1108, %v4628
      %v4661 = vsub.f32 %v1109, %v4629
      %v4662 = vsub.f32 %v1110, %v4630
      %v4663 = vsub.f32 %v1111, %v4631
      %v4664 = vsub.f32 %v1112, %v4632
      %v4665 = vsub.f32 %v1113, %v4633
      %v4666 = vsub.f32 %v1114, %v4634
      %v4667 = vsub.f32 %v1115, %v4635
      %v4668 = vsub.f32 %v1116, %v4636
      %v4669 = vmax.f32 %v4637, 0.0
      %v4670 = vmax.f32 %v4638, 0.0
      %v4671 = vmax.f32 %v4639, 0.0
      %v4672 = vmax.f32 %v4640, 0.0
      %v4673 = vmax.f32 %v4641, 0.0
      %v4674 = vmax.f32 %v4642, 0.0
      %v4675 = vmax.f32 %v4643, 0.0
      %v4676 = vmax.f32 %v4644, 0.0
      %v4677 = vmax.f32 %v4645, 0.0
      %v4678 = vmax.f32 %v4646, 0.0
      %v4679 = vmax.f32 %v4647, 0.0
      %v4680 = vmax.f32 %v4648, 0.0
      %v4681 = vmax.f32 %v4649, 0.0
      %v4682 = vmax.f32 %v4650, 0.0
      %v4683 = vmax.f32 %v4651, 0.0
      %v4684 = vmax.f32 %v4652, 0.0
      %v4685 = vmax.f32 %v4653, 0.0
      %v4686 = vmax.f32 %v4654, 0.0
      %v4687 = vmax.f32 %v4655, 0.0
      %v4688 = vmax.f32 %v4656, 0.0
      %v4689 = vmax.f32 %v4657, 0.0
      %v4690 = vmax.f32 %v4658, 0.0
      %v4691 = vmax.f32 %v4659, 0.0
      %v4692 = vmax.f32 %v4660, 0.0
      %v4693 = vmax.f32 %v4661, 0.0
      %v4694 = vmax.f32 %v4662, 0.0
      %v4695 = vmax.f32 %v4663, 0.0
      %v4696 = vmax.f32 %v4664, 0.0
      %v4697 = vmax.f32 %v4665, 0.0
      %v4698 = vmax.f32 %v4666, 0.0
      %v4699 = vmax.f32 %v4667, 0.0
      %v4700 = vmax.f32 %v4668, 0.0
      %v4701 = vsel %vm589, %v4669, 0.0
      %4702 = vadd.xlane.f32.xlu0 %v4701
      %v4703 = vpop.xlane.xlu0 %4702
      %v4704 = vsel %vm589, %v4670, 0.0
      %4705 = vadd.xlane.f32.xlu0 %v4704
      %v4706 = vpop.xlane.xlu0 %4705
      %v4707 = vsel %vm589, %v4671, 0.0
      %4708 = vadd.xlane.f32.xlu0 %v4707
      %v4709 = vpop.xlane.xlu0 %4708
      %v4710 = vsel %vm589, %v4672, 0.0
      %4711 = vadd.xlane.f32.xlu0 %v4710
      %v4712 = vpop.xlane.xlu0 %4711
      %v4713 = vsel %vm589, %v4673, 0.0
      %4714 = vadd.xlane.f32.xlu0 %v4713
      %v4715 = vpop.xlane.xlu0 %4714
      %v4716 = vsel %vm589, %v4674, 0.0
      %4717 = vadd.xlane.f32.xlu0 %v4716
      %v4718 = vpop.xlane.xlu0 %4717
      %v4719 = vsel %vm589, %v4675, 0.0
      %4720 = vadd.xlane.f32.xlu0 %v4719
      %v4721 = vpop.xlane.xlu0 %4720
      %v4722 = vsel %vm589, %v4676, 0.0
      %4723 = vadd.xlane.f32.xlu0 %v4722
      %v4724 = vpop.xlane.xlu0 %4723
      %v4725 = vsel %vm589, %v4677, 0.0
      %4726 = vadd.xlane.f32.xlu0 %v4725
      %v4727 = vpop.xlane.xlu0 %4726
      %v4728 = vsel %vm589, %v4678, 0.0
      %4729 = vadd.xlane.f32.xlu0 %v4728
      %v4730 = vpop.xlane.xlu0 %4729
      %v4731 = vsel %vm589, %v4679, 0.0
      %4732 = vadd.xlane.f32.xlu0 %v4731
      %v4733 = vpop.xlane.xlu0 %4732
      %v4734 = vsel %vm589, %v4680, 0.0
      %4735 = vadd.xlane.f32.xlu0 %v4734
      %v4736 = vpop.xlane.xlu0 %4735
      %v4737 = vsel %vm589, %v4681, 0.0
      %4738 = vadd.xlane.f32.xlu0 %v4737
      %v4739 = vpop.xlane.xlu0 %4738
      %v4740 = vsel %vm589, %v4682, 0.0
      %4741 = vadd.xlane.f32.xlu0 %v4740
      %v4742 = vpop.xlane.xlu0 %4741
      %v4743 = vsel %vm589, %v4683, 0.0
      %4744 = vadd.xlane.f32.xlu0 %v4743
      %v4745 = vpop.xlane.xlu0 %4744
      %v4746 = vsel %vm589, %v4684, 0.0
      %4747 = vadd.xlane.f32.xlu0 %v4746
      %v4748 = vpop.xlane.xlu0 %4747
      %v4749 = vsel %vm589, %v4685, 0.0
      %4750 = vadd.xlane.f32.xlu0 %v4749
      %v4751 = vpop.xlane.xlu0 %4750
      %v4752 = vsel %vm589, %v4686, 0.0
      %4753 = vadd.xlane.f32.xlu0 %v4752
      %v4754 = vpop.xlane.xlu0 %4753
      %v4755 = vsel %vm589, %v4687, 0.0
      %4756 = vadd.xlane.f32.xlu0 %v4755
      %v4757 = vpop.xlane.xlu0 %4756
      %v4758 = vsel %vm589, %v4688, 0.0
      %4759 = vadd.xlane.f32.xlu0 %v4758
      %v4760 = vpop.xlane.xlu0 %4759
      %v4761 = vsel %vm589, %v4689, 0.0
      %4762 = vadd.xlane.f32.xlu0 %v4761
      %v4763 = vpop.xlane.xlu0 %4762
      %v4764 = vsel %vm589, %v4690, 0.0
      %4765 = vadd.xlane.f32.xlu0 %v4764
      %v4766 = vpop.xlane.xlu0 %4765
      %v4767 = vsel %vm589, %v4691, 0.0
      %4768 = vadd.xlane.f32.xlu0 %v4767
      %v4769 = vpop.xlane.xlu0 %4768
      %v4770 = vsel %vm589, %v4692, 0.0
      %4771 = vadd.xlane.f32.xlu0 %v4770
      %v4772 = vpop.xlane.xlu0 %4771
      %v4773 = vsel %vm589, %v4693, 0.0
      %4774 = vadd.xlane.f32.xlu0 %v4773
      %v4775 = vpop.xlane.xlu0 %4774
      %v4776 = vsel %vm589, %v4694, 0.0
      %4777 = vadd.xlane.f32.xlu0 %v4776
      %v4778 = vpop.xlane.xlu0 %4777
      %v4779 = vsel %vm589, %v4695, 0.0
      %4780 = vadd.xlane.f32.xlu0 %v4779
      %v4781 = vpop.xlane.xlu0 %4780
      %v4782 = vsel %vm589, %v4696, 0.0
      %4783 = vadd.xlane.f32.xlu0 %v4782
      %v4784 = vpop.xlane.xlu0 %4783
      %v4785 = vsel %vm589, %v4697, 0.0
      %4786 = vadd.xlane.f32.xlu0 %v4785
      %v4787 = vpop.xlane.xlu0 %4786
      %v4788 = vsel %vm589, %v4698, 0.0
      %4789 = vadd.xlane.f32.xlu0 %v4788
      %v4790 = vpop.xlane.xlu0 %4789
      %v4791 = vsel %vm589, %v4699, 0.0
      %4792 = vadd.xlane.f32.xlu0 %v4791
      %v4793 = vpop.xlane.xlu0 %4792
      %v4794 = vsel %vm589, %v4700, 0.0
      %4795 = vadd.xlane.f32.xlu0 %v4794
      %v4796 = vpop.xlane.xlu0 %4795
      %vm4797 = vcmp.ge.f32.partialorder %v4703, 1.0
      %vm4798 = vcmp.ge.f32.partialorder %v4706, 1.0
      %vm4799 = vcmp.ge.f32.partialorder %v4709, 1.0
      %vm4800 = vcmp.ge.f32.partialorder %v4712, 1.0
      %vm4801 = vcmp.ge.f32.partialorder %v4715, 1.0
      %vm4802 = vcmp.ge.f32.partialorder %v4718, 1.0
      %vm4803 = vcmp.ge.f32.partialorder %v4721, 1.0
      %vm4804 = vcmp.ge.f32.partialorder %v4724, 1.0
      %vm4805 = vcmp.ge.f32.partialorder %v4727, 1.0
      %vm4806 = vcmp.ge.f32.partialorder %v4730, 1.0
      %vm4807 = vcmp.ge.f32.partialorder %v4733, 1.0
      %vm4808 = vcmp.ge.f32.partialorder %v4736, 1.0
      %vm4809 = vcmp.ge.f32.partialorder %v4739, 1.0
      %vm4810 = vcmp.ge.f32.partialorder %v4742, 1.0
      %vm4811 = vcmp.ge.f32.partialorder %v4745, 1.0
      %vm4812 = vcmp.ge.f32.partialorder %v4748, 1.0
      %vm4813 = vcmp.ge.f32.partialorder %v4751, 1.0
      %vm4814 = vcmp.ge.f32.partialorder %v4754, 1.0
      %vm4815 = vcmp.ge.f32.partialorder %v4757, 1.0
      %vm4816 = vcmp.ge.f32.partialorder %v4760, 1.0
      %vm4817 = vcmp.ge.f32.partialorder %v4763, 1.0
      %vm4818 = vcmp.ge.f32.partialorder %v4766, 1.0
      %vm4819 = vcmp.ge.f32.partialorder %v4769, 1.0
      %vm4820 = vcmp.ge.f32.partialorder %v4772, 1.0
      %vm4821 = vcmp.ge.f32.partialorder %v4775, 1.0
      %vm4822 = vcmp.ge.f32.partialorder %v4778, 1.0
      %vm4823 = vcmp.ge.f32.partialorder %v4781, 1.0
      %vm4824 = vcmp.ge.f32.partialorder %v4784, 1.0
      %vm4825 = vcmp.ge.f32.partialorder %v4787, 1.0
      %vm4826 = vcmp.ge.f32.partialorder %v4790, 1.0
      %vm4827 = vcmp.ge.f32.partialorder %v4793, 1.0
      %vm4828 = vcmp.ge.f32.partialorder %v4796, 1.0
      %v4829 = vsel %vm4797, %v4605, %v4509
      %v4830 = vsel %vm4798, %v4606, %v4510
      %v4831 = vsel %vm4799, %v4607, %v4511
      %v4832 = vsel %vm4800, %v4608, %v4512
      %v4833 = vsel %vm4801, %v4609, %v4513
      %v4834 = vsel %vm4802, %v4610, %v4514
      %v4835 = vsel %vm4803, %v4611, %v4515
      %v4836 = vsel %vm4804, %v4612, %v4516
      %v4837 = vsel %vm4805, %v4613, %v4517
      %v4838 = vsel %vm4806, %v4614, %v4518
      %v4839 = vsel %vm4807, %v4615, %v4519
      %v4840 = vsel %vm4808, %v4616, %v4520
      %v4841 = vsel %vm4809, %v4617, %v4521
      %v4842 = vsel %vm4810, %v4618, %v4522
      %v4843 = vsel %vm4811, %v4619, %v4523
      %v4844 = vsel %vm4812, %v4620, %v4524
      %v4845 = vsel %vm4813, %v4621, %v4525
      %v4846 = vsel %vm4814, %v4622, %v4526
      %v4847 = vsel %vm4815, %v4623, %v4527
      %v4848 = vsel %vm4816, %v4624, %v4528
      %v4849 = vsel %vm4817, %v4625, %v4529
      %v4850 = vsel %vm4818, %v4626, %v4530
      %v4851 = vsel %vm4819, %v4627, %v4531
      %v4852 = vsel %vm4820, %v4628, %v4532
      %v4853 = vsel %vm4821, %v4629, %v4533
      %v4854 = vsel %vm4822, %v4630, %v4534
      %v4855 = vsel %vm4823, %v4631, %v4535
      %v4856 = vsel %vm4824, %v4632, %v4536
      %v4857 = vsel %vm4825, %v4633, %v4537
      %v4858 = vsel %vm4826, %v4634, %v4538
      %v4859 = vsel %vm4827, %v4635, %v4539
      %v4860 = vsel %vm4828, %v4636, %v4540
      %vm4861 = vcmp.gt.f32.partialorder %v1085, %v4829
      %vm4862 = vcmp.gt.f32.partialorder %v1086, %v4830
      %vm4863 = vcmp.gt.f32.partialorder %v1087, %v4831
      %vm4864 = vcmp.gt.f32.partialorder %v1088, %v4832
      %vm4865 = vcmp.gt.f32.partialorder %v1089, %v4833
      %vm4866 = vcmp.gt.f32.partialorder %v1090, %v4834
      %vm4867 = vcmp.gt.f32.partialorder %v1091, %v4835
      %vm4868 = vcmp.gt.f32.partialorder %v1092, %v4836
      %vm4869 = vcmp.gt.f32.partialorder %v1093, %v4837
      %vm4870 = vcmp.gt.f32.partialorder %v1094, %v4838
      %vm4871 = vcmp.gt.f32.partialorder %v1095, %v4839
      %vm4872 = vcmp.gt.f32.partialorder %v1096, %v4840
      %vm4873 = vcmp.gt.f32.partialorder %v1097, %v4841
      %vm4874 = vcmp.gt.f32.partialorder %v1098, %v4842
      %vm4875 = vcmp.gt.f32.partialorder %v1099, %v4843
      %vm4876 = vcmp.gt.f32.partialorder %v1100, %v4844
      %vm4877 = vcmp.gt.f32.partialorder %v1101, %v4845
      %vm4878 = vcmp.gt.f32.partialorder %v1102, %v4846
      %vm4879 = vcmp.gt.f32.partialorder %v1103, %v4847
      %vm4880 = vcmp.gt.f32.partialorder %v1104, %v4848
      %vm4881 = vcmp.gt.f32.partialorder %v1105, %v4849
      %vm4882 = vcmp.gt.f32.partialorder %v1106, %v4850
      %vm4883 = vcmp.gt.f32.partialorder %v1107, %v4851
      %vm4884 = vcmp.gt.f32.partialorder %v1108, %v4852
      %vm4885 = vcmp.gt.f32.partialorder %v1109, %v4853
      %vm4886 = vcmp.gt.f32.partialorder %v1110, %v4854
      %vm4887 = vcmp.gt.f32.partialorder %v1111, %v4855
      %vm4888 = vcmp.gt.f32.partialorder %v1112, %v4856
      %vm4889 = vcmp.gt.f32.partialorder %v1113, %v4857
      %vm4890 = vcmp.gt.f32.partialorder %v1114, %v4858
      %vm4891 = vcmp.gt.f32.partialorder %v1115, %v4859
      %vm4892 = vcmp.gt.f32.partialorder %v1116, %v4860
      %v4893 = vsel %vm4861, 1, 0
      %v4894 = vsel %vm4862, 1, 0
      %v4895 = vsel %vm4863, 1, 0
      %v4896 = vsel %vm4864, 1, 0
      %v4897 = vsel %vm4865, 1, 0
      %v4898 = vsel %vm4866, 1, 0
      %v4899 = vsel %vm4867, 1, 0
      %v4900 = vsel %vm4868, 1, 0
      %v4901 = vsel %vm4869, 1, 0
      %v4902 = vsel %vm4870, 1, 0
      %v4903 = vsel %vm4871, 1, 0
      %v4904 = vsel %vm4872, 1, 0
      %v4905 = vsel %vm4873, 1, 0
      %v4906 = vsel %vm4874, 1, 0
      %v4907 = vsel %vm4875, 1, 0
      %v4908 = vsel %vm4876, 1, 0
      %v4909 = vsel %vm4877, 1, 0
      %v4910 = vsel %vm4878, 1, 0
      %v4911 = vsel %vm4879, 1, 0
      %v4912 = vsel %vm4880, 1, 0
      %v4913 = vsel %vm4881, 1, 0
      %v4914 = vsel %vm4882, 1, 0
      %v4915 = vsel %vm4883, 1, 0
      %v4916 = vsel %vm4884, 1, 0
      %v4917 = vsel %vm4885, 1, 0
      %v4918 = vsel %vm4886, 1, 0
      %v4919 = vsel %vm4887, 1, 0
      %v4920 = vsel %vm4888, 1, 0
      %v4921 = vsel %vm4889, 1, 0
      %v4922 = vsel %vm4890, 1, 0
      %v4923 = vsel %vm4891, 1, 0
      %v4924 = vsel %vm4892, 1, 0
      %v4925 = vcvt.s32.f32 %v4893
      %v4926 = vcvt.s32.f32 %v4894
      %v4927 = vcvt.s32.f32 %v4895
      %v4928 = vcvt.s32.f32 %v4896
      %v4929 = vcvt.s32.f32 %v4897
      %v4930 = vcvt.s32.f32 %v4898
      %v4931 = vcvt.s32.f32 %v4899
      %v4932 = vcvt.s32.f32 %v4900
      %v4933 = vcvt.s32.f32 %v4901
      %v4934 = vcvt.s32.f32 %v4902
      %v4935 = vcvt.s32.f32 %v4903
      %v4936 = vcvt.s32.f32 %v4904
      %v4937 = vcvt.s32.f32 %v4905
      %v4938 = vcvt.s32.f32 %v4906
      %v4939 = vcvt.s32.f32 %v4907
      %v4940 = vcvt.s32.f32 %v4908
      %v4941 = vcvt.s32.f32 %v4909
      %v4942 = vcvt.s32.f32 %v4910
      %v4943 = vcvt.s32.f32 %v4911
      %v4944 = vcvt.s32.f32 %v4912
      %v4945 = vcvt.s32.f32 %v4913
      %v4946 = vcvt.s32.f32 %v4914
      %v4947 = vcvt.s32.f32 %v4915
      %v4948 = vcvt.s32.f32 %v4916
      %v4949 = vcvt.s32.f32 %v4917
      %v4950 = vcvt.s32.f32 %v4918
      %v4951 = vcvt.s32.f32 %v4919
      %v4952 = vcvt.s32.f32 %v4920
      %v4953 = vcvt.s32.f32 %v4921
      %v4954 = vcvt.s32.f32 %v4922
      %v4955 = vcvt.s32.f32 %v4923
      %v4956 = vcvt.s32.f32 %v4924
      %v4957 = vsel %vm589, %v4925, 0.0
      %4958 = vadd.xlane.f32.xlu0 %v4957
      %v4959 = vpop.xlane.xlu0 %4958
      %v4960 = vsel %vm589, %v4926, 0.0
      %4961 = vadd.xlane.f32.xlu0 %v4960
      %v4962 = vpop.xlane.xlu0 %4961
      %v4963 = vsel %vm589, %v4927, 0.0
      %4964 = vadd.xlane.f32.xlu0 %v4963
      %v4965 = vpop.xlane.xlu0 %4964
      %v4966 = vsel %vm589, %v4928, 0.0
      %4967 = vadd.xlane.f32.xlu0 %v4966
      %v4968 = vpop.xlane.xlu0 %4967
      %v4969 = vsel %vm589, %v4929, 0.0
      %4970 = vadd.xlane.f32.xlu0 %v4969
      %v4971 = vpop.xlane.xlu0 %4970
      %v4972 = vsel %vm589, %v4930, 0.0
      %4973 = vadd.xlane.f32.xlu0 %v4972
      %v4974 = vpop.xlane.xlu0 %4973
      %v4975 = vsel %vm589, %v4931, 0.0
      %4976 = vadd.xlane.f32.xlu0 %v4975
      %v4977 = vpop.xlane.xlu0 %4976
      %v4978 = vsel %vm589, %v4932, 0.0
      %4979 = vadd.xlane.f32.xlu0 %v4978
      %v4980 = vpop.xlane.xlu0 %4979
      %v4981 = vsel %vm589, %v4933, 0.0
      %4982 = vadd.xlane.f32.xlu0 %v4981
      %v4983 = vpop.xlane.xlu0 %4982
      %v4984 = vsel %vm589, %v4934, 0.0
      %4985 = vadd.xlane.f32.xlu0 %v4984
      %v4986 = vpop.xlane.xlu0 %4985
      %v4987 = vsel %vm589, %v4935, 0.0
      %4988 = vadd.xlane.f32.xlu0 %v4987
      %v4989 = vpop.xlane.xlu0 %4988
      %v4990 = vsel %vm589, %v4936, 0.0
      %4991 = vadd.xlane.f32.xlu0 %v4990
      %v4992 = vpop.xlane.xlu0 %4991
      %v4993 = vsel %vm589, %v4937, 0.0
      %4994 = vadd.xlane.f32.xlu0 %v4993
      %v4995 = vpop.xlane.xlu0 %4994
      %v4996 = vsel %vm589, %v4938, 0.0
      %4997 = vadd.xlane.f32.xlu0 %v4996
      %v4998 = vpop.xlane.xlu0 %4997
      %v4999 = vsel %vm589, %v4939, 0.0
      %5000 = vadd.xlane.f32.xlu0 %v4999
      %v5001 = vpop.xlane.xlu0 %5000
      %v5002 = vsel %vm589, %v4940, 0.0
      %5003 = vadd.xlane.f32.xlu0 %v5002
      %v5004 = vpop.xlane.xlu0 %5003
      %v5005 = vsel %vm589, %v4941, 0.0
      %5006 = vadd.xlane.f32.xlu0 %v5005
      %v5007 = vpop.xlane.xlu0 %5006
      %v5008 = vsel %vm589, %v4942, 0.0
      %5009 = vadd.xlane.f32.xlu0 %v5008
      %v5010 = vpop.xlane.xlu0 %5009
      %v5011 = vsel %vm589, %v4943, 0.0
      %5012 = vadd.xlane.f32.xlu0 %v5011
      %v5013 = vpop.xlane.xlu0 %5012
      %v5014 = vsel %vm589, %v4944, 0.0
      %5015 = vadd.xlane.f32.xlu0 %v5014
      %v5016 = vpop.xlane.xlu0 %5015
      %v5017 = vsel %vm589, %v4945, 0.0
      %5018 = vadd.xlane.f32.xlu0 %v5017
      %v5019 = vpop.xlane.xlu0 %5018
      %v5020 = vsel %vm589, %v4946, 0.0
      %5021 = vadd.xlane.f32.xlu0 %v5020
      %v5022 = vpop.xlane.xlu0 %5021
      %v5023 = vsel %vm589, %v4947, 0.0
      %5024 = vadd.xlane.f32.xlu0 %v5023
      %v5025 = vpop.xlane.xlu0 %5024
      %v5026 = vsel %vm589, %v4948, 0.0
      %5027 = vadd.xlane.f32.xlu0 %v5026
      %v5028 = vpop.xlane.xlu0 %5027
      %v5029 = vsel %vm589, %v4949, 0.0
      %5030 = vadd.xlane.f32.xlu0 %v5029
      %v5031 = vpop.xlane.xlu0 %5030
      %v5032 = vsel %vm589, %v4950, 0.0
      %5033 = vadd.xlane.f32.xlu0 %v5032
      %v5034 = vpop.xlane.xlu0 %5033
      %v5035 = vsel %vm589, %v4951, 0.0
      %5036 = vadd.xlane.f32.xlu0 %v5035
      %v5037 = vpop.xlane.xlu0 %5036
      %v5038 = vsel %vm589, %v4952, 0.0
      %5039 = vadd.xlane.f32.xlu0 %v5038
      %v5040 = vpop.xlane.xlu0 %5039
      %v5041 = vsel %vm589, %v4953, 0.0
      %5042 = vadd.xlane.f32.xlu0 %v5041
      %v5043 = vpop.xlane.xlu0 %5042
      %v5044 = vsel %vm589, %v4954, 0.0
      %5045 = vadd.xlane.f32.xlu0 %v5044
      %v5046 = vpop.xlane.xlu0 %5045
      %v5047 = vsel %vm589, %v4955, 0.0
      %5048 = vadd.xlane.f32.xlu0 %v5047
      %v5049 = vpop.xlane.xlu0 %5048
      %v5050 = vsel %vm589, %v4956, 0.0
      %5051 = vadd.xlane.f32.xlu0 %v5050
      %v5052 = vpop.xlane.xlu0 %5051
      %v5053 = vmul.f32 %v1085, %v4925
      %v5054 = vmul.f32 %v1086, %v4926
      %v5055 = vmul.f32 %v1087, %v4927
      %v5056 = vmul.f32 %v1088, %v4928
      %v5057 = vmul.f32 %v1089, %v4929
      %v5058 = vmul.f32 %v1090, %v4930
      %v5059 = vmul.f32 %v1091, %v4931
      %v5060 = vmul.f32 %v1092, %v4932
      %v5061 = vmul.f32 %v1093, %v4933
      %v5062 = vmul.f32 %v1094, %v4934
      %v5063 = vmul.f32 %v1095, %v4935
      %v5064 = vmul.f32 %v1096, %v4936
      %v5065 = vmul.f32 %v1097, %v4937
      %v5066 = vmul.f32 %v1098, %v4938
      %v5067 = vmul.f32 %v1099, %v4939
      %v5068 = vmul.f32 %v1100, %v4940
      %v5069 = vmul.f32 %v1101, %v4941
      %v5070 = vmul.f32 %v1102, %v4942
      %v5071 = vmul.f32 %v1103, %v4943
      %v5072 = vmul.f32 %v1104, %v4944
      %v5073 = vmul.f32 %v1105, %v4945
      %v5074 = vmul.f32 %v1106, %v4946
      %v5075 = vmul.f32 %v1107, %v4947
      %v5076 = vmul.f32 %v1108, %v4948
      %v5077 = vmul.f32 %v1109, %v4949
      %v5078 = vmul.f32 %v1110, %v4950
      %v5079 = vmul.f32 %v1111, %v4951
      %v5080 = vmul.f32 %v1112, %v4952
      %v5081 = vmul.f32 %v1113, %v4953
      %v5082 = vmul.f32 %v1114, %v4954
      %v5083 = vmul.f32 %v1115, %v4955
      %v5084 = vmul.f32 %v1116, %v4956
      %v5085 = vsel %vm589, %v5053, 0.0
      %5086 = vadd.xlane.f32.xlu0 %v5085
      %v5087 = vpop.xlane.xlu0 %5086
      %v5088 = vsel %vm589, %v5054, 0.0
      %5089 = vadd.xlane.f32.xlu0 %v5088
      %v5090 = vpop.xlane.xlu0 %5089
      %v5091 = vsel %vm589, %v5055, 0.0
      %5092 = vadd.xlane.f32.xlu0 %v5091
      %v5093 = vpop.xlane.xlu0 %5092
      %v5094 = vsel %vm589, %v5056, 0.0
      %5095 = vadd.xlane.f32.xlu0 %v5094
      %v5096 = vpop.xlane.xlu0 %5095
      %v5097 = vsel %vm589, %v5057, 0.0
      %5098 = vadd.xlane.f32.xlu0 %v5097
      %v5099 = vpop.xlane.xlu0 %5098
      %v5100 = vsel %vm589, %v5058, 0.0
      %5101 = vadd.xlane.f32.xlu0 %v5100
      %v5102 = vpop.xlane.xlu0 %5101
      %v5103 = vsel %vm589, %v5059, 0.0
      %5104 = vadd.xlane.f32.xlu0 %v5103
      %v5105 = vpop.xlane.xlu0 %5104
      %v5106 = vsel %vm589, %v5060, 0.0
      %5107 = vadd.xlane.f32.xlu0 %v5106
      %v5108 = vpop.xlane.xlu0 %5107
      %v5109 = vsel %vm589, %v5061, 0.0
      %5110 = vadd.xlane.f32.xlu0 %v5109
      %v5111 = vpop.xlane.xlu0 %5110
      %v5112 = vsel %vm589, %v5062, 0.0
      %5113 = vadd.xlane.f32.xlu0 %v5112
      %v5114 = vpop.xlane.xlu0 %5113
      %v5115 = vsel %vm589, %v5063, 0.0
      %5116 = vadd.xlane.f32.xlu0 %v5115
      %v5117 = vpop.xlane.xlu0 %5116
      %v5118 = vsel %vm589, %v5064, 0.0
      %5119 = vadd.xlane.f32.xlu0 %v5118
      %v5120 = vpop.xlane.xlu0 %5119
      %v5121 = vsel %vm589, %v5065, 0.0
      %5122 = vadd.xlane.f32.xlu0 %v5121
      %v5123 = vpop.xlane.xlu0 %5122
      %v5124 = vsel %vm589, %v5066, 0.0
      %5125 = vadd.xlane.f32.xlu0 %v5124
      %v5126 = vpop.xlane.xlu0 %5125
      %v5127 = vsel %vm589, %v5067, 0.0
      %5128 = vadd.xlane.f32.xlu0 %v5127
      %v5129 = vpop.xlane.xlu0 %5128
      %v5130 = vsel %vm589, %v5068, 0.0
      %5131 = vadd.xlane.f32.xlu0 %v5130
      %v5132 = vpop.xlane.xlu0 %5131
      %v5133 = vsel %vm589, %v5069, 0.0
      %5134 = vadd.xlane.f32.xlu0 %v5133
      %v5135 = vpop.xlane.xlu0 %5134
      %v5136 = vsel %vm589, %v5070, 0.0
      %5137 = vadd.xlane.f32.xlu0 %v5136
      %v5138 = vpop.xlane.xlu0 %5137
      %v5139 = vsel %vm589, %v5071, 0.0
      %5140 = vadd.xlane.f32.xlu0 %v5139
      %v5141 = vpop.xlane.xlu0 %5140
      %v5142 = vsel %vm589, %v5072, 0.0
      %5143 = vadd.xlane.f32.xlu0 %v5142
      %v5144 = vpop.xlane.xlu0 %5143
      %v5145 = vsel %vm589, %v5073, 0.0
      %5146 = vadd.xlane.f32.xlu0 %v5145
      %v5147 = vpop.xlane.xlu0 %5146
      %v5148 = vsel %vm589, %v5074, 0.0
      %5149 = vadd.xlane.f32.xlu0 %v5148
      %v5150 = vpop.xlane.xlu0 %5149
      %v5151 = vsel %vm589, %v5075, 0.0
      %5152 = vadd.xlane.f32.xlu0 %v5151
      %v5153 = vpop.xlane.xlu0 %5152
      %v5154 = vsel %vm589, %v5076, 0.0
      %5155 = vadd.xlane.f32.xlu0 %v5154
      %v5156 = vpop.xlane.xlu0 %5155
      %v5157 = vsel %vm589, %v5077, 0.0
      %5158 = vadd.xlane.f32.xlu0 %v5157
      %v5159 = vpop.xlane.xlu0 %5158
      %v5160 = vsel %vm589, %v5078, 0.0
      %5161 = vadd.xlane.f32.xlu0 %v5160
      %v5162 = vpop.xlane.xlu0 %5161
      %v5163 = vsel %vm589, %v5079, 0.0
      %5164 = vadd.xlane.f32.xlu0 %v5163
      %v5165 = vpop.xlane.xlu0 %5164
      %v5166 = vsel %vm589, %v5080, 0.0
      %5167 = vadd.xlane.f32.xlu0 %v5166
      %v5168 = vpop.xlane.xlu0 %5167
      %v5169 = vsel %vm589, %v5081, 0.0
      %5170 = vadd.xlane.f32.xlu0 %v5169
      %v5171 = vpop.xlane.xlu0 %5170
      %v5172 = vsel %vm589, %v5082, 0.0
      %5173 = vadd.xlane.f32.xlu0 %v5172
      %v5174 = vpop.xlane.xlu0 %5173
      %v5175 = vsel %vm589, %v5083, 0.0
      %5176 = vadd.xlane.f32.xlu0 %v5175
      %v5177 = vpop.xlane.xlu0 %5176
      %v5178 = vsel %vm589, %v5084, 0.0
      %5179 = vadd.xlane.f32.xlu0 %v5178
      %v5180 = vpop.xlane.xlu0 %5179
      %v5181 = vsub.f32 %v5087, 1.0
      %v5182 = vsub.f32 %v5090, 1.0
      %v5183 = vsub.f32 %v5093, 1.0
      %v5184 = vsub.f32 %v5096, 1.0
      %v5185 = vsub.f32 %v5099, 1.0
      %v5186 = vsub.f32 %v5102, 1.0
      %v5187 = vsub.f32 %v5105, 1.0
      %v5188 = vsub.f32 %v5108, 1.0
      %v5189 = vsub.f32 %v5111, 1.0
      %v5190 = vsub.f32 %v5114, 1.0
      %v5191 = vsub.f32 %v5117, 1.0
      %v5192 = vsub.f32 %v5120, 1.0
      %v5193 = vsub.f32 %v5123, 1.0
      %v5194 = vsub.f32 %v5126, 1.0
      %v5195 = vsub.f32 %v5129, 1.0
      %v5196 = vsub.f32 %v5132, 1.0
      %v5197 = vsub.f32 %v5135, 1.0
      %v5198 = vsub.f32 %v5138, 1.0
      %v5199 = vsub.f32 %v5141, 1.0
      %v5200 = vsub.f32 %v5144, 1.0
      %v5201 = vsub.f32 %v5147, 1.0
      %v5202 = vsub.f32 %v5150, 1.0
      %v5203 = vsub.f32 %v5153, 1.0
      %v5204 = vsub.f32 %v5156, 1.0
      %v5205 = vsub.f32 %v5159, 1.0
      %v5206 = vsub.f32 %v5162, 1.0
      %v5207 = vsub.f32 %v5165, 1.0
      %v5208 = vsub.f32 %v5168, 1.0
      %v5209 = vsub.f32 %v5171, 1.0
      %v5210 = vsub.f32 %v5174, 1.0
      %v5211 = vsub.f32 %v5177, 1.0
      %v5212 = vsub.f32 %v5180, 1.0
      %v5213 = vrcp.pop %v4959
      %v5214 = vmul.f32 %v5181, %v5213
      %v5215 = vrcp.pop %v4962
      %v5216 = vmul.f32 %v5182, %v5215
      %v5217 = vrcp.pop %v4965
      %v5218 = vmul.f32 %v5183, %v5217
      %v5219 = vrcp.pop %v4968
      %v5220 = vmul.f32 %v5184, %v5219
      %v5221 = vrcp.pop %v4971
      %v5222 = vmul.f32 %v5185, %v5221
      %v5223 = vrcp.pop %v4974
      %v5224 = vmul.f32 %v5186, %v5223
      %v5225 = vrcp.pop %v4977
      %v5226 = vmul.f32 %v5187, %v5225
      %v5227 = vrcp.pop %v4980
      %v5228 = vmul.f32 %v5188, %v5227
      %v5229 = vrcp.pop %v4983
      %v5230 = vmul.f32 %v5189, %v5229
      %v5231 = vrcp.pop %v4986
      %v5232 = vmul.f32 %v5190, %v5231
      %v5233 = vrcp.pop %v4989
      %v5234 = vmul.f32 %v5191, %v5233
      %v5235 = vrcp.pop %v4992
      %v5236 = vmul.f32 %v5192, %v5235
      %v5237 = vrcp.pop %v4995
      %v5238 = vmul.f32 %v5193, %v5237
      %v5239 = vrcp.pop %v4998
      %v5240 = vmul.f32 %v5194, %v5239
      %v5241 = vrcp.pop %v5001
      %v5242 = vmul.f32 %v5195, %v5241
      %v5243 = vrcp.pop %v5004
      %v5244 = vmul.f32 %v5196, %v5243
      %v5245 = vrcp.pop %v5007
      %v5246 = vmul.f32 %v5197, %v5245
      %v5247 = vrcp.pop %v5010
      %v5248 = vmul.f32 %v5198, %v5247
      %v5249 = vrcp.pop %v5013
      %v5250 = vmul.f32 %v5199, %v5249
      %v5251 = vrcp.pop %v5016
      %v5252 = vmul.f32 %v5200, %v5251
      %v5253 = vrcp.pop %v5019
      %v5254 = vmul.f32 %v5201, %v5253
      %v5255 = vrcp.pop %v5022
      %v5256 = vmul.f32 %v5202, %v5255
      %v5257 = vrcp.pop %v5025
      %v5258 = vmul.f32 %v5203, %v5257
      %v5259 = vrcp.pop %v5028
      %v5260 = vmul.f32 %v5204, %v5259
      %v5261 = vrcp.pop %v5031
      %v5262 = vmul.f32 %v5205, %v5261
      %v5263 = vrcp.pop %v5034
      %v5264 = vmul.f32 %v5206, %v5263
      %v5265 = vrcp.pop %v5037
      %v5266 = vmul.f32 %v5207, %v5265
      %v5267 = vrcp.pop %v5040
      %v5268 = vmul.f32 %v5208, %v5267
      %v5269 = vrcp.pop %v5043
      %v5270 = vmul.f32 %v5209, %v5269
      %v5271 = vrcp.pop %v5046
      %v5272 = vmul.f32 %v5210, %v5271
      %v5273 = vrcp.pop %v5049
      %v5274 = vmul.f32 %v5211, %v5273
      %v5275 = vrcp.pop %v5052
      %v5276 = vmul.f32 %v5212, %v5275
      %vm5277 = vcmp.gt.f32.partialorder %v1085, %v5214
      %vm5278 = vcmp.gt.f32.partialorder %v1086, %v5216
      %vm5279 = vcmp.gt.f32.partialorder %v1087, %v5218
      %vm5280 = vcmp.gt.f32.partialorder %v1088, %v5220
      %vm5281 = vcmp.gt.f32.partialorder %v1089, %v5222
      %vm5282 = vcmp.gt.f32.partialorder %v1090, %v5224
      %vm5283 = vcmp.gt.f32.partialorder %v1091, %v5226
      %vm5284 = vcmp.gt.f32.partialorder %v1092, %v5228
      %vm5285 = vcmp.gt.f32.partialorder %v1093, %v5230
      %vm5286 = vcmp.gt.f32.partialorder %v1094, %v5232
      %vm5287 = vcmp.gt.f32.partialorder %v1095, %v5234
      %vm5288 = vcmp.gt.f32.partialorder %v1096, %v5236
      %vm5289 = vcmp.gt.f32.partialorder %v1097, %v5238
      %vm5290 = vcmp.gt.f32.partialorder %v1098, %v5240
      %vm5291 = vcmp.gt.f32.partialorder %v1099, %v5242
      %vm5292 = vcmp.gt.f32.partialorder %v1100, %v5244
      %vm5293 = vcmp.gt.f32.partialorder %v1101, %v5246
      %vm5294 = vcmp.gt.f32.partialorder %v1102, %v5248
      %vm5295 = vcmp.gt.f32.partialorder %v1103, %v5250
      %vm5296 = vcmp.gt.f32.partialorder %v1104, %v5252
      %vm5297 = vcmp.gt.f32.partialorder %v1105, %v5254
      %vm5298 = vcmp.gt.f32.partialorder %v1106, %v5256
      %vm5299 = vcmp.gt.f32.partialorder %v1107, %v5258
      %vm5300 = vcmp.gt.f32.partialorder %v1108, %v5260
      %vm5301 = vcmp.gt.f32.partialorder %v1109, %v5262
      %vm5302 = vcmp.gt.f32.partialorder %v1110, %v5264
      %vm5303 = vcmp.gt.f32.partialorder %v1111, %v5266
      %vm5304 = vcmp.gt.f32.partialorder %v1112, %v5268
      %vm5305 = vcmp.gt.f32.partialorder %v1113, %v5270
      %vm5306 = vcmp.gt.f32.partialorder %v1114, %v5272
      %vm5307 = vcmp.gt.f32.partialorder %v1115, %v5274
      %vm5308 = vcmp.gt.f32.partialorder %v1116, %v5276
      %v5309 = vsel %vm5277, 1, 0
      %v5310 = vsel %vm5278, 1, 0
      %v5311 = vsel %vm5279, 1, 0
      %v5312 = vsel %vm5280, 1, 0
      %v5313 = vsel %vm5281, 1, 0
      %v5314 = vsel %vm5282, 1, 0
      %v5315 = vsel %vm5283, 1, 0
      %v5316 = vsel %vm5284, 1, 0
      %v5317 = vsel %vm5285, 1, 0
      %v5318 = vsel %vm5286, 1, 0
      %v5319 = vsel %vm5287, 1, 0
      %v5320 = vsel %vm5288, 1, 0
      %v5321 = vsel %vm5289, 1, 0
      %v5322 = vsel %vm5290, 1, 0
      %v5323 = vsel %vm5291, 1, 0
      %v5324 = vsel %vm5292, 1, 0
      %v5325 = vsel %vm5293, 1, 0
      %v5326 = vsel %vm5294, 1, 0
      %v5327 = vsel %vm5295, 1, 0
      %v5328 = vsel %vm5296, 1, 0
      %v5329 = vsel %vm5297, 1, 0
      %v5330 = vsel %vm5298, 1, 0
      %v5331 = vsel %vm5299, 1, 0
      %v5332 = vsel %vm5300, 1, 0
      %v5333 = vsel %vm5301, 1, 0
      %v5334 = vsel %vm5302, 1, 0
      %v5335 = vsel %vm5303, 1, 0
      %v5336 = vsel %vm5304, 1, 0
      %v5337 = vsel %vm5305, 1, 0
      %v5338 = vsel %vm5306, 1, 0
      %v5339 = vsel %vm5307, 1, 0
      %v5340 = vsel %vm5308, 1, 0
      %v5341 = vcvt.s32.f32 %v5309
      %v5342 = vcvt.s32.f32 %v5310
      %v5343 = vcvt.s32.f32 %v5311
      %v5344 = vcvt.s32.f32 %v5312
      %v5345 = vcvt.s32.f32 %v5313
      %v5346 = vcvt.s32.f32 %v5314
      %v5347 = vcvt.s32.f32 %v5315
      %v5348 = vcvt.s32.f32 %v5316
      %v5349 = vcvt.s32.f32 %v5317
      %v5350 = vcvt.s32.f32 %v5318
      %v5351 = vcvt.s32.f32 %v5319
      %v5352 = vcvt.s32.f32 %v5320
      %v5353 = vcvt.s32.f32 %v5321
      %v5354 = vcvt.s32.f32 %v5322
      %v5355 = vcvt.s32.f32 %v5323
      %v5356 = vcvt.s32.f32 %v5324
      %v5357 = vcvt.s32.f32 %v5325
      %v5358 = vcvt.s32.f32 %v5326
      %v5359 = vcvt.s32.f32 %v5327
      %v5360 = vcvt.s32.f32 %v5328
      %v5361 = vcvt.s32.f32 %v5329
      %v5362 = vcvt.s32.f32 %v5330
      %v5363 = vcvt.s32.f32 %v5331
      %v5364 = vcvt.s32.f32 %v5332
      %v5365 = vcvt.s32.f32 %v5333
      %v5366 = vcvt.s32.f32 %v5334
      %v5367 = vcvt.s32.f32 %v5335
      %v5368 = vcvt.s32.f32 %v5336
      %v5369 = vcvt.s32.f32 %v5337
      %v5370 = vcvt.s32.f32 %v5338
      %v5371 = vcvt.s32.f32 %v5339
      %v5372 = vcvt.s32.f32 %v5340
      %v5373 = vsel %vm589, %v5341, 0.0
      %5374 = vadd.xlane.f32.xlu0 %v5373
      %v5375 = vpop.xlane.xlu0 %5374
      %v5376 = vsel %vm589, %v5342, 0.0
      %5377 = vadd.xlane.f32.xlu0 %v5376
      %v5378 = vpop.xlane.xlu0 %5377
      %v5379 = vsel %vm589, %v5343, 0.0
      %5380 = vadd.xlane.f32.xlu0 %v5379
      %v5381 = vpop.xlane.xlu0 %5380
      %v5382 = vsel %vm589, %v5344, 0.0
      %5383 = vadd.xlane.f32.xlu0 %v5382
      %v5384 = vpop.xlane.xlu0 %5383
      %v5385 = vsel %vm589, %v5345, 0.0
      %5386 = vadd.xlane.f32.xlu0 %v5385
      %v5387 = vpop.xlane.xlu0 %5386
      %v5388 = vsel %vm589, %v5346, 0.0
      %5389 = vadd.xlane.f32.xlu0 %v5388
      %v5390 = vpop.xlane.xlu0 %5389
      %v5391 = vsel %vm589, %v5347, 0.0
      %5392 = vadd.xlane.f32.xlu0 %v5391
      %v5393 = vpop.xlane.xlu0 %5392
      %v5394 = vsel %vm589, %v5348, 0.0
      %5395 = vadd.xlane.f32.xlu0 %v5394
      %v5396 = vpop.xlane.xlu0 %5395
      %v5397 = vsel %vm589, %v5349, 0.0
      %5398 = vadd.xlane.f32.xlu0 %v5397
      %v5399 = vpop.xlane.xlu0 %5398
      %v5400 = vsel %vm589, %v5350, 0.0
      %5401 = vadd.xlane.f32.xlu0 %v5400
      %v5402 = vpop.xlane.xlu0 %5401
      %v5403 = vsel %vm589, %v5351, 0.0
      %5404 = vadd.xlane.f32.xlu0 %v5403
      %v5405 = vpop.xlane.xlu0 %5404
      %v5406 = vsel %vm589, %v5352, 0.0
      %5407 = vadd.xlane.f32.xlu0 %v5406
      %v5408 = vpop.xlane.xlu0 %5407
      %v5409 = vsel %vm589, %v5353, 0.0
      %5410 = vadd.xlane.f32.xlu0 %v5409
      %v5411 = vpop.xlane.xlu0 %5410
      %v5412 = vsel %vm589, %v5354, 0.0
      %5413 = vadd.xlane.f32.xlu0 %v5412
      %v5414 = vpop.xlane.xlu0 %5413
      %v5415 = vsel %vm589, %v5355, 0.0
      %5416 = vadd.xlane.f32.xlu0 %v5415
      %v5417 = vpop.xlane.xlu0 %5416
      %v5418 = vsel %vm589, %v5356, 0.0
      %5419 = vadd.xlane.f32.xlu0 %v5418
      %v5420 = vpop.xlane.xlu0 %5419
      %v5421 = vsel %vm589, %v5357, 0.0
      %5422 = vadd.xlane.f32.xlu0 %v5421
      %v5423 = vpop.xlane.xlu0 %5422
      %v5424 = vsel %vm589, %v5358, 0.0
      %5425 = vadd.xlane.f32.xlu0 %v5424
      %v5426 = vpop.xlane.xlu0 %5425
      %v5427 = vsel %vm589, %v5359, 0.0
      %5428 = vadd.xlane.f32.xlu0 %v5427
      %v5429 = vpop.xlane.xlu0 %5428
      %v5430 = vsel %vm589, %v5360, 0.0
      %5431 = vadd.xlane.f32.xlu0 %v5430
      %v5432 = vpop.xlane.xlu0 %5431
      %v5433 = vsel %vm589, %v5361, 0.0
      %5434 = vadd.xlane.f32.xlu0 %v5433
      %v5435 = vpop.xlane.xlu0 %5434
      %v5436 = vsel %vm589, %v5362, 0.0
      %5437 = vadd.xlane.f32.xlu0 %v5436
      %v5438 = vpop.xlane.xlu0 %5437
      %v5439 = vsel %vm589, %v5363, 0.0
      %5440 = vadd.xlane.f32.xlu0 %v5439
      %v5441 = vpop.xlane.xlu0 %5440
      %v5442 = vsel %vm589, %v5364, 0.0
      %5443 = vadd.xlane.f32.xlu0 %v5442
      %v5444 = vpop.xlane.xlu0 %5443
      %v5445 = vsel %vm589, %v5365, 0.0
      %5446 = vadd.xlane.f32.xlu0 %v5445
      %v5447 = vpop.xlane.xlu0 %5446
      %v5448 = vsel %vm589, %v5366, 0.0
      %5449 = vadd.xlane.f32.xlu0 %v5448
      %v5450 = vpop.xlane.xlu0 %5449
      %v5451 = vsel %vm589, %v5367, 0.0
      %5452 = vadd.xlane.f32.xlu0 %v5451
      %v5453 = vpop.xlane.xlu0 %5452
      %v5454 = vsel %vm589, %v5368, 0.0
      %5455 = vadd.xlane.f32.xlu0 %v5454
      %v5456 = vpop.xlane.xlu0 %5455
      %v5457 = vsel %vm589, %v5369, 0.0
      %5458 = vadd.xlane.f32.xlu0 %v5457
      %v5459 = vpop.xlane.xlu0 %5458
      %v5460 = vsel %vm589, %v5370, 0.0
      %5461 = vadd.xlane.f32.xlu0 %v5460
      %v5462 = vpop.xlane.xlu0 %5461
      %v5463 = vsel %vm589, %v5371, 0.0
      %5464 = vadd.xlane.f32.xlu0 %v5463
      %v5465 = vpop.xlane.xlu0 %5464
      %v5466 = vsel %vm589, %v5372, 0.0
      %5467 = vadd.xlane.f32.xlu0 %v5466
      %v5468 = vpop.xlane.xlu0 %5467
      %v5469 = vmul.f32 %v1085, %v5341
      %v5470 = vmul.f32 %v1086, %v5342
      %v5471 = vmul.f32 %v1087, %v5343
      %v5472 = vmul.f32 %v1088, %v5344
      %v5473 = vmul.f32 %v1089, %v5345
      %v5474 = vmul.f32 %v1090, %v5346
      %v5475 = vmul.f32 %v1091, %v5347
      %v5476 = vmul.f32 %v1092, %v5348
      %v5477 = vmul.f32 %v1093, %v5349
      %v5478 = vmul.f32 %v1094, %v5350
      %v5479 = vmul.f32 %v1095, %v5351
      %v5480 = vmul.f32 %v1096, %v5352
      %v5481 = vmul.f32 %v1097, %v5353
      %v5482 = vmul.f32 %v1098, %v5354
      %v5483 = vmul.f32 %v1099, %v5355
      %v5484 = vmul.f32 %v1100, %v5356
      %v5485 = vmul.f32 %v1101, %v5357
      %v5486 = vmul.f32 %v1102, %v5358
      %v5487 = vmul.f32 %v1103, %v5359
      %v5488 = vmul.f32 %v1104, %v5360
      %v5489 = vmul.f32 %v1105, %v5361
      %v5490 = vmul.f32 %v1106, %v5362
      %v5491 = vmul.f32 %v1107, %v5363
      %v5492 = vmul.f32 %v1108, %v5364
      %v5493 = vmul.f32 %v1109, %v5365
      %v5494 = vmul.f32 %v1110, %v5366
      %v5495 = vmul.f32 %v1111, %v5367
      %v5496 = vmul.f32 %v1112, %v5368
      %v5497 = vmul.f32 %v1113, %v5369
      %v5498 = vmul.f32 %v1114, %v5370
      %v5499 = vmul.f32 %v1115, %v5371
      %v5500 = vmul.f32 %v1116, %v5372
      %v5501 = vsel %vm589, %v5469, 0.0
      %5502 = vadd.xlane.f32.xlu0 %v5501
      %v5503 = vpop.xlane.xlu0 %5502
      %v5504 = vsel %vm589, %v5470, 0.0
      %5505 = vadd.xlane.f32.xlu0 %v5504
      %v5506 = vpop.xlane.xlu0 %5505
      %v5507 = vsel %vm589, %v5471, 0.0
      %5508 = vadd.xlane.f32.xlu0 %v5507
      %v5509 = vpop.xlane.xlu0 %5508
      %v5510 = vsel %vm589, %v5472, 0.0
      %5511 = vadd.xlane.f32.xlu0 %v5510
      %v5512 = vpop.xlane.xlu0 %5511
      %v5513 = vsel %vm589, %v5473, 0.0
      %5514 = vadd.xlane.f32.xlu0 %v5513
      %v5515 = vpop.xlane.xlu0 %5514
      %v5516 = vsel %vm589, %v5474, 0.0
      %5517 = vadd.xlane.f32.xlu0 %v5516
      %v5518 = vpop.xlane.xlu0 %5517
      %v5519 = vsel %vm589, %v5475, 0.0
      %5520 = vadd.xlane.f32.xlu0 %v5519
      %v5521 = vpop.xlane.xlu0 %5520
      %v5522 = vsel %vm589, %v5476, 0.0
      %5523 = vadd.xlane.f32.xlu0 %v5522
      %v5524 = vpop.xlane.xlu0 %5523
      %v5525 = vsel %vm589, %v5477, 0.0
      %5526 = vadd.xlane.f32.xlu0 %v5525
      %v5527 = vpop.xlane.xlu0 %5526
      %v5528 = vsel %vm589, %v5478, 0.0
      %5529 = vadd.xlane.f32.xlu0 %v5528
      %v5530 = vpop.xlane.xlu0 %5529
      %v5531 = vsel %vm589, %v5479, 0.0
      %5532 = vadd.xlane.f32.xlu0 %v5531
      %v5533 = vpop.xlane.xlu0 %5532
      %v5534 = vsel %vm589, %v5480, 0.0
      %5535 = vadd.xlane.f32.xlu0 %v5534
      %v5536 = vpop.xlane.xlu0 %5535
      %v5537 = vsel %vm589, %v5481, 0.0
      %5538 = vadd.xlane.f32.xlu0 %v5537
      %v5539 = vpop.xlane.xlu0 %5538
      %v5540 = vsel %vm589, %v5482, 0.0
      %5541 = vadd.xlane.f32.xlu0 %v5540
      %v5542 = vpop.xlane.xlu0 %5541
      %v5543 = vsel %vm589, %v5483, 0.0
      %5544 = vadd.xlane.f32.xlu0 %v5543
      %v5545 = vpop.xlane.xlu0 %5544
      %v5546 = vsel %vm589, %v5484, 0.0
      %5547 = vadd.xlane.f32.xlu0 %v5546
      %v5548 = vpop.xlane.xlu0 %5547
      %v5549 = vsel %vm589, %v5485, 0.0
      %5550 = vadd.xlane.f32.xlu0 %v5549
      %v5551 = vpop.xlane.xlu0 %5550
      %v5552 = vsel %vm589, %v5486, 0.0
      %5553 = vadd.xlane.f32.xlu0 %v5552
      %v5554 = vpop.xlane.xlu0 %5553
      %v5555 = vsel %vm589, %v5487, 0.0
      %5556 = vadd.xlane.f32.xlu0 %v5555
      %v5557 = vpop.xlane.xlu0 %5556
      %v5558 = vsel %vm589, %v5488, 0.0
      %5559 = vadd.xlane.f32.xlu0 %v5558
      %v5560 = vpop.xlane.xlu0 %5559
      %v5561 = vsel %vm589, %v5489, 0.0
      %5562 = vadd.xlane.f32.xlu0 %v5561
      %v5563 = vpop.xlane.xlu0 %5562
      %v5564 = vsel %vm589, %v5490, 0.0
      %5565 = vadd.xlane.f32.xlu0 %v5564
      %v5566 = vpop.xlane.xlu0 %5565
      %v5567 = vsel %vm589, %v5491, 0.0
      %5568 = vadd.xlane.f32.xlu0 %v5567
      %v5569 = vpop.xlane.xlu0 %5568
      %v5570 = vsel %vm589, %v5492, 0.0
      %5571 = vadd.xlane.f32.xlu0 %v5570
      %v5572 = vpop.xlane.xlu0 %5571
      %v5573 = vsel %vm589, %v5493, 0.0
      %5574 = vadd.xlane.f32.xlu0 %v5573
      %v5575 = vpop.xlane.xlu0 %5574
      %v5576 = vsel %vm589, %v5494, 0.0
      %5577 = vadd.xlane.f32.xlu0 %v5576
      %v5578 = vpop.xlane.xlu0 %5577
      %v5579 = vsel %vm589, %v5495, 0.0
      %5580 = vadd.xlane.f32.xlu0 %v5579
      %v5581 = vpop.xlane.xlu0 %5580
      %v5582 = vsel %vm589, %v5496, 0.0
      %5583 = vadd.xlane.f32.xlu0 %v5582
      %v5584 = vpop.xlane.xlu0 %5583
      %v5585 = vsel %vm589, %v5497, 0.0
      %5586 = vadd.xlane.f32.xlu0 %v5585
      %v5587 = vpop.xlane.xlu0 %5586
      %v5588 = vsel %vm589, %v5498, 0.0
      %5589 = vadd.xlane.f32.xlu0 %v5588
      %v5590 = vpop.xlane.xlu0 %5589
      %v5591 = vsel %vm589, %v5499, 0.0
      %5592 = vadd.xlane.f32.xlu0 %v5591
      %v5593 = vpop.xlane.xlu0 %5592
      %v5594 = vsel %vm589, %v5500, 0.0
      %5595 = vadd.xlane.f32.xlu0 %v5594
      %v5596 = vpop.xlane.xlu0 %5595
      %v5597 = vsub.f32 %v5503, 1.0
      %v5598 = vsub.f32 %v5506, 1.0
      %v5599 = vsub.f32 %v5509, 1.0
      %v5600 = vsub.f32 %v5512, 1.0
      %v5601 = vsub.f32 %v5515, 1.0
      %v5602 = vsub.f32 %v5518, 1.0
      %v5603 = vsub.f32 %v5521, 1.0
      %v5604 = vsub.f32 %v5524, 1.0
      %v5605 = vsub.f32 %v5527, 1.0
      %v5606 = vsub.f32 %v5530, 1.0
      %v5607 = vsub.f32 %v5533, 1.0
      %v5608 = vsub.f32 %v5536, 1.0
      %v5609 = vsub.f32 %v5539, 1.0
      %v5610 = vsub.f32 %v5542, 1.0
      %v5611 = vsub.f32 %v5545, 1.0
      %v5612 = vsub.f32 %v5548, 1.0
      %v5613 = vsub.f32 %v5551, 1.0
      %v5614 = vsub.f32 %v5554, 1.0
      %v5615 = vsub.f32 %v5557, 1.0
      %v5616 = vsub.f32 %v5560, 1.0
      %v5617 = vsub.f32 %v5563, 1.0
      %v5618 = vsub.f32 %v5566, 1.0
      %v5619 = vsub.f32 %v5569, 1.0
      %v5620 = vsub.f32 %v5572, 1.0
      %v5621 = vsub.f32 %v5575, 1.0
      %v5622 = vsub.f32 %v5578, 1.0
      %v5623 = vsub.f32 %v5581, 1.0
      %v5624 = vsub.f32 %v5584, 1.0
      %v5625 = vsub.f32 %v5587, 1.0
      %v5626 = vsub.f32 %v5590, 1.0
      %v5627 = vsub.f32 %v5593, 1.0
      %v5628 = vsub.f32 %v5596, 1.0
      %v5629 = vrcp.pop %v5375
      %v5630 = vmul.f32 %v5597, %v5629
      %v5631 = vrcp.pop %v5378
      %v5632 = vmul.f32 %v5598, %v5631
      %v5633 = vrcp.pop %v5381
      %v5634 = vmul.f32 %v5599, %v5633
      %v5635 = vrcp.pop %v5384
      %v5636 = vmul.f32 %v5600, %v5635
      %v5637 = vrcp.pop %v5387
      %v5638 = vmul.f32 %v5601, %v5637
      %v5639 = vrcp.pop %v5390
      %v5640 = vmul.f32 %v5602, %v5639
      %v5641 = vrcp.pop %v5393
      %v5642 = vmul.f32 %v5603, %v5641
      %v5643 = vrcp.pop %v5396
      %v5644 = vmul.f32 %v5604, %v5643
      %v5645 = vrcp.pop %v5399
      %v5646 = vmul.f32 %v5605, %v5645
      %v5647 = vrcp.pop %v5402
      %v5648 = vmul.f32 %v5606, %v5647
      %v5649 = vrcp.pop %v5405
      %v5650 = vmul.f32 %v5607, %v5649
      %v5651 = vrcp.pop %v5408
      %v5652 = vmul.f32 %v5608, %v5651
      %v5653 = vrcp.pop %v5411
      %v5654 = vmul.f32 %v5609, %v5653
      %v5655 = vrcp.pop %v5414
      %v5656 = vmul.f32 %v5610, %v5655
      %v5657 = vrcp.pop %v5417
      %v5658 = vmul.f32 %v5611, %v5657
      %v5659 = vrcp.pop %v5420
      %v5660 = vmul.f32 %v5612, %v5659
      %v5661 = vrcp.pop %v5423
      %v5662 = vmul.f32 %v5613, %v5661
      %v5663 = vrcp.pop %v5426
      %v5664 = vmul.f32 %v5614, %v5663
      %v5665 = vrcp.pop %v5429
      %v5666 = vmul.f32 %v5615, %v5665
      %v5667 = vrcp.pop %v5432
      %v5668 = vmul.f32 %v5616, %v5667
      %v5669 = vrcp.pop %v5435
      %v5670 = vmul.f32 %v5617, %v5669
      %v5671 = vrcp.pop %v5438
      %v5672 = vmul.f32 %v5618, %v5671
      %v5673 = vrcp.pop %v5441
      %v5674 = vmul.f32 %v5619, %v5673
      %v5675 = vrcp.pop %v5444
      %v5676 = vmul.f32 %v5620, %v5675
      %v5677 = vrcp.pop %v5447
      %v5678 = vmul.f32 %v5621, %v5677
      %v5679 = vrcp.pop %v5450
      %v5680 = vmul.f32 %v5622, %v5679
      %v5681 = vrcp.pop %v5453
      %v5682 = vmul.f32 %v5623, %v5681
      %v5683 = vrcp.pop %v5456
      %v5684 = vmul.f32 %v5624, %v5683
      %v5685 = vrcp.pop %v5459
      %v5686 = vmul.f32 %v5625, %v5685
      %v5687 = vrcp.pop %v5462
      %v5688 = vmul.f32 %v5626, %v5687
      %v5689 = vrcp.pop %v5465
      %v5690 = vmul.f32 %v5627, %v5689
      %v5691 = vrcp.pop %v5468
      %v5692 = vmul.f32 %v5628, %v5691
      %v5693 = vsub.f32 %v1085, %v5630
      %v5694 = vsub.f32 %v1086, %v5632
      %v5695 = vsub.f32 %v1087, %v5634
      %v5696 = vsub.f32 %v1088, %v5636
      %v5697 = vsub.f32 %v1089, %v5638
      %v5698 = vsub.f32 %v1090, %v5640
      %v5699 = vsub.f32 %v1091, %v5642
      %v5700 = vsub.f32 %v1092, %v5644
      %v5701 = vsub.f32 %v1093, %v5646
      %v5702 = vsub.f32 %v1094, %v5648
      %v5703 = vsub.f32 %v1095, %v5650
      %v5704 = vsub.f32 %v1096, %v5652
      %v5705 = vsub.f32 %v1097, %v5654
      %v5706 = vsub.f32 %v1098, %v5656
      %v5707 = vsub.f32 %v1099, %v5658
      %v5708 = vsub.f32 %v1100, %v5660
      %v5709 = vsub.f32 %v1101, %v5662
      %v5710 = vsub.f32 %v1102, %v5664
      %v5711 = vsub.f32 %v1103, %v5666
      %v5712 = vsub.f32 %v1104, %v5668
      %v5713 = vsub.f32 %v1105, %v5670
      %v5714 = vsub.f32 %v1106, %v5672
      %v5715 = vsub.f32 %v1107, %v5674
      %v5716 = vsub.f32 %v1108, %v5676
      %v5717 = vsub.f32 %v1109, %v5678
      %v5718 = vsub.f32 %v1110, %v5680
      %v5719 = vsub.f32 %v1111, %v5682
      %v5720 = vsub.f32 %v1112, %v5684
      %v5721 = vsub.f32 %v1113, %v5686
      %v5722 = vsub.f32 %v1114, %v5688
      %v5723 = vsub.f32 %v1115, %v5690
      %v5724 = vsub.f32 %v1116, %v5692
      %v5725 = vmax.f32 %v5693, 0.0
      %v5726 = vmax.f32 %v5694, 0.0
      %v5727 = vmax.f32 %v5695, 0.0
      %v5728 = vmax.f32 %v5696, 0.0
      %v5729 = vmax.f32 %v5697, 0.0
      %v5730 = vmax.f32 %v5698, 0.0
      %v5731 = vmax.f32 %v5699, 0.0
      %v5732 = vmax.f32 %v5700, 0.0
      %v5733 = vmax.f32 %v5701, 0.0
      %v5734 = vmax.f32 %v5702, 0.0
      %v5735 = vmax.f32 %v5703, 0.0
      %v5736 = vmax.f32 %v5704, 0.0
      %v5737 = vmax.f32 %v5705, 0.0
      %v5738 = vmax.f32 %v5706, 0.0
      %v5739 = vmax.f32 %v5707, 0.0
      %v5740 = vmax.f32 %v5708, 0.0
      %v5741 = vmax.f32 %v5709, 0.0
      %v5742 = vmax.f32 %v5710, 0.0
      %v5743 = vmax.f32 %v5711, 0.0
      %v5744 = vmax.f32 %v5712, 0.0
      %v5745 = vmax.f32 %v5713, 0.0
      %v5746 = vmax.f32 %v5714, 0.0
      %v5747 = vmax.f32 %v5715, 0.0
      %v5748 = vmax.f32 %v5716, 0.0
      %v5749 = vmax.f32 %v5717, 0.0
      %v5750 = vmax.f32 %v5718, 0.0
      %v5751 = vmax.f32 %v5719, 0.0
      %v5752 = vmax.f32 %v5720, 0.0
      %v5753 = vmax.f32 %v5721, 0.0
      %v5754 = vmax.f32 %v5722, 0.0
      %v5755 = vmax.f32 %v5723, 0.0
      %v5756 = vmax.f32 %v5724, 0.0
      %5757 = vst.msk [vmem:[%s248] sm:$0xff] %vm589, %v5725
      %5758 = vst.msk [vmem:[%s248 + $0x8] sm:$0xff] %vm589, %v5726
      %5759 = vst.msk [vmem:[%s248 + $0x10] sm:$0xff] %vm589, %v5727
      %5760 = vst.msk [vmem:[%s248 + $0x18] sm:$0xff] %vm589, %v5728
      %5761 = vst.msk [vmem:[%s248 + $0x20] sm:$0xff] %vm589, %v5729
      %5762 = vst.msk [vmem:[%s248 + $0x28] sm:$0xff] %vm589, %v5730
      %5763 = vst.msk [vmem:[%s248 + $0x30] sm:$0xff] %vm589, %v5731
      %5764 = vst.msk [vmem:[%s248 + $0x38] sm:$0xff] %vm589, %v5732
      %5765 = vst.msk [vmem:[%s248 + $0x40] sm:$0xff] %vm589, %v5733
      %5766 = vst.msk [vmem:[%s248 + $0x48] sm:$0xff] %vm589, %v5734
      %5767 = vst.msk [vmem:[%s248 + $0x50] sm:$0xff] %vm589, %v5735
      %5768 = vst.msk [vmem:[%s248 + $0x58] sm:$0xff] %vm589, %v5736
      %5769 = vst.msk [vmem:[%s248 + $0x60] sm:$0xff] %vm589, %v5737
      %5770 = vst.msk [vmem:[%s248 + $0x68] sm:$0xff] %vm589, %v5738
      %5771 = vst.msk [vmem:[%s248 + $0x70] sm:$0xff] %vm589, %v5739
      %5772 = vst.msk [vmem:[%s248 + $0x78] sm:$0xff] %vm589, %v5740
      %5773 = vst.msk [vmem:[%s248 + $0x80] sm:$0xff] %vm589, %v5741
      %5774 = vst.msk [vmem:[%s248 + $0x88] sm:$0xff] %vm589, %v5742
      %5775 = vst.msk [vmem:[%s248 + $0x90] sm:$0xff] %vm589, %v5743
      %5776 = vst.msk [vmem:[%s248 + $0x98] sm:$0xff] %vm589, %v5744
      %5777 = vst.msk [vmem:[%s248 + $0xa0] sm:$0xff] %vm589, %v5745
      %5778 = vst.msk [vmem:[%s248 + $0xa8] sm:$0xff] %vm589, %v5746
      %5779 = vst.msk [vmem:[%s248 + $0xb0] sm:$0xff] %vm589, %v5747
      %5780 = vst.msk [vmem:[%s248 + $0xb8] sm:$0xff] %vm589, %v5748
      %5781 = vst.msk [vmem:[%s248 + $0xc0] sm:$0xff] %vm589, %v5749
      %5782 = vst.msk [vmem:[%s248 + $0xc8] sm:$0xff] %vm589, %v5750
      %5783 = vst.msk [vmem:[%s248 + $0xd0] sm:$0xff] %vm589, %v5751
      %5784 = vst.msk [vmem:[%s248 + $0xd8] sm:$0xff] %vm589, %v5752
      %5785 = vst.msk [vmem:[%s248 + $0xe0] sm:$0xff] %vm589, %v5753
      %5786 = vst.msk [vmem:[%s248 + $0xe8] sm:$0xff] %vm589, %v5754
      %5787 = vst.msk [vmem:[%s248 + $0xf0] sm:$0xff] %vm589, %v5755
      %5788 = vst.msk [vmem:[%s248 + $0xf8] sm:$0xff] %vm589, %v5756
      %s5789 = smul.u32 32, %s16
      %p5790 = scmp.lt.s32.totalorder %s5789, 63
      %s5791 = scalar_select %p5790, %s5789, 63
      %s5792 = smul.addr %s5791, 8
      %s5793 = scalar_lea.vmem %s5, %s5792
      // Predicated region
      $region41: #{tpu_custom_call.1} parent=39 // pred_check
        %p5794 = pneg %p149
      $region42: #{tpu_custom_call.1} parent=39 // pred_check_branch
        %5796 = sbr.rel (%p5794) target = $region44
      $region43: #{tpu_custom_call.1} parent=39 // pred_region
        %s5797 = smul.u32 32, %s16
      $region44: #{tpu_custom_call.1} parent=39 // pred_fallthru
        _
    $region40: #{tpu_custom_call.1} parent=5 // pred_fallthru
      _
    %p5798 = scmp.le.s32.totalorder 2, %s11
    // Predicated region
    $region45: #{tpu_custom_call.1} parent=5 // pred_check
      %p5799 = pneg %p5798
    $region46: #{tpu_custom_call.1} parent=5 // pred_check_branch
      %5801 = sbr.rel (%p5799) target = $region48
    $region47: #{tpu_custom_call.1} parent=5 // pred_region
      %s5802 = ssub.s32 %s11, 2
      // Predicated region
      $region49: #{tpu_custom_call.1} parent=47 // pred_check
        %p5803 = pneg %p155
      $region50: #{tpu_custom_call.1} parent=47 // pred_check_branch
        %5805 = sbr.rel (%p5803) target = $region52
      $region51: #{tpu_custom_call.1} parent=47 // pred_region
        %s5806 = smul.u32 32, %s17
        %p5807 = scmp.lt.s32.totalorder %s5806, 63
        %s5808 = scalar_select %p5807, %s5806, 63
        %s5809 = smul.addr %s5808, 8
        %s5810 = scalar_lea.vmem %s5, %s5809
      $region52: #{tpu_custom_call.1} parent=47 // pred_fallthru
        _
    $region48: #{tpu_custom_call.1} parent=5 // pred_fallthru
      _
  $region6: #{tpu_custom_call.1} parent=0 // loop_footer
    %s15 = sadd.s32 1, %s11
  $region7: #{tpu_custom_call.1} parent=0 // loop_footer_branch
    %10 = sbr.rel target = $region3
  $region8: #{tpu_custom_call.1} parent=0 // loop_exit
    _

</llo_original>
